<compile_context>
chip_gen: v6e
topology: v6e:2x2x1
jax: 0.10.0
libtpu: 0.0.40
codegen_flags: <defaults>
</compile_context>

<pallas_src>
import jax
import jax.numpy as jnp
from jax.experimental import pallas as pl
from jax.experimental.pallas import tpu as pltpu

EPS = 1e-5
VMEM_LIMIT = 32 * 1024 * 1024   # safe on v5e/v6e (128 MiB) and v7x (64 MiB/TC)
TILE_CAP = 2048                 # (256, TN) f32 intermediates stay ~2 MiB


def _pick_tile(n, cap=TILE_CAP):
    """Largest multiple-of-128 divisor of n up to `cap` (lane-aligned tiles)."""
    best = 0
    d = 128
    while d <= min(n, cap):
        if n % d == 0:
            best = d
        d += 128
    if best:
        return best
    # No lane-aligned divisor <= cap: take the whole axis (a full-dim block is
    # always a legal BlockSpec).
    return n


def _bn_affine(sum_bcl, sq_bcl, total, gamma, beta):
    """Fold training-mode BatchNorm1d into a per-channel (scale, shift) FMA.

    sum_bcl / sq_bcl: (B, C, LW) lane-wise partial sums of the bias-free conv
    output (the conv bias cancels inside training-mode BN).  Biased variance,
    torch default eps.
    """
    s = jnp.sum(sum_bcl, axis=(0, 2))
    q = jnp.sum(sq_bcl, axis=(0, 2))
    mean = s / total
    var = q / total - mean * mean            # biased variance (torch)
    scale = gamma / jnp.sqrt(var + EPS)
    shift = beta - mean * scale
    return scale[:, None], shift[:, None]    # (C, 1) each, f32


def pointnet_encoder(x_bcn, params):
    """x_bcn: (B, C, N) float32 (torch NCW layout).  Returns (B, 272, N)."""
    B, Cin, N = x_bcn.shape
    (w1, b1, g1, be1, w2, b2, g2, be2, w3, b3, g3, be3) = params
    del b1, b2, b3                # conv biases cancel inside training-mode BN
    W1 = w1[:, :, 0]                                   # (16, Cin) f32
    W2 = w2[:, :, 0]                                   # (32, 16)  f32
    W3 = w3[:, :, 0].astype(jnp.bfloat16)              # (256, 32) bf16 MXU operand

    TN = _pick_tile(N)
    NT = N // TN
    grid = (B, NT)
    last = NT - 1
    total = jnp.float32(B * N)
    LW = 128 if TN % 128 == 0 else TN                  # accumulator lane width
    nblk = TN // LW

    cparams = pltpu.CompilerParams(
        dimension_semantics=("parallel", "arbitrary"),
        vmem_limit_bytes=VMEM_LIMIT)

    # ------------------------------------------------------------ helpers ---
    def lane_partials(vals, extrema=False):
        """(C, TN) -> lane-dense (C, LW) partial sum / sumsq (and max / min)."""
        blks = [vals[:, j * LW:(j + 1) * LW] for j in range(nblk)]
        psum, psq = blks[0], blks[0] * blks[0]
        pmax = pmin = blks[0]
        for blk in blks[1:]:
            psum = psum + blk
            psq = psq + blk * blk
            if extrema:
                pmax = jnp.maximum(pmax, blk)
                pmin = jnp.minimum(pmin, blk)
        return (psum, psq, pmax, pmin) if extrema else (psum, psq)

    def conv1_fma(x, w1v):
        """lin1 = W1 @ x as Cin broadcast VPU FMAs (K=Cin too small for MXU)."""
        acc = w1v[:, 0:1] * x[0:1, :]
        for c in range(1, Cin):
            acc = acc + w1v[:, c:c + 1] * x[c:c + 1, :]
        return acc                                     # (16, TN)

    x_spec = pl.BlockSpec((None, Cin, TN), lambda b, nt: (b, 0, nt))
    # pointfeat lives in channel rows 256:271 of the final (B, 272, N) buffer
    pf_spec = pl.BlockSpec((None, 16, TN), lambda b, nt: (b, 16, nt))

    def param_spec(arr):                               # small resident tensor
        return pl.BlockSpec(arr.shape, lambda b, nt: (0, 0))

    def acc_spec(c):                                   # per-batch (c, LW) stats
        return pl.BlockSpec((None, c, LW), lambda b, nt: (b, 0, 0))

    def acc_shape(c):
        return jax.ShapeDtypeStruct((B, c, LW), jnp.float32)

    # ---- pass 1: stats of lin1 = W1 @ x -------------------------------------
    def stats1_kernel(x_ref, w1_ref, sum_o, sq_o, sacc, qacc):
        nt = pl.program_id(1)
        lin1 = conv1_fma(x_ref[...], w1_ref[...])          # (16, TN)
        psum, psq = lane_partials(lin1)

        @pl.when(nt == 0)
        def _():
            sacc[...] = jnp.zeros_like(sacc)
            qacc[...] = jnp.zeros_like(qacc)

        sacc[...] += psum
        qacc[...] += psq

        @pl.when(nt == last)
        def _():
            sum_o[...] = sacc[...]
            sq_o[...] = qacc[...]

    sum1, sq1 = pl.pallas_call(
        stats1_kernel,
        grid_spec=pltpu.PrefetchScalarGridSpec(
            num_scalar_prefetch=0, grid=grid,
            in_specs=[x_spec, param_spec(W1)],
            out_specs=[acc_spec(16), acc_spec(16)],
            scratch_shapes=[pltpu.VMEM((16, LW), jnp.float32)] * 2),
        out_shape=(acc_shape(16), acc_shape(16)),
        compiler_params=cparams,
    )(x_bcn, W1)
    s1, t1 = _bn_affine(sum1, sq1, total, g1, be1)          # (16, 1)

    # ---- pass 2: pointfeat -> rows 256:271 of final buffer; stats of lin2 ---
    def stats2_kernel(x_ref, w1_ref, s1_ref, t1_ref, w2_ref,
                      pf_ref, sum_o, sq_o, sacc, qacc):
        nt = pl.program_id(1)
        lin1 = conv1_fma(x_ref[...], w1_ref[...])
        h1 = jnp.tanh(lin1 * s1_ref[...] + t1_ref[...])     # (16, TN)
        pf_ref[...] = h1
        lin2 = jnp.dot(w2_ref[...], h1,
                       preferred_element_type=jnp.float32)  # (32, TN)
        psum, psq = lane_partials(lin2)

        @pl.when(nt == 0)
        def _():
            sacc[...] = jnp.zeros_like(sacc)
            qacc[...] = jnp.zeros_like(qacc)

        sacc[...] += psum
        qacc[...] += psq

        @pl.when(nt == last)
        def _():
            sum_o[...] = sacc[...]
            sq_o[...] = qacc[...]

    buf272, sum2, sq2 = pl.pallas_call(
        stats2_kernel,
        grid_spec=pltpu.PrefetchScalarGridSpec(
            num_scalar_prefetch=0, grid=grid,
            in_specs=[x_spec, param_spec(W1), param_spec(s1), param_spec(t1),
                      param_spec(W2)],
            out_specs=[pf_spec, acc_spec(32), acc_spec(32)],
            scratch_shapes=[pltpu.VMEM((32, LW), jnp.float32)] * 2),
        out_shape=(jax.ShapeDtypeStruct((B, 272, N), jnp.float32),
                   acc_shape(32), acc_shape(32)),
        compiler_params=cparams,
    )(x_bcn, W1, s1, t1, W2)
    s2, t2 = _bn_affine(sum2, sq2, total, g2, be2)          # (32, 1)

    # ---- pass 3: read pointfeat back; stats + extrema of lin3 ---------------
    def stats3_kernel(pf_ref, w2_ref, s2_ref, t2_ref, w3_ref,
                      sum_o, sq_o, max_o, min_o, sacc, qacc, macc, nacc):
        nt = pl.program_id(1)
        h1 = pf_ref[...]                                    # (16, TN)
        lin2 = jnp.dot(w2_ref[...], h1,
                       preferred_element_type=jnp.float32)  # (32, TN)
        h2 = jnp.tanh(lin2 * s2_ref[...] + t2_ref[...])
        # Dominant (256,32)@(32,TN) matmul: bf16 operands, f32 accumulation.
        lin3 = jnp.dot(w3_ref[...], h2.astype(jnp.bfloat16),
                       preferred_element_type=jnp.float32)  # (256, TN)
        psum, psq, pmax, pmin = lane_partials(lin3, extrema=True)

        @pl.when(nt == 0)
        def _():
            sacc[...] = jnp.zeros_like(sacc)
            qacc[...] = jnp.zeros_like(qacc)
            macc[...] = jnp.full_like(macc, -jnp.inf)
            nacc[...] = jnp.full_like(nacc, jnp.inf)

        sacc[...] += psum
        qacc[...] += psq
        macc[...] = jnp.maximum(macc[...], pmax)
        nacc[...] = jnp.minimum(nacc[...], pmin)

        @pl.when(nt == last)
        def _():
            sum_o[...] = sacc[...]
            sq_o[...] = qacc[...]
            max_o[...] = macc[...]
            min_o[...] = nacc[...]

    sum3, sq3, max3, min3 = pl.pallas_call(
        stats3_kernel,
        grid_spec=pltpu.PrefetchScalarGridSpec(
            num_scalar_prefetch=0, grid=grid,
            in_specs=[pf_spec, param_spec(W2), param_spec(s2), param_spec(t2),
                      param_spec(W3)],
            out_specs=[acc_spec(256)] * 4,
            scratch_shapes=[pltpu.VMEM((256, LW), jnp.float32)] * 4),
        out_shape=(acc_shape(256),) * 4,
        compiler_params=cparams,
    )(buf272, W2, s2, t2, W3)
    s3, t3 = _bn_affine(sum3, sq3, total, g3, be3)          # (256, 1)

    # Global per-(batch, channel) max of bn3(lin3), recovered from the extrema
    # of lin3 (per-channel affine map is monotone; direction = sign of scale).
    bmax = jnp.max(max3, axis=2, keepdims=True)             # (B, 256, 1)
    bmin = jnp.min(min3, axis=2, keepdims=True)
    gmax = jnp.where(s3[None] >= 0, bmax, bmin) * s3[None] + t3[None]

    # ---- pass 4: broadcast gmax into rows 0:255 of the aliased buffer -------
    def assemble_kernel(gmax_ref, buf_hbm_ref, out_ref):
        del buf_hbm_ref    # aliased to out; pointfeat rows were written in pass 2
        out_ref[...] = jnp.broadcast_to(gmax_ref[...], out_ref.shape)

    out = pl.pallas_call(
        assemble_kernel,
        grid_spec=pltpu.PrefetchScalarGridSpec(
            num_scalar_prefetch=0, grid=grid,
            in_specs=[pl.BlockSpec((None, 256, 1), lambda b, nt: (b, 0, 0)),
                      pl.BlockSpec(memory_space=pl.ANY)],
            out_specs=pl.BlockSpec((None, 256, TN), lambda b, nt: (b, 0, nt))),
        out_shape=jax.ShapeDtypeStruct((B, 272, N), jnp.float32),
        input_output_aliases={1: 0},
        compiler_params=pltpu.CompilerParams(
            dimension_semantics=("parallel", "parallel"),
            vmem_limit_bytes=VMEM_LIMIT),
    )(gmax, buf272)
    return out


# ------------------------------------------------------------- reference ----

def pointnet_encoder_ref(x_bcn, params):
    """Pure-JAX f32 reference mirroring the PyTorch forward (training-mode BN)."""
    (w1, b1, g1, be1, w2, b2, g2, be2, w3, b3, g3, be3) = params

    def conv1x1(x, w, b):                                   # x: (B, C, N)
        return jnp.einsum("oc,bcn->bon", w[:, :, 0], x) + b[None, :, None]

    def bn(h, gamma, beta):
        mean = jnp.mean(h, axis=(0, 2), keepdims=True)
        var = jnp.mean((h - mean) ** 2, axis=(0, 2), keepdims=True)
        return (gamma[None, :, None] * (h - mean) / jnp.sqrt(var + EPS)
                + beta[None, :, None])

    x = jnp.tanh(bn(conv1x1(x_bcn, w1, b1), g1, be1))
    pointfeat = x
    x = jnp.tanh(bn(conv1x1(x, w2, b2), g2, be2))
    x = bn(conv1x1(x, w3, b3), g3, be3)
    x = jnp.max(x, axis=2, keepdims=True)                   # (B, 256, 1)
    N = x_bcn.shape[2]
    x = jnp.repeat(x, N, axis=2)                            # (B, 256, N)
    return jnp.concatenate([x, pointfeat], axis=1)          # (B, 272, N)


def init_params(key, channel=3):
    ks = jax.random.split(key, 12)

    def w(k, cout, cin):
        return jax.random.normal(k, (cout, cin, 1), jnp.float32) * 0.1

    def v(k, c, mu=0.0, sd=0.1):
        return mu + jax.random.normal(k, (c,), jnp.float32) * sd

    w1, w2, w3 = w(ks[0], 16, channel), w(ks[1], 32, 16), w(ks[2], 256, 32)
    b1, b2, b3 = v(ks[3], 16), v(ks[4], 32), v(ks[5], 256)
    g1, g2 = v(ks[6], 16, mu=1.0), v(ks[7], 32, mu=1.0)
    g3 = v(ks[8], 256, mu=1.0)
    # Flip a few layer-3 gammas negative to exercise the min-branch of the
    # folded global max (sign of the BN affine scale).
    g3 = g3 * jnp.where(jnp.arange(256) % 7 == 0, -1.0, 1.0)
    be1, be2, be3 = v(ks[9], 16), v(ks[10], 32), v(ks[11], 256)
    return (w1, b1, g1, be1, w2, b2, g2, be2, w3, b3, g3, be3)


if __name__ == "__main__":
    B, C, N = 2, 3, 384            # N = 3 * 128 -> one 384-lane tile per batch
    key = jax.random.PRNGKey(0)
    kx, kp = jax.random.split(key)
    x = jax.random.normal(kx, (B, C, N), jnp.float32)
    params = init_params(kp, channel=C)

    fwd = jax.jit(pointnet_encoder)
    out = jax.block_until_ready(fwd(x, params))
    ref = pointnet_encoder_ref(x, params)

    assert out.shape == (B, 272, N), out.shape
    # pointfeat rows take the exact f32 path -> tight tolerance
    pf_err = float(jnp.max(jnp.abs(out[:, 256:, :] - ref[:, 256:, :])))
    assert pf_err < 5e-4, pf_err
    # global-feature rows go through a bf16-operand MXU matmul -> looser bound
    err = float(jnp.max(jnp.abs(out - ref)))
    assert jnp.allclose(out, ref, atol=2e-2, rtol=2e-2), err
    print("KERNEL_OK")
</pallas_src>

<mosaic_0001>
module attributes {stable_mosaic.version = 11 : i64} {
  func.func @stats1_kernel(%arg0: i32, %arg1: i32, %arg2: memref<1x3x384xf32, #tpu.memory_space<vmem>>, %arg3: memref<16x3xf32, #tpu.memory_space<vmem>>, %arg4: memref<1x16x128xf32, #tpu.memory_space<vmem>>, %arg5: memref<1x16x128xf32, #tpu.memory_space<vmem>>, %arg6: memref<16x128xf32, #tpu.memory_space<vmem>>, %arg7: memref<16x128xf32, #tpu.memory_space<vmem>>) attributes {dimension_semantics = [#tpu.dimension_semantics<parallel>, #tpu.dimension_semantics<arbitrary>], iteration_bounds = array<i64: 2, 1>, scalar_prefetch = 0 : i64, scratch_operands = 2 : i64, tpu.core_type = #tpu.core_type<tc>, window_params = [{transform_indices = @transform_0, window_bounds = array<i64: 1, 3, 384>}, {pipeline_mode = #tpu.pipeline_mode<synchronous>, transform_indices = @transform_1, window_bounds = array<i64: 16, 3>}, {transform_indices = @transform_2, window_bounds = array<i64: 1, 16, 128>}, {transform_indices = @transform_3, window_bounds = array<i64: 1, 16, 128>}]} {
    %c0 = arith.constant 0 : index
    %c0_0 = arith.constant 0 : index
    %c0_1 = arith.constant 0 : index
    %0 = vector.load %arg2[%c0, %c0_0, %c0_1] : memref<1x3x384xf32, #tpu.memory_space<vmem>>, vector<1x3x384xf32>
    %1 = vector.shape_cast %0 : vector<1x3x384xf32> to vector<3x384xf32>
    %c0_2 = arith.constant 0 : index
    %c0_3 = arith.constant 0 : index
    %2 = vector.load %arg3[%c0_2, %c0_3] : memref<16x3xf32, #tpu.memory_space<vmem>>, vector<16x3xf32>
    %3 = vector.extract_strided_slice %2 {offsets = [0, 0], sizes = [16, 1], strides = [1, 1]} : vector<16x3xf32> to vector<16x1xf32>
    %4 = vector.extract_strided_slice %1 {offsets = [0, 0], sizes = [1, 384], strides = [1, 1]} : vector<3x384xf32> to vector<1x384xf32>
    %5 = vector.broadcast %3 : vector<16x1xf32> to vector<16x384xf32>
    %6 = vector.broadcast %4 : vector<1x384xf32> to vector<16x384xf32>
    %7 = arith.mulf %5, %6 : vector<16x384xf32>
    %8 = vector.extract_strided_slice %2 {offsets = [0, 1], sizes = [16, 1], strides = [1, 1]} : vector<16x3xf32> to vector<16x1xf32>
    %9 = vector.extract_strided_slice %1 {offsets = [1, 0], sizes = [1, 384], strides = [1, 1]} : vector<3x384xf32> to vector<1x384xf32>
    %10 = vector.broadcast %8 : vector<16x1xf32> to vector<16x384xf32>
    %11 = vector.broadcast %9 : vector<1x384xf32> to vector<16x384xf32>
    %12 = arith.mulf %10, %11 : vector<16x384xf32>
    %13 = arith.addf %7, %12 : vector<16x384xf32>
    %14 = vector.extract_strided_slice %2 {offsets = [0, 2], sizes = [16, 1], strides = [1, 1]} : vector<16x3xf32> to vector<16x1xf32>
    %15 = vector.extract_strided_slice %1 {offsets = [2, 0], sizes = [1, 384], strides = [1, 1]} : vector<3x384xf32> to vector<1x384xf32>
    %16 = vector.broadcast %14 : vector<16x1xf32> to vector<16x384xf32>
    %17 = vector.broadcast %15 : vector<1x384xf32> to vector<16x384xf32>
    %18 = arith.mulf %16, %17 : vector<16x384xf32>
    %19 = arith.addf %13, %18 : vector<16x384xf32>
    %20 = vector.extract_strided_slice %19 {offsets = [0, 0], sizes = [16, 128], strides = [1, 1]} : vector<16x384xf32> to vector<16x128xf32>
    %21 = vector.extract_strided_slice %19 {offsets = [0, 128], sizes = [16, 128], strides = [1, 1]} : vector<16x384xf32> to vector<16x128xf32>
    %22 = vector.extract_strided_slice %19 {offsets = [0, 256], sizes = [16, 128], strides = [1, 1]} : vector<16x384xf32> to vector<16x128xf32>
    %23 = arith.mulf %20, %20 : vector<16x128xf32>
    %24 = arith.addf %20, %21 : vector<16x128xf32>
    %25 = arith.mulf %21, %21 : vector<16x128xf32>
    %26 = arith.addf %23, %25 : vector<16x128xf32>
    %27 = arith.addf %24, %22 : vector<16x128xf32>
    %28 = arith.mulf %22, %22 : vector<16x128xf32>
    %29 = arith.addf %26, %28 : vector<16x128xf32>
    %c0_i32 = arith.constant 0 : i32
    %30 = arith.cmpi eq, %arg1, %c0_i32 : i32
    %31 = arith.extui %30 : i1 to i32
    %c0_i32_4 = arith.constant 0 : i32
    %32 = arith.cmpi ne, %31, %c0_i32_4 : i32
    scf.if %32 {
      %cst = arith.constant 0.000000e+00 : f32
      %42 = vector.broadcast %cst : f32 to vector<16x128xf32>
      %c0_15 = arith.constant 0 : index
      %c0_16 = arith.constant 0 : index
      %43 = vector.load %arg6[%c0_15, %c0_16] : memref<16x128xf32, #tpu.memory_space<vmem>>, vector<16x128xf32>
      tpu.vector_store %arg6[%c0_15, %c0_16], %42 {strides = array<i32>} : memref<16x128xf32, #tpu.memory_space<vmem>>, vector<16x128xf32>,
      %cst_17 = arith.constant 0.000000e+00 : f32
      %44 = vector.broadcast %cst_17 : f32 to vector<16x128xf32>
      %c0_18 = arith.constant 0 : index
      %c0_19 = arith.constant 0 : index
      %45 = vector.load %arg7[%c0_18, %c0_19] : memref<16x128xf32, #tpu.memory_space<vmem>>, vector<16x128xf32>
      tpu.vector_store %arg7[%c0_18, %c0_19], %44 {strides = array<i32>} : memref<16x128xf32, #tpu.memory_space<vmem>>, vector<16x128xf32>,
    } else {
    }
    %c0_5 = arith.constant 0 : index
    %c0_6 = arith.constant 0 : index
    %33 = vector.load %arg6[%c0_5, %c0_6] : memref<16x128xf32, #tpu.memory_space<vmem>>, vector<16x128xf32>
    %34 = arith.addf %33, %27 : vector<16x128xf32>
    %c0_7 = arith.constant 0 : index
    %c0_8 = arith.constant 0 : index
    %35 = vector.load %arg6[%c0_7, %c0_8] : memref<16x128xf32, #tpu.memory_space<vmem>>, vector<16x128xf32>
    tpu.vector_store %arg6[%c0_7, %c0_8], %34 {strides = array<i32>} : memref<16x128xf32, #tpu.memory_space<vmem>>, vector<16x128xf32>,
    %c0_9 = arith.constant 0 : index
    %c0_10 = arith.constant 0 : index
    %36 = vector.load %arg7[%c0_9, %c0_10] : memref<16x128xf32, #tpu.memory_space<vmem>>, vector<16x128xf32>
    %37 = arith.addf %36, %29 : vector<16x128xf32>
    %c0_11 = arith.constant 0 : index
    %c0_12 = arith.constant 0 : index
    %38 = vector.load %arg7[%c0_11, %c0_12] : memref<16x128xf32, #tpu.memory_space<vmem>>, vector<16x128xf32>
    tpu.vector_store %arg7[%c0_11, %c0_12], %37 {strides = array<i32>} : memref<16x128xf32, #tpu.memory_space<vmem>>, vector<16x128xf32>,
    %c0_i32_13 = arith.constant 0 : i32
    %39 = arith.cmpi eq, %arg1, %c0_i32_13 : i32
    %40 = arith.extui %39 : i1 to i32
    %c0_i32_14 = arith.constant 0 : i32
    %41 = arith.cmpi ne, %40, %c0_i32_14 : i32
    scf.if %41 {
      %c0_15 = arith.constant 0 : index
      %c0_16 = arith.constant 0 : index
      %42 = vector.load %arg6[%c0_15, %c0_16] : memref<16x128xf32, #tpu.memory_space<vmem>>, vector<16x128xf32>
      %c0_17 = arith.constant 0 : index
      %c0_18 = arith.constant 0 : index
      %c0_19 = arith.constant 0 : index
      %43 = vector.load %arg4[%c0_17, %c0_18, %c0_19] : memref<1x16x128xf32, #tpu.memory_space<vmem>>, vector<1x16x128xf32>
      %44 = vector.shape_cast %43 : vector<1x16x128xf32> to vector<16x128xf32>
      %45 = vector.shape_cast %42 : vector<16x128xf32> to vector<1x16x128xf32>
      tpu.vector_store %arg4[%c0_17, %c0_18, %c0_19], %45 {strides = array<i32>} : memref<1x16x128xf32, #tpu.memory_space<vmem>>, vector<1x16x128xf32>,
      %c0_20 = arith.constant 0 : index
      %c0_21 = arith.constant 0 : index
      %46 = vector.load %arg7[%c0_20, %c0_21] : memref<16x128xf32, #tpu.memory_space<vmem>>, vector<16x128xf32>
      %c0_22 = arith.constant 0 : index
      %c0_23 = arith.constant 0 : index
      %c0_24 = arith.constant 0 : index
      %47 = vector.load %arg5[%c0_22, %c0_23, %c0_24] : memref<1x16x128xf32, #tpu.memory_space<vmem>>, vector<1x16x128xf32>
      %48 = vector.shape_cast %47 : vector<1x16x128xf32> to vector<16x128xf32>
      %49 = vector.shape_cast %46 : vector<16x128xf32> to vector<1x16x128xf32>
      tpu.vector_store %arg5[%c0_22, %c0_23, %c0_24], %49 {strides = array<i32>} : memref<1x16x128xf32, #tpu.memory_space<vmem>>, vector<1x16x128xf32>,
    } else {
    }
    return
  }
  func.func @transform_0(%arg0: i32, %arg1: i32) -> (i32, i32, i32) {
    %c0_i32 = arith.constant 0 : i32
    %c0_i32_0 = arith.constant 0 : i32
    return %arg0, %c0_i32, %arg1 : i32, i32, i32
  }
  func.func @transform_1(%arg0: i32, %arg1: i32) -> (i32, i32) {
    %c0_i32 = arith.constant 0 : i32
    %c0_i32_0 = arith.constant 0 : i32
    %c0_i32_1 = arith.constant 0 : i32
    return %c0_i32, %c0_i32_0 : i32, i32
  }
  func.func @transform_2(%arg0: i32, %arg1: i32) -> (i32, i32, i32) {
    %c0_i32 = arith.constant 0 : i32
    %c0_i32_0 = arith.constant 0 : i32
    %c0_i32_1 = arith.constant 0 : i32
    return %arg0, %c0_i32, %c0_i32_0 : i32, i32, i32
  }
  func.func @transform_3(%arg0: i32, %arg1: i32) -> (i32, i32, i32) {
    %c0_i32 = arith.constant 0 : i32
    %c0_i32_0 = arith.constant 0 : i32
    %c0_i32_1 = arith.constant 0 : i32
    return %arg0, %c0_i32, %c0_i32_0 : i32, i32, i32
  }
}

module attributes {stable_mosaic.version = 11 : i64} {
  func.func @stats2_kernel(%arg0: i32, %arg1: i32, %arg2: memref<1x3x384xf32, #tpu.memory_space<vmem>>, %arg3: memref<16x3xf32, #tpu.memory_space<vmem>>, %arg4: memref<16x1xf32, #tpu.memory_space<vmem>>, %arg5: memref<16x1xf32, #tpu.memory_space<vmem>>, %arg6: memref<32x16xf32, #tpu.memory_space<vmem>>, %arg7: memref<1x16x384xf32, #tpu.memory_space<vmem>>, %arg8: memref<1x32x128xf32, #tpu.memory_space<vmem>>, %arg9: memref<1x32x128xf32, #tpu.memory_space<vmem>>, %arg10: memref<32x128xf32, #tpu.memory_space<vmem>>, %arg11: memref<32x128xf32, #tpu.memory_space<vmem>>) attributes {dimension_semantics = [#tpu.dimension_semantics<parallel>, #tpu.dimension_semantics<arbitrary>], iteration_bounds = array<i64: 2, 1>, scalar_prefetch = 0 : i64, scratch_operands = 2 : i64, tpu.core_type = #tpu.core_type<tc>, window_params = [{transform_indices = @transform_0, window_bounds = array<i64: 1, 3, 384>}, {pipeline_mode = #tpu.pipeline_mode<synchronous>, transform_indices = @transform_1, window_bounds = array<i64: 16, 3>}, {pipeline_mode = #tpu.pipeline_mode<synchronous>, transform_indices = @transform_2, window_bounds = array<i64: 16, 1>}, {pipeline_mode = #tpu.pipeline_mode<synchronous>, transform_indices = @transform_3, window_bounds = array<i64: 16, 1>}, {pipeline_mode = #tpu.pipeline_mode<synchronous>, transform_indices = @transform_4, window_bounds = array<i64: 32, 16>}, {transform_indices = @transform_5, window_bounds = array<i64: 1, 16, 384>}, {transform_indices = @transform_6, window_bounds = array<i64: 1, 32, 128>}, {transform_indices = @transform_7, window_bounds = array<i64: 1, 32, 128>}]} {
    %c0 = arith.constant 0 : index
    %c0_0 = arith.constant 0 : index
    %c0_1 = arith.constant 0 : index
    %0 = vector.load %arg2[%c0, %c0_0, %c0_1] : memref<1x3x384xf32, #tpu.memory_space<vmem>>, vector<1x3x384xf32>
    %1 = vector.shape_cast %0 : vector<1x3x384xf32> to vector<3x384xf32>
    %c0_2 = arith.constant 0 : index
    %c0_3 = arith.constant 0 : index
    %2 = vector.load %arg3[%c0_2, %c0_3] : memref<16x3xf32, #tpu.memory_space<vmem>>, vector<16x3xf32>
    %3 = vector.extract_strided_slice %2 {offsets = [0, 0], sizes = [16, 1], strides = [1, 1]} : vector<16x3xf32> to vector<16x1xf32>
    %4 = vector.extract_strided_slice %1 {offsets = [0, 0], sizes = [1, 384], strides = [1, 1]} : vector<3x384xf32> to vector<1x384xf32>
    %5 = vector.broadcast %3 : vector<16x1xf32> to vector<16x384xf32>
    %6 = vector.broadcast %4 : vector<1x384xf32> to vector<16x384xf32>
    %7 = arith.mulf %5, %6 : vector<16x384xf32>
    %8 = vector.extract_strided_slice %2 {offsets = [0, 1], sizes = [16, 1], strides = [1, 1]} : vector<16x3xf32> to vector<16x1xf32>
    %9 = vector.extract_strided_slice %1 {offsets = [1, 0], sizes = [1, 384], strides = [1, 1]} : vector<3x384xf32> to vector<1x384xf32>
    %10 = vector.broadcast %8 : vector<16x1xf32> to vector<16x384xf32>
    %11 = vector.broadcast %9 : vector<1x384xf32> to vector<16x384xf32>
    %12 = arith.mulf %10, %11 : vector<16x384xf32>
    %13 = arith.addf %7, %12 : vector<16x384xf32>
    %14 = vector.extract_strided_slice %2 {offsets = [0, 2], sizes = [16, 1], strides = [1, 1]} : vector<16x3xf32> to vector<16x1xf32>
    %15 = vector.extract_strided_slice %1 {offsets = [2, 0], sizes = [1, 384], strides = [1, 1]} : vector<3x384xf32> to vector<1x384xf32>
    %16 = vector.broadcast %14 : vector<16x1xf32> to vector<16x384xf32>
    %17 = vector.broadcast %15 : vector<1x384xf32> to vector<16x384xf32>
    %18 = arith.mulf %16, %17 : vector<16x384xf32>
    %19 = arith.addf %13, %18 : vector<16x384xf32>
    %c0_4 = arith.constant 0 : index
    %c0_5 = arith.constant 0 : index
    %20 = vector.load %arg4[%c0_4, %c0_5] : memref<16x1xf32, #tpu.memory_space<vmem>>, vector<16x1xf32>
    %21 = vector.broadcast %20 : vector<16x1xf32> to vector<16x384xf32>
    %22 = arith.mulf %19, %21 : vector<16x384xf32>
    %c0_6 = arith.constant 0 : index
    %c0_7 = arith.constant 0 : index
    %23 = vector.load %arg5[%c0_6, %c0_7] : memref<16x1xf32, #tpu.memory_space<vmem>>, vector<16x1xf32>
    %24 = vector.broadcast %23 : vector<16x1xf32> to vector<16x384xf32>
    %25 = arith.addf %22, %24 : vector<16x384xf32>
    %26 = math.tanh %25 : vector<16x384xf32>
    %c0_8 = arith.constant 0 : index
    %c0_9 = arith.constant 0 : index
    %c0_10 = arith.constant 0 : index
    %27 = vector.load %arg7[%c0_8, %c0_9, %c0_10] : memref<1x16x384xf32, #tpu.memory_space<vmem>>, vector<1x16x384xf32>
    %28 = vector.shape_cast %27 : vector<1x16x384xf32> to vector<16x384xf32>
    %29 = vector.shape_cast %26 : vector<16x384xf32> to vector<1x16x384xf32>
    tpu.vector_store %arg7[%c0_8, %c0_9, %c0_10], %29 {strides = array<i32>} : memref<1x16x384xf32, #tpu.memory_space<vmem>>, vector<1x16x384xf32>,
    %c0_11 = arith.constant 0 : index
    %c0_12 = arith.constant 0 : index
    %30 = vector.load %arg6[%c0_11, %c0_12] : memref<32x16xf32, #tpu.memory_space<vmem>>, vector<32x16xf32>
    %cst = arith.constant dense<0.000000e+00> : vector<32x384xf32>
    %31 = tpu.matmul %30, %26, %cst {dimension_numbers = #tpu.dot_dimension_numbers<[1], [0], [0], [1], [0, 0, 1, 1], [], []>} : vector<32x16xf32>, vector<16x384xf32>, vector<32x384xf32> -> vector<32x384xf32>
    %32 = vector.extract_strided_slice %31 {offsets = [0, 0], sizes = [32, 128], strides = [1, 1]} : vector<32x384xf32> to vector<32x128xf32>
    %33 = vector.extract_strided_slice %31 {offsets = [0, 128], sizes = [32, 128], strides = [1, 1]} : vector<32x384xf32> to vector<32x128xf32>
    %34 = vector.extract_strided_slice %31 {offsets = [0, 256], sizes = [32, 128], strides = [1, 1]} : vector<32x384xf32> to vector<32x128xf32>
    %35 = arith.mulf %32, %32 : vector<32x128xf32>
    %36 = arith.addf %32, %33 : vector<32x128xf32>
    %37 = arith.mulf %33, %33 : vector<32x128xf32>
    %38 = arith.addf %35, %37 : vector<32x128xf32>
    %39 = arith.addf %36, %34 : vector<32x128xf32>
    %40 = arith.mulf %34, %34 : vector<32x128xf32>
    %41 = arith.addf %38, %40 : vector<32x128xf32>
    %c0_i32 = arith.constant 0 : i32
    %42 = arith.cmpi eq, %arg1, %c0_i32 : i32
    %43 = arith.extui %42 : i1 to i32
    %c0_i32_13 = arith.constant 0 : i32
    %44 = arith.cmpi ne, %43, %c0_i32_13 : i32
    scf.if %44 {
      %cst_24 = arith.constant 0.000000e+00 : f32
      %54 = vector.broadcast %cst_24 : f32 to vector<32x128xf32>
      %c0_25 = arith.constant 0 : index
      %c0_26 = arith.constant 0 : index
      %55 = vector.load %arg10[%c0_25, %c0_26] : memref<32x128xf32, #tpu.memory_space<vmem>>, vector<32x128xf32>
      tpu.vector_store %arg10[%c0_25, %c0_26], %54 {strides = array<i32>} : memref<32x128xf32, #tpu.memory_space<vmem>>, vector<32x128xf32>,
      %cst_27 = arith.constant 0.000000e+00 : f32
      %56 = vector.broadcast %cst_27 : f32 to vector<32x128xf32>
      %c0_28 = arith.constant 0 : index
      %c0_29 = arith.constant 0 : index
      %57 = vector.load %arg11[%c0_28, %c0_29] : memref<32x128xf32, #tpu.memory_space<vmem>>, vector<32x128xf32>
      tpu.vector_store %arg11[%c0_28, %c0_29], %56 {strides = array<i32>} : memref<32x128xf32, #tpu.memory_space<vmem>>, vector<32x128xf32>,
    } else {
    }
    %c0_14 = arith.constant 0 : index
    %c0_15 = arith.constant 0 : index
    %45 = vector.load %arg10[%c0_14, %c0_15] : memref<32x128xf32, #tpu.memory_space<vmem>>, vector<32x128xf32>
    %46 = arith.addf %45, %39 : vector<32x128xf32>
    %c0_16 = arith.constant 0 : index
    %c0_17 = arith.constant 0 : index
    %47 = vector.load %arg10[%c0_16, %c0_17] : memref<32x128xf32, #tpu.memory_space<vmem>>, vector<32x128xf32>
    tpu.vector_store %arg10[%c0_16, %c0_17], %46 {strides = array<i32>} : memref<32x128xf32, #tpu.memory_space<vmem>>, vector<32x128xf32>,
    %c0_18 = arith.constant 0 : index
    %c0_19 = arith.constant 0 : index
    %48 = vector.load %arg11[%c0_18, %c0_19] : memref<32x128xf32, #tpu.memory_space<vmem>>, vector<32x128xf32>
    %49 = arith.addf %48, %41 : vector<32x128xf32>
    %c0_20 = arith.constant 0 : index
    %c0_21 = arith.constant 0 : index
    %50 = vector.load %arg11[%c0_20, %c0_21] : memref<32x128xf32, #tpu.memory_space<vmem>>, vector<32x128xf32>
    tpu.vector_store %arg11[%c0_20, %c0_21], %49 {strides = array<i32>} : memref<32x128xf32, #tpu.memory_space<vmem>>, vector<32x128xf32>,
    %c0_i32_22 = arith.constant 0 : i32
    %51 = arith.cmpi eq, %arg1, %c0_i32_22 : i32
    %52 = arith.extui %51 : i1 to i32
    %c0_i32_23 = arith.constant 0 : i32
    %53 = arith.cmpi ne, %52, %c0_i32_23 : i32
    scf.if %53 {
      %c0_24 = arith.constant 0 : index
      %c0_25 = arith.constant 0 : index
      %54 = vector.load %arg10[%c0_24, %c0_25] : memref<32x128xf32, #tpu.memory_space<vmem>>, vector<32x128xf32>
      %c0_26 = arith.constant 0 : index
      %c0_27 = arith.constant 0 : index
      %c0_28 = arith.constant 0 : index
      %55 = vector.load %arg8[%c0_26, %c0_27, %c0_28] : memref<1x32x128xf32, #tpu.memory_space<vmem>>, vector<1x32x128xf32>
      %56 = vector.shape_cast %55 : vector<1x32x128xf32> to vector<32x128xf32>
      %57 = vector.shape_cast %54 : vector<32x128xf32> to vector<1x32x128xf32>
      tpu.vector_store %arg8[%c0_26, %c0_27, %c0_28], %57 {strides = array<i32>} : memref<1x32x128xf32, #tpu.memory_space<vmem>>, vector<1x32x128xf32>,
      %c0_29 = arith.constant 0 : index
      %c0_30 = arith.constant 0 : index
      %58 = vector.load %arg11[%c0_29, %c0_30] : memref<32x128xf32, #tpu.memory_space<vmem>>, vector<32x128xf32>
      %c0_31 = arith.constant 0 : index
      %c0_32 = arith.constant 0 : index
      %c0_33 = arith.constant 0 : index
      %59 = vector.load %arg9[%c0_31, %c0_32, %c0_33] : memref<1x32x128xf32, #tpu.memory_space<vmem>>, vector<1x32x128xf32>
      %60 = vector.shape_cast %59 : vector<1x32x128xf32> to vector<32x128xf32>
      %61 = vector.shape_cast %58 : vector<32x128xf32> to vector<1x32x128xf32>
      tpu.vector_store %arg9[%c0_31, %c0_32, %c0_33], %61 {strides = array<i32>} : memref<1x32x128xf32, #tpu.memory_space<vmem>>, vector<1x32x128xf32>,
    } else {
    }
    return
  }
  func.func @transform_0(%arg0: i32, %arg1: i32) -> (i32, i32, i32) {
    %c0_i32 = arith.constant 0 : i32
    %c0_i32_0 = arith.constant 0 : i32
    return %arg0, %c0_i32, %arg1 : i32, i32, i32
  }
  func.func @transform_1(%arg0: i32, %arg1: i32) -> (i32, i32) {
    %c0_i32 = arith.constant 0 : i32
    %c0_i32_0 = arith.constant 0 : i32
    %c0_i32_1 = arith.constant 0 : i32
    return %c0_i32, %c0_i32_0 : i32, i32
  }
  func.func @transform_2(%arg0: i32, %arg1: i32) -> (i32, i32) {
    %c0_i32 = arith.constant 0 : i32
    %c0_i32_0 = arith.constant 0 : i32
    %c0_i32_1 = arith.constant 0 : i32
    return %c0_i32, %c0_i32_0 : i32, i32
  }
  func.func @transform_3(%arg0: i32, %arg1: i32) -> (i32, i32) {
    %c0_i32 = arith.constant 0 : i32
    %c0_i32_0 = arith.constant 0 : i32
    %c0_i32_1 = arith.constant 0 : i32
    return %c0_i32, %c0_i32_0 : i32, i32
  }
  func.func @transform_4(%arg0: i32, %arg1: i32) -> (i32, i32) {
    %c0_i32 = arith.constant 0 : i32
    %c0_i32_0 = arith.constant 0 : i32
    %c0_i32_1 = arith.constant 0 : i32
    return %c0_i32, %c0_i32_0 : i32, i32
  }
  func.func @transform_5(%arg0: i32, %arg1: i32) -> (i32, i32, i32) {
    %c16_i32 = arith.constant 16 : i32
    %c0_i32 = arith.constant 0 : i32
    return %arg0, %c16_i32, %arg1 : i32, i32, i32
  }
  func.func @transform_6(%arg0: i32, %arg1: i32) -> (i32, i32, i32) {
    %c0_i32 = arith.constant 0 : i32
    %c0_i32_0 = arith.constant 0 : i32
    %c0_i32_1 = arith.constant 0 : i32
    return %arg0, %c0_i32, %c0_i32_0 : i32, i32, i32
  }
  func.func @transform_7(%arg0: i32, %arg1: i32) -> (i32, i32, i32) {
    %c0_i32 = arith.constant 0 : i32
    %c0_i32_0 = arith.constant 0 : i32
    %c0_i32_1 = arith.constant 0 : i32
    return %arg0, %c0_i32, %c0_i32_0 : i32, i32, i32
  }
}

module attributes {stable_mosaic.version = 11 : i64} {
  func.func @stats3_kernel(%arg0: i32, %arg1: i32, %arg2: memref<1x16x384xf32, #tpu.memory_space<vmem>>, %arg3: memref<32x16xf32, #tpu.memory_space<vmem>>, %arg4: memref<32x1xf32, #tpu.memory_space<vmem>>, %arg5: memref<32x1xf32, #tpu.memory_space<vmem>>, %arg6: memref<256x32xbf16, #tpu.memory_space<vmem>>, %arg7: memref<1x256x128xf32, #tpu.memory_space<vmem>>, %arg8: memref<1x256x128xf32, #tpu.memory_space<vmem>>, %arg9: memref<1x256x128xf32, #tpu.memory_space<vmem>>, %arg10: memref<1x256x128xf32, #tpu.memory_space<vmem>>, %arg11: memref<256x128xf32, #tpu.memory_space<vmem>>, %arg12: memref<256x128xf32, #tpu.memory_space<vmem>>, %arg13: memref<256x128xf32, #tpu.memory_space<vmem>>, %arg14: memref<256x128xf32, #tpu.memory_space<vmem>>) attributes {dimension_semantics = [#tpu.dimension_semantics<parallel>, #tpu.dimension_semantics<arbitrary>], iteration_bounds = array<i64: 2, 1>, scalar_prefetch = 0 : i64, scratch_operands = 4 : i64, tpu.core_type = #tpu.core_type<tc>, window_params = [{transform_indices = @transform_0, window_bounds = array<i64: 1, 16, 384>}, {pipeline_mode = #tpu.pipeline_mode<synchronous>, transform_indices = @transform_1, window_bounds = array<i64: 32, 16>}, {pipeline_mode = #tpu.pipeline_mode<synchronous>, transform_indices = @transform_2, window_bounds = array<i64: 32, 1>}, {pipeline_mode = #tpu.pipeline_mode<synchronous>, transform_indices = @transform_3, window_bounds = array<i64: 32, 1>}, {pipeline_mode = #tpu.pipeline_mode<synchronous>, transform_indices = @transform_4, window_bounds = array<i64: 256, 32>}, {transform_indices = @transform_5, window_bounds = array<i64: 1, 256, 128>}, {transform_indices = @transform_6, window_bounds = array<i64: 1, 256, 128>}, {transform_indices = @transform_7, window_bounds = array<i64: 1, 256, 128>}, {transform_indices = @transform_8, window_bounds = array<i64: 1, 256, 128>}]} {
    %c0 = arith.constant 0 : index
    %c0_0 = arith.constant 0 : index
    %c0_1 = arith.constant 0 : index
    %0 = vector.load %arg2[%c0, %c0_0, %c0_1] : memref<1x16x384xf32, #tpu.memory_space<vmem>>, vector<1x16x384xf32>
    %1 = vector.shape_cast %0 : vector<1x16x384xf32> to vector<16x384xf32>
    %c0_2 = arith.constant 0 : index
    %c0_3 = arith.constant 0 : index
    %2 = vector.load %arg3[%c0_2, %c0_3] : memref<32x16xf32, #tpu.memory_space<vmem>>, vector<32x16xf32>
    %cst = arith.constant dense<0.000000e+00> : vector<32x384xf32>
    %3 = tpu.matmul %2, %1, %cst {dimension_numbers = #tpu.dot_dimension_numbers<[1], [0], [0], [1], [0, 0, 1, 1], [], []>} : vector<32x16xf32>, vector<16x384xf32>, vector<32x384xf32> -> vector<32x384xf32>
    %c0_4 = arith.constant 0 : index
    %c0_5 = arith.constant 0 : index
    %4 = vector.load %arg4[%c0_4, %c0_5] : memref<32x1xf32, #tpu.memory_space<vmem>>, vector<32x1xf32>
    %5 = vector.broadcast %4 : vector<32x1xf32> to vector<32x384xf32>
    %6 = arith.mulf %3, %5 : vector<32x384xf32>
    %c0_6 = arith.constant 0 : index
    %c0_7 = arith.constant 0 : index
    %7 = vector.load %arg5[%c0_6, %c0_7] : memref<32x1xf32, #tpu.memory_space<vmem>>, vector<32x1xf32>
    %8 = vector.broadcast %7 : vector<32x1xf32> to vector<32x384xf32>
    %9 = arith.addf %6, %8 : vector<32x384xf32>
    %10 = math.tanh %9 : vector<32x384xf32>
    %c0_8 = arith.constant 0 : index
    %c0_9 = arith.constant 0 : index
    %11 = vector.load %arg6[%c0_8, %c0_9] : memref<256x32xbf16, #tpu.memory_space<vmem>>, vector<256x32xbf16>
    %12 = arith.truncf %10 : vector<32x384xf32> to vector<32x384xbf16>
    %cst_10 = arith.constant dense<0.000000e+00> : vector<256x384xf32>
    %13 = tpu.matmul %11, %12, %cst_10 {dimension_numbers = #tpu.dot_dimension_numbers<[1], [0], [0], [1], [0, 0, 1, 1], [], []>} : vector<256x32xbf16>, vector<32x384xbf16>, vector<256x384xf32> -> vector<256x384xf32>
    %14 = vector.extract_strided_slice %13 {offsets = [0, 0], sizes = [256, 128], strides = [1, 1]} : vector<256x384xf32> to vector<256x128xf32>
    %15 = vector.extract_strided_slice %13 {offsets = [0, 128], sizes = [256, 128], strides = [1, 1]} : vector<256x384xf32> to vector<256x128xf32>
    %16 = vector.extract_strided_slice %13 {offsets = [0, 256], sizes = [256, 128], strides = [1, 1]} : vector<256x384xf32> to vector<256x128xf32>
    %17 = arith.mulf %14, %14 : vector<256x128xf32>
    %18 = arith.addf %14, %15 : vector<256x128xf32>
    %19 = arith.mulf %15, %15 : vector<256x128xf32>
    %20 = arith.addf %17, %19 : vector<256x128xf32>
    %21 = arith.maximumf %14, %15 : vector<256x128xf32>
    %22 = arith.minimumf %14, %15 : vector<256x128xf32>
    %23 = arith.addf %18, %16 : vector<256x128xf32>
    %24 = arith.mulf %16, %16 : vector<256x128xf32>
    %25 = arith.addf %20, %24 : vector<256x128xf32>
    %26 = arith.maximumf %21, %16 : vector<256x128xf32>
    %27 = arith.minimumf %22, %16 : vector<256x128xf32>
    %c0_i32 = arith.constant 0 : i32
    %28 = arith.cmpi eq, %arg1, %c0_i32 : i32
    %29 = arith.extui %28 : i1 to i32
    %c0_i32_11 = arith.constant 0 : i32
    %30 = arith.cmpi ne, %29, %c0_i32_11 : i32
    scf.if %30 {
      %cst_30 = arith.constant 0.000000e+00 : f32
      %46 = vector.broadcast %cst_30 : f32 to vector<256x128xf32>
      %c0_31 = arith.constant 0 : index
      %c0_32 = arith.constant 0 : index
      %47 = vector.load %arg11[%c0_31, %c0_32] : memref<256x128xf32, #tpu.memory_space<vmem>>, vector<256x128xf32>
      tpu.vector_store %arg11[%c0_31, %c0_32], %46 {strides = array<i32>} : memref<256x128xf32, #tpu.memory_space<vmem>>, vector<256x128xf32>,
      %cst_33 = arith.constant 0.000000e+00 : f32
      %48 = vector.broadcast %cst_33 : f32 to vector<256x128xf32>
      %c0_34 = arith.constant 0 : index
      %c0_35 = arith.constant 0 : index
      %49 = vector.load %arg12[%c0_34, %c0_35] : memref<256x128xf32, #tpu.memory_space<vmem>>, vector<256x128xf32>
      tpu.vector_store %arg12[%c0_34, %c0_35], %48 {strides = array<i32>} : memref<256x128xf32, #tpu.memory_space<vmem>>, vector<256x128xf32>,
      %cst_36 = arith.constant 0xFF800000 : f32
      %50 = vector.broadcast %cst_36 : f32 to vector<256x128xf32>
      %c0_37 = arith.constant 0 : index
      %c0_38 = arith.constant 0 : index
      %51 = vector.load %arg13[%c0_37, %c0_38] : memref<256x128xf32, #tpu.memory_space<vmem>>, vector<256x128xf32>
      tpu.vector_store %arg13[%c0_37, %c0_38], %50 {strides = array<i32>} : memref<256x128xf32, #tpu.memory_space<vmem>>, vector<256x128xf32>,
      %cst_39 = arith.constant 0x7F800000 : f32
      %52 = vector.broadcast %cst_39 : f32 to vector<256x128xf32>
      %c0_40 = arith.constant 0 : index
      %c0_41 = arith.constant 0 : index
      %53 = vector.load %arg14[%c0_40, %c0_41] : memref<256x128xf32, #tpu.memory_space<vmem>>, vector<256x128xf32>
      tpu.vector_store %arg14[%c0_40, %c0_41], %52 {strides = array<i32>} : memref<256x128xf32, #tpu.memory_space<vmem>>, vector<256x128xf32>,
    } else {
    }
    %c0_12 = arith.constant 0 : index
    %c0_13 = arith.constant 0 : index
    %31 = vector.load %arg11[%c0_12, %c0_13] : memref<256x128xf32, #tpu.memory_space<vmem>>, vector<256x128xf32>
    %32 = arith.addf %31, %23 : vector<256x128xf32>
    %c0_14 = arith.constant 0 : index
    %c0_15 = arith.constant 0 : index
    %33 = vector.load %arg11[%c0_14, %c0_15] : memref<256x128xf32, #tpu.memory_space<vmem>>, vector<256x128xf32>
    tpu.vector_store %arg11[%c0_14, %c0_15], %32 {strides = array<i32>} : memref<256x128xf32, #tpu.memory_space<vmem>>, vector<256x128xf32>,
    %c0_16 = arith.constant 0 : index
    %c0_17 = arith.constant 0 : index
    %34 = vector.load %arg12[%c0_16, %c0_17] : memref<256x128xf32, #tpu.memory_space<vmem>>, vector<256x128xf32>
    %35 = arith.addf %34, %25 : vector<256x128xf32>
    %c0_18 = arith.constant 0 : index
    %c0_19 = arith.constant 0 : index
    %36 = vector.load %arg12[%c0_18, %c0_19] : memref<256x128xf32, #tpu.memory_space<vmem>>, vector<256x128xf32>
    tpu.vector_store %arg12[%c0_18, %c0_19], %35 {strides = array<i32>} : memref<256x128xf32, #tpu.memory_space<vmem>>, vector<256x128xf32>,
    %c0_20 = arith.constant 0 : index
    %c0_21 = arith.constant 0 : index
    %37 = vector.load %arg13[%c0_20, %c0_21] : memref<256x128xf32, #tpu.memory_space<vmem>>, vector<256x128xf32>
    %38 = arith.maximumf %37, %26 : vector<256x128xf32>
    %c0_22 = arith.constant 0 : index
    %c0_23 = arith.constant 0 : index
    %39 = vector.load %arg13[%c0_22, %c0_23] : memref<256x128xf32, #tpu.memory_space<vmem>>, vector<256x128xf32>
    tpu.vector_store %arg13[%c0_22, %c0_23], %38 {strides = array<i32>} : memref<256x128xf32, #tpu.memory_space<vmem>>, vector<256x128xf32>,
    %c0_24 = arith.constant 0 : index
    %c0_25 = arith.constant 0 : index
    %40 = vector.load %arg14[%c0_24, %c0_25] : memref<256x128xf32, #tpu.memory_space<vmem>>, vector<256x128xf32>
    %41 = arith.minimumf %40, %27 : vector<256x128xf32>
    %c0_26 = arith.constant 0 : index
    %c0_27 = arith.constant 0 : index
    %42 = vector.load %arg14[%c0_26, %c0_27] : memref<256x128xf32, #tpu.memory_space<vmem>>, vector<256x128xf32>
    tpu.vector_store %arg14[%c0_26, %c0_27], %41 {strides = array<i32>} : memref<256x128xf32, #tpu.memory_space<vmem>>, vector<256x128xf32>,
    %c0_i32_28 = arith.constant 0 : i32
    %43 = arith.cmpi eq, %arg1, %c0_i32_28 : i32
    %44 = arith.extui %43 : i1 to i32
    %c0_i32_29 = arith.constant 0 : i32
    %45 = arith.cmpi ne, %44, %c0_i32_29 : i32
    scf.if %45 {
      %c0_30 = arith.constant 0 : index
      %c0_31 = arith.constant 0 : index
      %46 = vector.load %arg11[%c0_30, %c0_31] : memref<256x128xf32, #tpu.memory_space<vmem>>, vector<256x128xf32>
      %c0_32 = arith.constant 0 : index
      %c0_33 = arith.constant 0 : index
      %c0_34 = arith.constant 0 : index
      %47 = vector.load %arg7[%c0_32, %c0_33, %c0_34] : memref<1x256x128xf32, #tpu.memory_space<vmem>>, vector<1x256x128xf32>
      %48 = vector.shape_cast %47 : vector<1x256x128xf32> to vector<256x128xf32>
      %49 = vector.shape_cast %46 : vector<256x128xf32> to vector<1x256x128xf32>
      tpu.vector_store %arg7[%c0_32, %c0_33, %c0_34], %49 {strides = array<i32>} : memref<1x256x128xf32, #tpu.memory_space<vmem>>, vector<1x256x128xf32>,
      %c0_35 = arith.constant 0 : index
      %c0_36 = arith.constant 0 : index
      %50 = vector.load %arg12[%c0_35, %c0_36] : memref<256x128xf32, #tpu.memory_space<vmem>>, vector<256x128xf32>
      %c0_37 = arith.constant 0 : index
      %c0_38 = arith.constant 0 : index
      %c0_39 = arith.constant 0 : index
      %51 = vector.load %arg8[%c0_37, %c0_38, %c0_39] : memref<1x256x128xf32, #tpu.memory_space<vmem>>, vector<1x256x128xf32>
      %52 = vector.shape_cast %51 : vector<1x256x128xf32> to vector<256x128xf32>
      %53 = vector.shape_cast %50 : vector<256x128xf32> to vector<1x256x128xf32>
      tpu.vector_store %arg8[%c0_37, %c0_38, %c0_39], %53 {strides = array<i32>} : memref<1x256x128xf32, #tpu.memory_space<vmem>>, vector<1x256x128xf32>,
      %c0_40 = arith.constant 0 : index
      %c0_41 = arith.constant 0 : index
      %54 = vector.load %arg13[%c0_40, %c0_41] : memref<256x128xf32, #tpu.memory_space<vmem>>, vector<256x128xf32>
      %c0_42 = arith.constant 0 : index
      %c0_43 = arith.constant 0 : index
      %c0_44 = arith.constant 0 : index
      %55 = vector.load %arg9[%c0_42, %c0_43, %c0_44] : memref<1x256x128xf32, #tpu.memory_space<vmem>>, vector<1x256x128xf32>
      %56 = vector.shape_cast %55 : vector<1x256x128xf32> to vector<256x128xf32>
      %57 = vector.shape_cast %54 : vector<256x128xf32> to vector<1x256x128xf32>
      tpu.vector_store %arg9[%c0_42, %c0_43, %c0_44], %57 {strides = array<i32>} : memref<1x256x128xf32, #tpu.memory_space<vmem>>, vector<1x256x128xf32>,
      %c0_45 = arith.constant 0 : index
      %c0_46 = arith.constant 0 : index
      %58 = vector.load %arg14[%c0_45, %c0_46] : memref<256x128xf32, #tpu.memory_space<vmem>>, vector<256x128xf32>
      %c0_47 = arith.constant 0 : index
      %c0_48 = arith.constant 0 : index
      %c0_49 = arith.constant 0 : index
      %59 = vector.load %arg10[%c0_47, %c0_48, %c0_49] : memref<1x256x128xf32, #tpu.memory_space<vmem>>, vector<1x256x128xf32>
      %60 = vector.shape_cast %59 : vector<1x256x128xf32> to vector<256x128xf32>
      %61 = vector.shape_cast %58 : vector<256x128xf32> to vector<1x256x128xf32>
      tpu.vector_store %arg10[%c0_47, %c0_48, %c0_49], %61 {strides = array<i32>} : memref<1x256x128xf32, #tpu.memory_space<vmem>>, vector<1x256x128xf32>,
    } else {
    }
    return
  }
  func.func @transform_0(%arg0: i32, %arg1: i32) -> (i32, i32, i32) {
    %c16_i32 = arith.constant 16 : i32
    %c0_i32 = arith.constant 0 : i32
    return %arg0, %c16_i32, %arg1 : i32, i32, i32
  }
  func.func @transform_1(%arg0: i32, %arg1: i32) -> (i32, i32) {
    %c0_i32 = arith.constant 0 : i32
    %c0_i32_0 = arith.constant 0 : i32
    %c0_i32_1 = arith.constant 0 : i32
    return %c0_i32, %c0_i32_0 : i32, i32
  }
  func.func @transform_2(%arg0: i32, %arg1: i32) -> (i32, i32) {
    %c0_i32 = arith.constant 0 : i32
    %c0_i32_0 = arith.constant 0 : i32
    %c0_i32_1 = arith.constant 0 : i32
    return %c0_i32, %c0_i32_0 : i32, i32
  }
  func.func @transform_3(%arg0: i32, %arg1: i32) -> (i32, i32) {
    %c0_i32 = arith.constant 0 : i32
    %c0_i32_0 = arith.constant 0 : i32
    %c0_i32_1 = arith.constant 0 : i32
    return %c0_i32, %c0_i32_0 : i32, i32
  }
  func.func @transform_4(%arg0: i32, %arg1: i32) -> (i32, i32) {
    %c0_i32 = arith.constant 0 : i32
    %c0_i32_0 = arith.constant 0 : i32
    %c0_i32_1 = arith.constant 0 : i32
    return %c0_i32, %c0_i32_0 : i32, i32
  }
  func.func @transform_5(%arg0: i32, %arg1: i32) -> (i32, i32, i32) {
    %c0_i32 = arith.constant 0 : i32
    %c0_i32_0 = arith.constant 0 : i32
    %c0_i32_1 = arith.constant 0 : i32
    return %arg0, %c0_i32, %c0_i32_0 : i32, i32, i32
  }
  func.func @transform_6(%arg0: i32, %arg1: i32) -> (i32, i32, i32) {
    %c0_i32 = arith.constant 0 : i32
    %c0_i32_0 = arith.constant 0 : i32
    %c0_i32_1 = arith.constant 0 : i32
    return %arg0, %c0_i32, %c0_i32_0 : i32, i32, i32
  }
  func.func @transform_7(%arg0: i32, %arg1: i32) -> (i32, i32, i32) {
    %c0_i32 = arith.constant 0 : i32
    %c0_i32_0 = arith.constant 0 : i32
    %c0_i32_1 = arith.constant 0 : i32
    return %arg0, %c0_i32, %c0_i32_0 : i32, i32, i32
  }
  func.func @transform_8(%arg0: i32, %arg1: i32) -> (i32, i32, i32) {
    %c0_i32 = arith.constant 0 : i32
    %c0_i32_0 = arith.constant 0 : i32
    %c0_i32_1 = arith.constant 0 : i32
    return %arg0, %c0_i32, %c0_i32_0 : i32, i32, i32
  }
}

module attributes {stable_mosaic.version = 11 : i64} {
  func.func @assemble_kernel(%arg0: i32, %arg1: i32, %arg2: memref<1x256x1xf32, #tpu.memory_space<vmem>>, %arg3: memref<2x272x384xf32, #tpu.memory_space<any>>, %arg4: memref<1x256x384xf32, #tpu.memory_space<vmem>>) attributes {dimension_semantics = [#tpu.dimension_semantics<parallel>, #tpu.dimension_semantics<parallel>], iteration_bounds = array<i64: 2, 1>, scalar_prefetch = 0 : i64, scratch_operands = 0 : i64, tpu.core_type = #tpu.core_type<tc>, window_params = [{transform_indices = @transform_0, window_bounds = array<i64: 1, 256, 1>}, {}, {transform_indices = @transform_2, window_bounds = array<i64: 1, 256, 384>}]} {
    %c0 = arith.constant 0 : index
    %c0_0 = arith.constant 0 : index
    %c0_1 = arith.constant 0 : index
    %0 = vector.load %arg2[%c0, %c0_0, %c0_1] : memref<1x256x1xf32, #tpu.memory_space<vmem>>, vector<1x256x1xf32>
    %1 = vector.shape_cast %0 : vector<1x256x1xf32> to vector<256x1xf32>
    %2 = vector.shape_cast %1 : vector<256x1xf32> to vector<256x1xf32>
    %3 = vector.broadcast %2 : vector<256x1xf32> to vector<256x384xf32>
    %c0_2 = arith.constant 0 : index
    %c0_3 = arith.constant 0 : index
    %c0_4 = arith.constant 0 : index
    %4 = vector.load %arg4[%c0_2, %c0_3, %c0_4] : memref<1x256x384xf32, #tpu.memory_space<vmem>>, vector<1x256x384xf32>
    %5 = vector.shape_cast %4 : vector<1x256x384xf32> to vector<256x384xf32>
    %6 = vector.shape_cast %3 : vector<256x384xf32> to vector<1x256x384xf32>
    tpu.vector_store %arg4[%c0_2, %c0_3, %c0_4], %6 {strides = array<i32>} : memref<1x256x384xf32, #tpu.memory_space<vmem>>, vector<1x256x384xf32>,
    return
  }
  func.func @transform_0(%arg0: i32, %arg1: i32) -> (i32, i32, i32) {
    %c0_i32 = arith.constant 0 : i32
    %c0_i32_0 = arith.constant 0 : i32
    %c0_i32_1 = arith.constant 0 : i32
    return %arg0, %c0_i32, %c0_i32_0 : i32, i32, i32
  }
  func.func @transform_2(%arg0: i32, %arg1: i32) -> (i32, i32, i32) {
    %c0_i32 = arith.constant 0 : i32
    %c0_i32_0 = arith.constant 0 : i32
    return %arg0, %c0_i32, %arg1 : i32, i32, i32
  }
}

</mosaic_0001>

<llo_original>
// kernel: pointnet_encoder.4
$region0: #{pointnet_encoder.4}
  #allocation0 [shape = 'u32[]', space=smem, size = 0x4, offset = 0x4, fixed_abs, tag = 'smem constant byte address 0x4 - core index']
  #allocation1 [shape = 'u32[144,128]{1,0:T(1,128)}', space=vmem, size = 0x12000, scoped, tag = 'internal scratch']
  #allocation2 [shape = 'f32[16,128]{1,0:T(8,128)}', space=vmem, size = 0x2000, scoped, tag = 'scratch operand']
  #allocation3 [shape = 'f32[16,128]{1,0:T(8,128)}', space=vmem, size = 0x2000, scoped, tag = 'scratch operand']
  %s0 = inlined_call_operand.vmem [shape: f32[2,3,384], index: 0, kind: input, shape index: {}]
  %s1 = inlined_call_operand.vmem [shape: f32[16,3], index: 1, kind: input, shape index: {}]
  %s2 = inlined_call_operand.vmem [shape: f32[2,16,128], index: 2, kind: output, shape index: {0}]
  %s3 = inlined_call_operand.vmem [shape: f32[2,16,128], index: 3, kind: output, shape index: {1}]
  %4 = xla_tuple %s2, %s3
  %s5 = sld [smem:[#allocation0]]
  $region57: #{pointnet_encoder.4} parent=0
    _
  %s7 = ssub.s32 1, %s5
  %s8 = scalar_select 0, %s7, %s5
  loop: start=0, step=1, limit=4
  $region2: #{pointnet_encoder.4} parent=0 // loop_pre_header
    _
  $region3: #{pointnet_encoder.4} parent=0 // loop_header
    %s10 = sphi 0, %s14
    %p11 = scmp.ge.s32.totalorder %s10, 4
    %s17 = sphi 0, %s29
    %s18 = sphi 0, %s25
    %s19 = sphi 0, %s17
    %s20 = sphi 0, %s18
    %s21 = sphi 0, %s19
    %s22 = sphi 0, %s20
    %s34 = sphi 0, %s36
    %s37 = sphi 0, %s34
    %s38 = sphi 0, %s37
    %s54 = sphi 0, %s38
    %s58 = sphi 0, %s58
    %s60 = sphi 0, %s58
    %s61 = sphi 0, %s60
    %s75 = sphi 0, %s61
    %s81 = sphi 0, %s83
    %s84 = sphi 0, %s81
    %s85 = sphi 0, %s84
    %s101 = sphi 0, %s85
    %s107 = sphi 0, %s109
    %s110 = sphi 0, %s107
    %s111 = sphi 0, %s110
    %s127 = sphi 0, %s111
  $region4: #{pointnet_encoder.4} parent=0 // loop_header_branch
    %13 = sbr.rel (%p11) target = $region8
  $region5: #{pointnet_encoder.4} parent=0 // loop_body
    %s15 = ssub.s32 %s10, 1
    %s16 = ssub.s32 %s10, 2
    %s23 = sadd.s32 1, %s18
    %p24 = scmp.ge.s32.totalorder %s23, 1
    %s25 = scalar_select %p24, 0, %s23
    %s26 = sadd.s32 1, %s17
    %s27 = scalar_select %p24, %s26, %s17
    %p28 = scmp.ge.s32.totalorder %s27, 2
    %s29 = scalar_select %p28, 0, %s27
    %s30 = ssub.s32 %s17, %s29
    %s31 = ssub.s32 %s18, %s25
    %s32 = sor.u32 %s30, %s31
    %p33 = scmp.eq.s32.totalorder %s32, 0
    %s35 = sadd.s32 %s34, 1
    %s36 = scalar_select %p33, %s34, %s35
    %p39 = pneg %p33
    %p40 = scmp.eq.s32.totalorder %s10, 1
    %p41 = por %p39, %p40
    %p42 = scmp.ne.s32.totalorder %s34, %s37
    %p43 = scmp.eq.s32.totalorder %s10, 0
    %p44 = por %p42, %p43
    %p45 = scmp.ne.s32.totalorder %s34, %s37
    %p46 = scmp.eq.s32.totalorder %s15, 1
    %p47 = por %p45, %p46
    %p48 = scmp.ne.s32.totalorder %s37, %s38
    %p49 = scmp.eq.s32.totalorder %s15, 0
    %p50 = por %p48, %p49
    %p51 = scmp.ne.s32.totalorder %s37, %s38
    %p52 = scmp.eq.s32.totalorder %s16, 1
    %p53 = por %p51, %p52
    %p55 = scmp.ne.s32.totalorder %s38, %s54
    %p56 = scmp.eq.s32.totalorder %s16, 0
    %p57 = por %p55, %p56
    %s59 = sadd.s32 %s58, 1
    %p62 = scmp.eq.s32.totalorder %s10, 1
    %p63 = scmp.ne.s32.totalorder %s58, %s60
    %p64 = scmp.eq.s32.totalorder %s10, 0
    %p65 = por %p63, %p64
    %p66 = scmp.ne.s32.totalorder %s58, %s60
    %p67 = scmp.eq.s32.totalorder %s15, 1
    %p68 = por %p66, %p67
    %p69 = scmp.ne.s32.totalorder %s60, %s61
    %p70 = scmp.eq.s32.totalorder %s15, 0
    %p71 = por %p69, %p70
    %p72 = scmp.ne.s32.totalorder %s60, %s61
    %p73 = scmp.eq.s32.totalorder %s16, 1
    %p74 = por %p72, %p73
    %p76 = scmp.ne.s32.totalorder %s61, %s75
    %p77 = scmp.eq.s32.totalorder %s16, 0
    %p78 = por %p76, %p77
    %s79 = ssub.s32 %s17, %s29
    %p80 = scmp.eq.s32.totalorder %s79, 0
    %s82 = sadd.s32 %s81, 1
    %s83 = scalar_select %p80, %s81, %s82
    %p86 = pneg %p80
    %p87 = scmp.eq.s32.totalorder %s10, 1
    %p88 = por %p86, %p87
    %p89 = scmp.ne.s32.totalorder %s81, %s84
    %p90 = scmp.eq.s32.totalorder %s10, 0
    %p91 = por %p89, %p90
    %p92 = scmp.ne.s32.totalorder %s81, %s84
    %p93 = scmp.eq.s32.totalorder %s15, 1
    %p94 = por %p92, %p93
    %p95 = scmp.ne.s32.totalorder %s84, %s85
    %p96 = scmp.eq.s32.totalorder %s15, 0
    %p97 = por %p95, %p96
    %p98 = scmp.ne.s32.totalorder %s84, %s85
    %p99 = scmp.eq.s32.totalorder %s16, 1
    %p100 = por %p98, %p99
    %p102 = scmp.ne.s32.totalorder %s85, %s101
    %p103 = scmp.eq.s32.totalorder %s16, 0
    %p104 = por %p102, %p103
    %s105 = ssub.s32 %s17, %s29
    %p106 = scmp.eq.s32.totalorder %s105, 0
    %s108 = sadd.s32 %s107, 1
    %s109 = scalar_select %p106, %s107, %s108
    %p112 = pneg %p106
    %p113 = scmp.eq.s32.totalorder %s10, 1
    %p114 = por %p112, %p113
    %p115 = scmp.ne.s32.totalorder %s107, %s110
    %p116 = scmp.eq.s32.totalorder %s10, 0
    %p117 = por %p115, %p116
    %p118 = scmp.ne.s32.totalorder %s107, %s110
    %p119 = scmp.eq.s32.totalorder %s15, 1
    %p120 = por %p118, %p119
    %p121 = scmp.ne.s32.totalorder %s110, %s111
    %p122 = scmp.eq.s32.totalorder %s15, 0
    %p123 = por %p121, %p122
    %p124 = scmp.ne.s32.totalorder %s110, %s111
    %p125 = scmp.eq.s32.totalorder %s16, 1
    %p126 = por %p124, %p125
    %p128 = scmp.ne.s32.totalorder %s111, %s127
    %p129 = scmp.eq.s32.totalorder %s16, 0
    %p130 = por %p128, %p129
    %p131 = scmp.le.s32.totalorder 1, %s10
    %p132 = scmp.lt.s32.totalorder %s10, 3
    %p133 = pnand %p131, %p132
    %p134 = pneg %p133
    // Predicated region
    $region9: #{pointnet_encoder.4} parent=5 // pred_check
      _
    $region10: #{pointnet_encoder.4} parent=5 // pred_check_branch
      %136 = sbr.rel (%p133) target = $region12
    $region11: #{pointnet_encoder.4} parent=5 // pred_region
      %s137 = ssub.s32 %s10, 1
      // Predicated region
      $region13: #{pointnet_encoder.4} parent=11 // pred_check
        %p138 = pneg %p71
      $region14: #{pointnet_encoder.4} parent=11 // pred_check_branch
        %140 = sbr.rel (%p138) target = $region16
      $region15: #{pointnet_encoder.4} parent=11 // pred_region
        _
      $region16: #{pointnet_encoder.4} parent=11 // pred_fallthru
        _
    $region12: #{pointnet_encoder.4} parent=5 // pred_fallthru
      _
    %p141 = scmp.lt.s32.totalorder %s10, 2
    // Predicated region
    $region17: #{pointnet_encoder.4} parent=5 // pred_check
      %p142 = pneg %p141
    $region18: #{pointnet_encoder.4} parent=5 // pred_check_branch
      %144 = sbr.rel (%p142) target = $region20
    $region19: #{pointnet_encoder.4} parent=5 // pred_region
      // Predicated region
      $region21: #{pointnet_encoder.4} parent=19 // pred_check
        %p145 = pneg %p44
      $region22: #{pointnet_encoder.4} parent=19 // pred_check_branch
        %147 = sbr.rel (%p145) target = $region24
      $region23: #{pointnet_encoder.4} parent=19 // pred_region
        %s148 = smul.u32 3, %s18
        %p149 = scmp.lt.s32.totalorder %s17, 1
        %s150 = scalar_select %p149, %s17, 1
        %p151 = scmp.lt.s32.totalorder %s148, 2
        %s152 = scalar_select %p151, %s148, 2
        %s153 = smul.addr %s150, 3
        %s154 = sadd.s32 %s152, %s153
        %s155 = smul.addr %s154, 4
        %s156 = scalar_lea.vmem %s0, %s155
        %s157 = smul.u32 3, %s18
      $region24: #{pointnet_encoder.4} parent=19 // pred_fallthru
        _
    $region20: #{pointnet_encoder.4} parent=5 // pred_fallthru
      _
    %p158 = scmp.le.s32.totalorder 1, %s10
    %p159 = scmp.lt.s32.totalorder %s10, 3
    %p160 = pnand %p158, %p159
    %p161 = pneg %p160
    // Predicated region
    $region25: #{pointnet_encoder.4} parent=5 // pred_check
      _
    $region26: #{pointnet_encoder.4} parent=5 // pred_check_branch
      %163 = sbr.rel (%p160) target = $region28
    $region27: #{pointnet_encoder.4} parent=5 // pred_region
      %s164 = ssub.s32 %s10, 1
      %s165 = smul.u32 3, %s20
      %p166 = scmp.lt.s32.totalorder %s19, 1
      %s167 = scalar_select %p166, %s19, 1
      %p168 = scmp.lt.s32.totalorder %s165, 2
      %s169 = scalar_select %p168, %s165, 2
      %s170 = smul.addr %s167, 3
      %s171 = sadd.s32 %s169, %s170
      %s172 = smul.addr %s171, 4
      %s173 = scalar_lea.vmem %s0, %s172
      %p174 = pneg %p50
      %p175 = pneg %p47
      %p176 = pneg %p71
      %p177 = pneg %p68
      %p178 = pneg %p97
      %p179 = pneg %p94
      %p180 = scmp.lt.s32.totalorder %s19, 1
      %s181 = scalar_select %p180, %s19, 1
      %s182 = smul.addr %s181, 2
      %s183 = smul.addr %s182, 8
      %s184 = scalar_lea.vmem %s2, %s183
      %p185 = pneg %p123
      %p186 = pneg %p120
      %p187 = scmp.lt.s32.totalorder %s19, 1
      %s188 = scalar_select %p187, %s19, 1
      %s189 = smul.addr %s188, 2
      %s190 = smul.addr %s189, 8
      %s191 = scalar_lea.vmem %s3, %s190
      %s192 = smul.u32 3, %s20
      %p193 = scmp.lt.s32.totalorder %s19, 1
      %s194 = scalar_select %p193, %s19, 1
      %p195 = scmp.lt.s32.totalorder %s192, 2
      %s196 = scalar_select %p195, %s192, 2
      %s197 = smul.addr %s194, 3
      %s198 = sadd.s32 %s196, %s197
      %s199 = smul.addr %s198, 4
      %s200 = scalar_lea.vmem %s0, %s199
      %s201 = smul.u32 3, %s20
      %p202 = scmp.lt.s32.totalorder %s19, 1
      %s203 = scalar_select %p202, %s19, 1
      %s204 = smul.addr %s203, 2
      %s205 = smul.addr %s204, 8
      %s206 = scalar_lea.vmem %s2, %s205
      %p207 = scmp.lt.s32.totalorder %s19, 1
      %s208 = scalar_select %p207, %s19, 1
      %s209 = smul.addr %s208, 2
      %s210 = smul.addr %s209, 8
      %s211 = scalar_lea.vmem %s3, %s210
      %v212 = vld [vmem:[%s200] sm:$0x77]
      %v213 = vld [vmem:[%s200 + $0x8] sm:$0x7]
      %v214 = vld [vmem:[%s1] sm:$0xff]
      %v215 = vld [vmem:[%s1 + $0x8] sm:$0xff]
      %217 = vset.pattern.permute.xlu0 0
      %218 = vperm.xlu0 %217, %v214
      %v219 = vpop.permute.xlu0 %218
      %222 = vset.pattern.permute.xlu0 0
      %223 = vperm.xlu0 %222, %v215
      %v224 = vpop.permute.xlu0 %223
      %v228 = vlaneseq
      %v229 = vshrl.u32 %v228, 7
      %v230 = vsub.s32 0, %v229
      %v231 = vrot.slane %v212, %v230
      %v232 = vlaneseq
      %v233 = vshrl.u32 %v232, 7
      %v234 = vsub.s32 4, %v233
      %v235 = vrot.slane %v212, %v234
      %v236 = vlaneseq
      %v237 = vshrl.u32 %v236, 7
      %v238 = vsub.s32 0, %v237
      %v239 = vrot.slane %v213, %v238
      %v243 = vlaneseq
      %v244 = vshrl.u32 %v243, 7
      %v245 = vsub.s32 0, %v244
      %v246 = vrot.slane %v231, %v245
      %v247 = vlaneseq
      %v248 = vshrl.u32 %v247, 7
      %v249 = vsub.s32 0, %v248
      %v250 = vrot.slane %v235, %v249
      %v251 = vlaneseq
      %v252 = vshrl.u32 %v251, 7
      %v253 = vsub.s32 0, %v252
      %v254 = vrot.slane %v239, %v253
      %v255 = vmul.f32 %v219, %v246
      %v256 = vmul.f32 %v219, %v250
      %v257 = vmul.f32 %v219, %v254
      %v258 = vmul.f32 %v224, %v246
      %v259 = vmul.f32 %v224, %v250
      %v260 = vmul.f32 %v224, %v254
      %261 = vset.pattern.permute.xlu0 1
      %262 = vperm.xlu0 %261, %v214
      %v263 = vpop.permute.xlu0 %262
      %265 = vset.pattern.permute.xlu0 1
      %266 = vperm.xlu0 %265, %v215
      %v267 = vpop.permute.xlu0 %266
      %v269 = vlaneseq
      %v270 = vshrl.u32 %v269, 7
      %v271 = vsub.s32 1, %v270
      %v272 = vrot.slane %v212, %v271
      %v273 = vlaneseq
      %v274 = vshrl.u32 %v273, 7
      %v275 = vsub.s32 5, %v274
      %v276 = vrot.slane %v212, %v275
      %v277 = vlaneseq
      %v278 = vshrl.u32 %v277, 7
      %v279 = vsub.s32 1, %v278
      %v280 = vrot.slane %v213, %v279
      %v284 = vlaneseq
      %v285 = vshrl.u32 %v284, 7
      %v286 = vsub.s32 1, %v285
      %v287 = vrot.slane %v272, %v286
      %v288 = vlaneseq
      %v289 = vshrl.u32 %v288, 7
      %v290 = vsub.s32 1, %v289
      %v291 = vrot.slane %v276, %v290
      %v292 = vlaneseq
      %v293 = vshrl.u32 %v292, 7
      %v294 = vsub.s32 1, %v293
      %v295 = vrot.slane %v280, %v294
      %v296 = vmul.f32 %v263, %v287
      %v297 = vmul.f32 %v263, %v291
      %v298 = vmul.f32 %v263, %v295
      %v299 = vmul.f32 %v267, %v287
      %v300 = vmul.f32 %v267, %v291
      %v301 = vmul.f32 %v267, %v295
      %v302 = vadd.f32 %v255, %v296
      %v303 = vadd.f32 %v256, %v297
      %v304 = vadd.f32 %v257, %v298
      %v305 = vadd.f32 %v258, %v299
      %v306 = vadd.f32 %v259, %v300
      %v307 = vadd.f32 %v260, %v301
      %308 = vset.pattern.permute.xlu0 2
      %309 = vperm.xlu0 %308, %v214
      %v310 = vpop.permute.xlu0 %309
      %312 = vset.pattern.permute.xlu0 2
      %313 = vperm.xlu0 %312, %v215
      %v314 = vpop.permute.xlu0 %313
      %v316 = vlaneseq
      %v317 = vshrl.u32 %v316, 7
      %v318 = vsub.s32 2, %v317
      %v319 = vrot.slane %v212, %v318
      %v320 = vlaneseq
      %v321 = vshrl.u32 %v320, 7
      %v322 = vsub.s32 6, %v321
      %v323 = vrot.slane %v212, %v322
      %v324 = vlaneseq
      %v325 = vshrl.u32 %v324, 7
      %v326 = vsub.s32 2, %v325
      %v327 = vrot.slane %v213, %v326
      %v331 = vlaneseq
      %v332 = vshrl.u32 %v331, 7
      %v333 = vsub.s32 2, %v332
      %v334 = vrot.slane %v319, %v333
      %v335 = vlaneseq
      %v336 = vshrl.u32 %v335, 7
      %v337 = vsub.s32 2, %v336
      %v338 = vrot.slane %v323, %v337
      %v339 = vlaneseq
      %v340 = vshrl.u32 %v339, 7
      %v341 = vsub.s32 2, %v340
      %v342 = vrot.slane %v327, %v341
      %v343 = vmul.f32 %v310, %v334
      %v344 = vmul.f32 %v310, %v338
      %v345 = vmul.f32 %v310, %v342
      %v346 = vmul.f32 %v314, %v334
      %v347 = vmul.f32 %v314, %v338
      %v348 = vmul.f32 %v314, %v342
      %v349 = vadd.f32 %v302, %v343
      %v350 = vadd.f32 %v303, %v344
      %v351 = vadd.f32 %v304, %v345
      %v352 = vadd.f32 %v305, %v346
      %v353 = vadd.f32 %v306, %v347
      %v354 = vadd.f32 %v307, %v348
      %v355 = vmul.f32 %v349, %v349
      %v356 = vmul.f32 %v352, %v352
      %v357 = vadd.f32 %v349, %v350
      %v358 = vadd.f32 %v352, %v353
      %v359 = vmul.f32 %v350, %v350
      %v360 = vmul.f32 %v353, %v353
      %v361 = vadd.f32 %v355, %v359
      %v362 = vadd.f32 %v356, %v360
      %v363 = vadd.f32 %v357, %v351
      %v364 = vadd.f32 %v358, %v354
      %v365 = vmul.f32 %v351, %v351
      %v366 = vmul.f32 %v354, %v354
      %v367 = vadd.f32 %v361, %v365
      %v368 = vadd.f32 %v362, %v366
      %p369 = scmp.eq.s32.totalorder %s20, 0
      // Predicated region
      $region29: #{pointnet_encoder.4} parent=27 // pred_check
        %p370 = pneg %p369
      $region30: #{pointnet_encoder.4} parent=27 // pred_check_branch
        %372 = sbr.rel (%p370) target = $region32
      $region31: #{pointnet_encoder.4} parent=27 // pred_region
        %373 = vst [vmem:[#allocation2] sm:$0xff] 0.0
        %374 = vst [vmem:[#allocation2 + $0x8] sm:$0xff] 0.0
        %375 = vst [vmem:[#allocation3] sm:$0xff] 0.0
        %376 = vst [vmem:[#allocation3 + $0x8] sm:$0xff] 0.0
      $region32: #{pointnet_encoder.4} parent=27 // pred_fallthru
        _
      %v377 = vld [vmem:[#allocation2] sm:$0xff]
      %v378 = vld [vmem:[#allocation2 + $0x8] sm:$0xff]
      %v379 = vadd.f32 %v377, %v363
      %v380 = vadd.f32 %v378, %v364
      %381 = vst [vmem:[#allocation2] sm:$0xff] %v379
      %382 = vst [vmem:[#allocation2 + $0x8] sm:$0xff] %v380
      %v383 = vld [vmem:[#allocation3] sm:$0xff]
      %v384 = vld [vmem:[#allocation3 + $0x8] sm:$0xff]
      %v385 = vadd.f32 %v383, %v367
      %v386 = vadd.f32 %v384, %v368
      %387 = vst [vmem:[#allocation3] sm:$0xff] %v385
      %388 = vst [vmem:[#allocation3 + $0x8] sm:$0xff] %v386
      // Predicated region
      $region33: #{pointnet_encoder.4} parent=27 // pred_check
        %p389 = pneg %p369
      $region34: #{pointnet_encoder.4} parent=27 // pred_check_branch
        %391 = sbr.rel (%p389) target = $region36
      $region35: #{pointnet_encoder.4} parent=27 // pred_region
        %v392 = vld [vmem:[#allocation2] sm:$0xff]
        %v393 = vld [vmem:[#allocation2 + $0x8] sm:$0xff]
        %394 = vst [vmem:[%s206] sm:$0xff] %v392
        %395 = vst [vmem:[%s206 + $0x8] sm:$0xff] %v393
        %v396 = vld [vmem:[#allocation3] sm:$0xff]
        %v397 = vld [vmem:[#allocation3 + $0x8] sm:$0xff]
        %398 = vst [vmem:[%s211] sm:$0xff] %v396
        %399 = vst [vmem:[%s211 + $0x8] sm:$0xff] %v397
      $region36: #{pointnet_encoder.4} parent=27 // pred_fallthru
        _
      %p400 = scmp.lt.s32.totalorder %s19, 1
      %s401 = scalar_select %p400, %s19, 1
      %s402 = smul.addr %s401, 2
      %s403 = smul.addr %s402, 8
      %s404 = scalar_lea.vmem %s2, %s403
      %p405 = scmp.lt.s32.totalorder %s19, 1
      %s406 = scalar_select %p405, %s19, 1
      %s407 = smul.addr %s406, 2
      %s408 = smul.addr %s407, 8
      %s409 = scalar_lea.vmem %s3, %s408
      // Predicated region
      $region37: #{pointnet_encoder.4} parent=27 // pred_check
        %p410 = pneg %p94
      $region38: #{pointnet_encoder.4} parent=27 // pred_check_branch
        %412 = sbr.rel (%p410) target = $region40
      $region39: #{pointnet_encoder.4} parent=27 // pred_region
        _
      $region40: #{pointnet_encoder.4} parent=27 // pred_fallthru
        _
      // Predicated region
      $region41: #{pointnet_encoder.4} parent=27 // pred_check
        %p413 = pneg %p120
      $region42: #{pointnet_encoder.4} parent=27 // pred_check_branch
        %415 = sbr.rel (%p413) target = $region44
      $region43: #{pointnet_encoder.4} parent=27 // pred_region
        _
      $region44: #{pointnet_encoder.4} parent=27 // pred_fallthru
        _
    $region28: #{pointnet_encoder.4} parent=5 // pred_fallthru
      _
    %p416 = scmp.le.s32.totalorder 2, %s10
    // Predicated region
    $region45: #{pointnet_encoder.4} parent=5 // pred_check
      %p417 = pneg %p416
    $region46: #{pointnet_encoder.4} parent=5 // pred_check_branch
      %419 = sbr.rel (%p417) target = $region48
    $region47: #{pointnet_encoder.4} parent=5 // pred_region
      %s420 = ssub.s32 %s10, 2
      // Predicated region
      $region49: #{pointnet_encoder.4} parent=47 // pred_check
        %p421 = pneg %p100
      $region50: #{pointnet_encoder.4} parent=47 // pred_check_branch
        %423 = sbr.rel (%p421) target = $region52
      $region51: #{pointnet_encoder.4} parent=47 // pred_region
        %p424 = scmp.lt.s32.totalorder %s21, 1
        %s425 = scalar_select %p424, %s21, 1
        %s426 = smul.addr %s425, 2
        %s427 = smul.addr %s426, 8
        %s428 = scalar_lea.vmem %s2, %s427
      $region52: #{pointnet_encoder.4} parent=47 // pred_fallthru
        _
      // Predicated region
      $region53: #{pointnet_encoder.4} parent=47 // pred_check
        %p429 = pneg %p126
      $region54: #{pointnet_encoder.4} parent=47 // pred_check_branch
        %431 = sbr.rel (%p429) target = $region56
      $region55: #{pointnet_encoder.4} parent=47 // pred_region
        %p432 = scmp.lt.s32.totalorder %s21, 1
        %s433 = scalar_select %p432, %s21, 1
        %s434 = smul.addr %s433, 2
        %s435 = smul.addr %s434, 8
        %s436 = scalar_lea.vmem %s3, %s435
      $region56: #{pointnet_encoder.4} parent=47 // pred_fallthru
        _
    $region48: #{pointnet_encoder.4} parent=5 // pred_fallthru
      _
  $region6: #{pointnet_encoder.4} parent=0 // loop_footer
    %s14 = sadd.s32 1, %s10
  $region7: #{pointnet_encoder.4} parent=0 // loop_footer_branch
    %9 = sbr.rel target = $region3
  $region8: #{pointnet_encoder.4} parent=0 // loop_exit
    _

// kernel: pointnet_encoder.5
$region0: #{pointnet_encoder.5}
  #allocation0 [shape = 'u32[]', space=smem, size = 0x4, offset = 0x4, fixed_abs, tag = 'smem constant byte address 0x4 - core index']
  #allocation1 [shape = 'u32[144,128]{1,0:T(1,128)}', space=vmem, size = 0x12000, scoped, tag = 'internal scratch']
  #allocation2 [shape = 'f32[32,128]{1,0:T(8,128)}', space=vmem, size = 0x4000, scoped, tag = 'scratch operand']
  #allocation3 [shape = 'f32[32,128]{1,0:T(8,128)}', space=vmem, size = 0x4000, scoped, tag = 'scratch operand']
  %s0 = inlined_call_operand.vmem [shape: f32[2,3,384], index: 0, kind: input, shape index: {}]
  %s1 = inlined_call_operand.vmem [shape: f32[16,3], index: 1, kind: input, shape index: {}]
  %s2 = inlined_call_operand.vmem [shape: f32[16,1], index: 2, kind: input, shape index: {}]
  %s3 = inlined_call_operand.vmem [shape: f32[16,1], index: 3, kind: input, shape index: {}]
  %s4 = inlined_call_operand.vmem [shape: f32[32,16], index: 4, kind: input, shape index: {}]
  %s5 = inlined_call_operand.vmem [shape: f32[2,272,384], index: 5, kind: output, shape index: {0}]
  %s6 = inlined_call_operand.vmem [shape: f32[2,32,128], index: 6, kind: output, shape index: {1}]
  %s7 = inlined_call_operand.vmem [shape: f32[2,32,128], index: 7, kind: output, shape index: {2}]
  %8 = xla_tuple %s5, %s6, %s7
  %s9 = sld [smem:[#allocation0]]
  $region77: #{pointnet_encoder.5} parent=0
    _
  %s11 = ssub.s32 1, %s9
  %s12 = scalar_select 0, %s11, %s9
  loop: start=0, step=1, limit=4
  $region2: #{pointnet_encoder.5} parent=0 // loop_pre_header
    _
  $region3: #{pointnet_encoder.5} parent=0 // loop_header
    %s14 = sphi 0, %s18
    %p15 = scmp.ge.s32.totalorder %s14, 4
    %s21 = sphi 0, %s33
    %s22 = sphi 0, %s29
    %s23 = sphi 0, %s21
    %s24 = sphi 0, %s22
    %s25 = sphi 0, %s23
    %s26 = sphi 0, %s24
    %s38 = sphi 0, %s40
    %s41 = sphi 0, %s38
    %s42 = sphi 0, %s41
    %s58 = sphi 0, %s42
    %s62 = sphi 0, %s62
    %s64 = sphi 0, %s62
    %s65 = sphi 0, %s64
    %s79 = sphi 0, %s65
    %s83 = sphi 0, %s83
    %s85 = sphi 0, %s83
    %s86 = sphi 0, %s85
    %s100 = sphi 0, %s86
    %s104 = sphi 0, %s104
    %s106 = sphi 0, %s104
    %s107 = sphi 0, %s106
    %s121 = sphi 0, %s107
    %s125 = sphi 0, %s125
    %s127 = sphi 0, %s125
    %s128 = sphi 0, %s127
    %s142 = sphi 0, %s128
    %s150 = sphi 0, %s152
    %s153 = sphi 0, %s150
    %s154 = sphi 0, %s153
    %s170 = sphi 0, %s154
    %s176 = sphi 0, %s178
    %s179 = sphi 0, %s176
    %s180 = sphi 0, %s179
    %s196 = sphi 0, %s180
    %s202 = sphi 0, %s204
    %s205 = sphi 0, %s202
    %s206 = sphi 0, %s205
    %s222 = sphi 0, %s206
  $region4: #{pointnet_encoder.5} parent=0 // loop_header_branch
    %17 = sbr.rel (%p15) target = $region8
  $region5: #{pointnet_encoder.5} parent=0 // loop_body
    %s19 = ssub.s32 %s14, 1
    %s20 = ssub.s32 %s14, 2
    %s27 = sadd.s32 1, %s22
    %p28 = scmp.ge.s32.totalorder %s27, 1
    %s29 = scalar_select %p28, 0, %s27
    %s30 = sadd.s32 1, %s21
    %s31 = scalar_select %p28, %s30, %s21
    %p32 = scmp.ge.s32.totalorder %s31, 2
    %s33 = scalar_select %p32, 0, %s31
    %s34 = ssub.s32 %s21, %s33
    %s35 = ssub.s32 %s22, %s29
    %s36 = sor.u32 %s34, %s35
    %p37 = scmp.eq.s32.totalorder %s36, 0
    %s39 = sadd.s32 %s38, 1
    %s40 = scalar_select %p37, %s38, %s39
    %p43 = pneg %p37
    %p44 = scmp.eq.s32.totalorder %s14, 1
    %p45 = por %p43, %p44
    %p46 = scmp.ne.s32.totalorder %s38, %s41
    %p47 = scmp.eq.s32.totalorder %s14, 0
    %p48 = por %p46, %p47
    %p49 = scmp.ne.s32.totalorder %s38, %s41
    %p50 = scmp.eq.s32.totalorder %s19, 1
    %p51 = por %p49, %p50
    %p52 = scmp.ne.s32.totalorder %s41, %s42
    %p53 = scmp.eq.s32.totalorder %s19, 0
    %p54 = por %p52, %p53
    %p55 = scmp.ne.s32.totalorder %s41, %s42
    %p56 = scmp.eq.s32.totalorder %s20, 1
    %p57 = por %p55, %p56
    %p59 = scmp.ne.s32.totalorder %s42, %s58
    %p60 = scmp.eq.s32.totalorder %s20, 0
    %p61 = por %p59, %p60
    %s63 = sadd.s32 %s62, 1
    %p66 = scmp.eq.s32.totalorder %s14, 1
    %p67 = scmp.ne.s32.totalorder %s62, %s64
    %p68 = scmp.eq.s32.totalorder %s14, 0
    %p69 = por %p67, %p68
    %p70 = scmp.ne.s32.totalorder %s62, %s64
    %p71 = scmp.eq.s32.totalorder %s19, 1
    %p72 = por %p70, %p71
    %p73 = scmp.ne.s32.totalorder %s64, %s65
    %p74 = scmp.eq.s32.totalorder %s19, 0
    %p75 = por %p73, %p74
    %p76 = scmp.ne.s32.totalorder %s64, %s65
    %p77 = scmp.eq.s32.totalorder %s20, 1
    %p78 = por %p76, %p77
    %p80 = scmp.ne.s32.totalorder %s65, %s79
    %p81 = scmp.eq.s32.totalorder %s20, 0
    %p82 = por %p80, %p81
    %s84 = sadd.s32 %s83, 1
    %p87 = scmp.eq.s32.totalorder %s14, 1
    %p88 = scmp.ne.s32.totalorder %s83, %s85
    %p89 = scmp.eq.s32.totalorder %s14, 0
    %p90 = por %p88, %p89
    %p91 = scmp.ne.s32.totalorder %s83, %s85
    %p92 = scmp.eq.s32.totalorder %s19, 1
    %p93 = por %p91, %p92
    %p94 = scmp.ne.s32.totalorder %s85, %s86
    %p95 = scmp.eq.s32.totalorder %s19, 0
    %p96 = por %p94, %p95
    %p97 = scmp.ne.s32.totalorder %s85, %s86
    %p98 = scmp.eq.s32.totalorder %s20, 1
    %p99 = por %p97, %p98
    %p101 = scmp.ne.s32.totalorder %s86, %s100
    %p102 = scmp.eq.s32.totalorder %s20, 0
    %p103 = por %p101, %p102
    %s105 = sadd.s32 %s104, 1
    %p108 = scmp.eq.s32.totalorder %s14, 1
    %p109 = scmp.ne.s32.totalorder %s104, %s106
    %p110 = scmp.eq.s32.totalorder %s14, 0
    %p111 = por %p109, %p110
    %p112 = scmp.ne.s32.totalorder %s104, %s106
    %p113 = scmp.eq.s32.totalorder %s19, 1
    %p114 = por %p112, %p113
    %p115 = scmp.ne.s32.totalorder %s106, %s107
    %p116 = scmp.eq.s32.totalorder %s19, 0
    %p117 = por %p115, %p116
    %p118 = scmp.ne.s32.totalorder %s106, %s107
    %p119 = scmp.eq.s32.totalorder %s20, 1
    %p120 = por %p118, %p119
    %p122 = scmp.ne.s32.totalorder %s107, %s121
    %p123 = scmp.eq.s32.totalorder %s20, 0
    %p124 = por %p122, %p123
    %s126 = sadd.s32 %s125, 1
    %p129 = scmp.eq.s32.totalorder %s14, 1
    %p130 = scmp.ne.s32.totalorder %s125, %s127
    %p131 = scmp.eq.s32.totalorder %s14, 0
    %p132 = por %p130, %p131
    %p133 = scmp.ne.s32.totalorder %s125, %s127
    %p134 = scmp.eq.s32.totalorder %s19, 1
    %p135 = por %p133, %p134
    %p136 = scmp.ne.s32.totalorder %s127, %s128
    %p137 = scmp.eq.s32.totalorder %s19, 0
    %p138 = por %p136, %p137
    %p139 = scmp.ne.s32.totalorder %s127, %s128
    %p140 = scmp.eq.s32.totalorder %s20, 1
    %p141 = por %p139, %p140
    %p143 = scmp.ne.s32.totalorder %s128, %s142
    %p144 = scmp.eq.s32.totalorder %s20, 0
    %p145 = por %p143, %p144
    %s146 = ssub.s32 %s21, %s33
    %s147 = ssub.s32 %s22, %s29
    %s148 = sor.u32 %s146, %s147
    %p149 = scmp.eq.s32.totalorder %s148, 0
    %s151 = sadd.s32 %s150, 1
    %s152 = scalar_select %p149, %s150, %s151
    %p155 = pneg %p149
    %p156 = scmp.eq.s32.totalorder %s14, 1
    %p157 = por %p155, %p156
    %p158 = scmp.ne.s32.totalorder %s150, %s153
    %p159 = scmp.eq.s32.totalorder %s14, 0
    %p160 = por %p158, %p159
    %p161 = scmp.ne.s32.totalorder %s150, %s153
    %p162 = scmp.eq.s32.totalorder %s19, 1
    %p163 = por %p161, %p162
    %p164 = scmp.ne.s32.totalorder %s153, %s154
    %p165 = scmp.eq.s32.totalorder %s19, 0
    %p166 = por %p164, %p165
    %p167 = scmp.ne.s32.totalorder %s153, %s154
    %p168 = scmp.eq.s32.totalorder %s20, 1
    %p169 = por %p167, %p168
    %p171 = scmp.ne.s32.totalorder %s154, %s170
    %p172 = scmp.eq.s32.totalorder %s20, 0
    %p173 = por %p171, %p172
    %s174 = ssub.s32 %s21, %s33
    %p175 = scmp.eq.s32.totalorder %s174, 0
    %s177 = sadd.s32 %s176, 1
    %s178 = scalar_select %p175, %s176, %s177
    %p181 = pneg %p175
    %p182 = scmp.eq.s32.totalorder %s14, 1
    %p183 = por %p181, %p182
    %p184 = scmp.ne.s32.totalorder %s176, %s179
    %p185 = scmp.eq.s32.totalorder %s14, 0
    %p186 = por %p184, %p185
    %p187 = scmp.ne.s32.totalorder %s176, %s179
    %p188 = scmp.eq.s32.totalorder %s19, 1
    %p189 = por %p187, %p188
    %p190 = scmp.ne.s32.totalorder %s179, %s180
    %p191 = scmp.eq.s32.totalorder %s19, 0
    %p192 = por %p190, %p191
    %p193 = scmp.ne.s32.totalorder %s179, %s180
    %p194 = scmp.eq.s32.totalorder %s20, 1
    %p195 = por %p193, %p194
    %p197 = scmp.ne.s32.totalorder %s180, %s196
    %p198 = scmp.eq.s32.totalorder %s20, 0
    %p199 = por %p197, %p198
    %s200 = ssub.s32 %s21, %s33
    %p201 = scmp.eq.s32.totalorder %s200, 0
    %s203 = sadd.s32 %s202, 1
    %s204 = scalar_select %p201, %s202, %s203
    %p207 = pneg %p201
    %p208 = scmp.eq.s32.totalorder %s14, 1
    %p209 = por %p207, %p208
    %p210 = scmp.ne.s32.totalorder %s202, %s205
    %p211 = scmp.eq.s32.totalorder %s14, 0
    %p212 = por %p210, %p211
    %p213 = scmp.ne.s32.totalorder %s202, %s205
    %p214 = scmp.eq.s32.totalorder %s19, 1
    %p215 = por %p213, %p214
    %p216 = scmp.ne.s32.totalorder %s205, %s206
    %p217 = scmp.eq.s32.totalorder %s19, 0
    %p218 = por %p216, %p217
    %p219 = scmp.ne.s32.totalorder %s205, %s206
    %p220 = scmp.eq.s32.totalorder %s20, 1
    %p221 = por %p219, %p220
    %p223 = scmp.ne.s32.totalorder %s206, %s222
    %p224 = scmp.eq.s32.totalorder %s20, 0
    %p225 = por %p223, %p224
    %p226 = scmp.le.s32.totalorder 1, %s14
    %p227 = scmp.lt.s32.totalorder %s14, 3
    %p228 = pnand %p226, %p227
    %p229 = pneg %p228
    // Predicated region
    $region9: #{pointnet_encoder.5} parent=5 // pred_check
      _
    $region10: #{pointnet_encoder.5} parent=5 // pred_check_branch
      %231 = sbr.rel (%p228) target = $region12
    $region11: #{pointnet_encoder.5} parent=5 // pred_region
      %s232 = ssub.s32 %s14, 1
      // Predicated region
      $region13: #{pointnet_encoder.5} parent=11 // pred_check
        %p233 = pneg %p75
      $region14: #{pointnet_encoder.5} parent=11 // pred_check_branch
        %235 = sbr.rel (%p233) target = $region16
      $region15: #{pointnet_encoder.5} parent=11 // pred_region
        _
      $region16: #{pointnet_encoder.5} parent=11 // pred_fallthru
        _
      // Predicated region
      $region17: #{pointnet_encoder.5} parent=11 // pred_check
        %p236 = pneg %p96
      $region18: #{pointnet_encoder.5} parent=11 // pred_check_branch
        %238 = sbr.rel (%p236) target = $region20
      $region19: #{pointnet_encoder.5} parent=11 // pred_region
        _
      $region20: #{pointnet_encoder.5} parent=11 // pred_fallthru
        _
      // Predicated region
      $region21: #{pointnet_encoder.5} parent=11 // pred_check
        %p239 = pneg %p117
      $region22: #{pointnet_encoder.5} parent=11 // pred_check_branch
        %241 = sbr.rel (%p239) target = $region24
      $region23: #{pointnet_encoder.5} parent=11 // pred_region
        _
      $region24: #{pointnet_encoder.5} parent=11 // pred_fallthru
        _
      // Predicated region
      $region25: #{pointnet_encoder.5} parent=11 // pred_check
        %p242 = pneg %p138
      $region26: #{pointnet_encoder.5} parent=11 // pred_check_branch
        %244 = sbr.rel (%p242) target = $region28
      $region27: #{pointnet_encoder.5} parent=11 // pred_region
        _
      $region28: #{pointnet_encoder.5} parent=11 // pred_fallthru
        _
    $region12: #{pointnet_encoder.5} parent=5 // pred_fallthru
      _
    %p245 = scmp.lt.s32.totalorder %s14, 2
    // Predicated region
    $region29: #{pointnet_encoder.5} parent=5 // pred_check
      %p246 = pneg %p245
    $region30: #{pointnet_encoder.5} parent=5 // pred_check_branch
      %248 = sbr.rel (%p246) target = $region32
    $region31: #{pointnet_encoder.5} parent=5 // pred_region
      // Predicated region
      $region33: #{pointnet_encoder.5} parent=31 // pred_check
        %p249 = pneg %p48
      $region34: #{pointnet_encoder.5} parent=31 // pred_check_branch
        %251 = sbr.rel (%p249) target = $region36
      $region35: #{pointnet_encoder.5} parent=31 // pred_region
        %s252 = smul.u32 3, %s22
        %p253 = scmp.lt.s32.totalorder %s21, 1
        %s254 = scalar_select %p253, %s21, 1
        %p255 = scmp.lt.s32.totalorder %s252, 2
        %s256 = scalar_select %p255, %s252, 2
        %s257 = smul.addr %s254, 3
        %s258 = sadd.s32 %s256, %s257
        %s259 = smul.addr %s258, 4
        %s260 = scalar_lea.vmem %s0, %s259
        %s261 = smul.u32 3, %s22
      $region36: #{pointnet_encoder.5} parent=31 // pred_fallthru
        _
    $region32: #{pointnet_encoder.5} parent=5 // pred_fallthru
      _
    %p262 = scmp.le.s32.totalorder 1, %s14
    %p263 = scmp.lt.s32.totalorder %s14, 3
    %p264 = pnand %p262, %p263
    %p265 = pneg %p264
    // Predicated region
    $region37: #{pointnet_encoder.5} parent=5 // pred_check
      _
    $region38: #{pointnet_encoder.5} parent=5 // pred_check_branch
      %267 = sbr.rel (%p264) target = $region40
    $region39: #{pointnet_encoder.5} parent=5 // pred_region
      %s268 = ssub.s32 %s14, 1
      %s269 = smul.u32 3, %s24
      %p270 = scmp.lt.s32.totalorder %s23, 1
      %s271 = scalar_select %p270, %s23, 1
      %p272 = scmp.lt.s32.totalorder %s269, 2
      %s273 = scalar_select %p272, %s269, 2
      %s274 = smul.addr %s271, 3
      %s275 = sadd.s32 %s273, %s274
      %s276 = smul.addr %s275, 4
      %s277 = scalar_lea.vmem %s0, %s276
      %p278 = pneg %p54
      %p279 = pneg %p51
      %p280 = pneg %p75
      %p281 = pneg %p72
      %p282 = pneg %p96
      %p283 = pneg %p93
      %p284 = pneg %p117
      %p285 = pneg %p114
      %p286 = pneg %p138
      %p287 = pneg %p135
      %p288 = pneg %p166
      %p289 = pneg %p163
      %s290 = smul.u32 3, %s24
      %p291 = scmp.lt.s32.totalorder %s23, 1
      %s292 = scalar_select %p291, %s23, 1
      %p293 = scmp.lt.s32.totalorder %s290, 2
      %s294 = scalar_select %p293, %s290, 2
      %s295 = sadd.s32 %s294, 96
      %s296 = smul.addr %s292, 102
      %s297 = sadd.s32 %s295, %s296
      %s298 = smul.addr %s297, 8
      %s299 = scalar_lea.vmem %s5, %s298
      %p300 = pneg %p192
      %p301 = pneg %p189
      %p302 = scmp.lt.s32.totalorder %s23, 1
      %s303 = scalar_select %p302, %s23, 1
      %s304 = smul.addr %s303, 4
      %s305 = smul.addr %s304, 8
      %s306 = scalar_lea.vmem %s6, %s305
      %p307 = pneg %p218
      %p308 = pneg %p215
      %p309 = scmp.lt.s32.totalorder %s23, 1
      %s310 = scalar_select %p309, %s23, 1
      %s311 = smul.addr %s310, 4
      %s312 = smul.addr %s311, 8
      %s313 = scalar_lea.vmem %s7, %s312
      %s314 = smul.u32 3, %s24
      %p315 = scmp.lt.s32.totalorder %s23, 1
      %s316 = scalar_select %p315, %s23, 1
      %p317 = scmp.lt.s32.totalorder %s314, 2
      %s318 = scalar_select %p317, %s314, 2
      %s319 = smul.addr %s316, 3
      %s320 = sadd.s32 %s318, %s319
      %s321 = smul.addr %s320, 4
      %s322 = scalar_lea.vmem %s0, %s321
      %s323 = smul.u32 3, %s24
      %s324 = smul.u32 3, %s24
      %p325 = scmp.lt.s32.totalorder %s23, 1
      %s326 = scalar_select %p325, %s23, 1
      %p327 = scmp.lt.s32.totalorder %s324, 2
      %s328 = scalar_select %p327, %s324, 2
      %s329 = sadd.s32 %s328, 96
      %s330 = smul.addr %s326, 102
      %s331 = sadd.s32 %s329, %s330
      %s332 = smul.addr %s331, 8
      %s333 = scalar_lea.vmem %s5, %s332
      %s334 = smul.u32 3, %s24
      %p335 = scmp.lt.s32.totalorder %s23, 1
      %s336 = scalar_select %p335, %s23, 1
      %s337 = smul.addr %s336, 4
      %s338 = smul.addr %s337, 8
      %s339 = scalar_lea.vmem %s6, %s338
      %p340 = scmp.lt.s32.totalorder %s23, 1
      %s341 = scalar_select %p340, %s23, 1
      %s342 = smul.addr %s341, 4
      %s343 = smul.addr %s342, 8
      %s344 = scalar_lea.vmem %s7, %s343
      %v345 = vld [vmem:[%s322] sm:$0x77]
      %v346 = vld [vmem:[%s322 + $0x8] sm:$0x7]
      %v347 = vld [vmem:[%s1] sm:$0xff]
      %v348 = vld [vmem:[%s1 + $0x8] sm:$0xff]
      %350 = vset.pattern.permute.xlu0 0
      %351 = vperm.xlu0 %350, %v347
      %v352 = vpop.permute.xlu0 %351
      %355 = vset.pattern.permute.xlu0 0
      %356 = vperm.xlu0 %355, %v348
      %v357 = vpop.permute.xlu0 %356
      %v361 = vlaneseq
      %v362 = vshrl.u32 %v361, 7
      %v363 = vsub.s32 0, %v362
      %v364 = vrot.slane %v345, %v363
      %v365 = vlaneseq
      %v366 = vshrl.u32 %v365, 7
      %v367 = vsub.s32 4, %v366
      %v368 = vrot.slane %v345, %v367
      %v369 = vlaneseq
      %v370 = vshrl.u32 %v369, 7
      %v371 = vsub.s32 0, %v370
      %v372 = vrot.slane %v346, %v371
      %v376 = vlaneseq
      %v377 = vshrl.u32 %v376, 7
      %v378 = vsub.s32 0, %v377
      %v379 = vrot.slane %v364, %v378
      %v380 = vlaneseq
      %v381 = vshrl.u32 %v380, 7
      %v382 = vsub.s32 0, %v381
      %v383 = vrot.slane %v368, %v382
      %v384 = vlaneseq
      %v385 = vshrl.u32 %v384, 7
      %v386 = vsub.s32 0, %v385
      %v387 = vrot.slane %v372, %v386
      %v388 = vmul.f32 %v352, %v379
      %v389 = vmul.f32 %v352, %v383
      %v390 = vmul.f32 %v352, %v387
      %v391 = vmul.f32 %v357, %v379
      %v392 = vmul.f32 %v357, %v383
      %v393 = vmul.f32 %v357, %v387
      %394 = vset.pattern.permute.xlu0 1
      %395 = vperm.xlu0 %394, %v347
      %v396 = vpop.permute.xlu0 %395
      %398 = vset.pattern.permute.xlu0 1
      %399 = vperm.xlu0 %398, %v348
      %v400 = vpop.permute.xlu0 %399
      %v402 = vlaneseq
      %v403 = vshrl.u32 %v402, 7
      %v404 = vsub.s32 1, %v403
      %v405 = vrot.slane %v345, %v404
      %v406 = vlaneseq
      %v407 = vshrl.u32 %v406, 7
      %v408 = vsub.s32 5, %v407
      %v409 = vrot.slane %v345, %v408
      %v410 = vlaneseq
      %v411 = vshrl.u32 %v410, 7
      %v412 = vsub.s32 1, %v411
      %v413 = vrot.slane %v346, %v412
      %v417 = vlaneseq
      %v418 = vshrl.u32 %v417, 7
      %v419 = vsub.s32 1, %v418
      %v420 = vrot.slane %v405, %v419
      %v421 = vlaneseq
      %v422 = vshrl.u32 %v421, 7
      %v423 = vsub.s32 1, %v422
      %v424 = vrot.slane %v409, %v423
      %v425 = vlaneseq
      %v426 = vshrl.u32 %v425, 7
      %v427 = vsub.s32 1, %v426
      %v428 = vrot.slane %v413, %v427
      %v429 = vmul.f32 %v396, %v420
      %v430 = vmul.f32 %v396, %v424
      %v431 = vmul.f32 %v396, %v428
      %v432 = vmul.f32 %v400, %v420
      %v433 = vmul.f32 %v400, %v424
      %v434 = vmul.f32 %v400, %v428
      %v435 = vadd.f32 %v388, %v429
      %v436 = vadd.f32 %v389, %v430
      %v437 = vadd.f32 %v390, %v431
      %v438 = vadd.f32 %v391, %v432
      %v439 = vadd.f32 %v392, %v433
      %v440 = vadd.f32 %v393, %v434
      %441 = vset.pattern.permute.xlu0 2
      %442 = vperm.xlu0 %441, %v347
      %v443 = vpop.permute.xlu0 %442
      %445 = vset.pattern.permute.xlu0 2
      %446 = vperm.xlu0 %445, %v348
      %v447 = vpop.permute.xlu0 %446
      %v449 = vlaneseq
      %v450 = vshrl.u32 %v449, 7
      %v451 = vsub.s32 2, %v450
      %v452 = vrot.slane %v345, %v451
      %v453 = vlaneseq
      %v454 = vshrl.u32 %v453, 7
      %v455 = vsub.s32 6, %v454
      %v456 = vrot.slane %v345, %v455
      %v457 = vlaneseq
      %v458 = vshrl.u32 %v457, 7
      %v459 = vsub.s32 2, %v458
      %v460 = vrot.slane %v346, %v459
      %v464 = vlaneseq
      %v465 = vshrl.u32 %v464, 7
      %v466 = vsub.s32 2, %v465
      %v467 = vrot.slane %v452, %v466
      %v468 = vlaneseq
      %v469 = vshrl.u32 %v468, 7
      %v470 = vsub.s32 2, %v469
      %v471 = vrot.slane %v456, %v470
      %v472 = vlaneseq
      %v473 = vshrl.u32 %v472, 7
      %v474 = vsub.s32 2, %v473
      %v475 = vrot.slane %v460, %v474
      %v476 = vmul.f32 %v443, %v467
      %v477 = vmul.f32 %v443, %v471
      %v478 = vmul.f32 %v443, %v475
      %v479 = vmul.f32 %v447, %v467
      %v480 = vmul.f32 %v447, %v471
      %v481 = vmul.f32 %v447, %v475
      %v482 = vadd.f32 %v435, %v476
      %v483 = vadd.f32 %v436, %v477
      %v484 = vadd.f32 %v437, %v478
      %v485 = vadd.f32 %v438, %v479
      %v486 = vadd.f32 %v439, %v480
      %v487 = vadd.f32 %v440, %v481
      %v488 = vld [vmem:[%s2] sm:$0xff]
      %v489 = vld [vmem:[%s2 + $0x8] sm:$0xff]
      %491 = vset.pattern.permute.xlu0 0
      %492 = vperm.xlu0 %491, %v488
      %v493 = vpop.permute.xlu0 %492
      %496 = vset.pattern.permute.xlu0 0
      %497 = vperm.xlu0 %496, %v489
      %v498 = vpop.permute.xlu0 %497
      %v500 = vmul.f32 %v482, %v493
      %v501 = vmul.f32 %v483, %v493
      %v502 = vmul.f32 %v484, %v493
      %v503 = vmul.f32 %v485, %v498
      %v504 = vmul.f32 %v486, %v498
      %v505 = vmul.f32 %v487, %v498
      %v506 = vld [vmem:[%s3] sm:$0xff]
      %v507 = vld [vmem:[%s3 + $0x8] sm:$0xff]
      %509 = vset.pattern.permute.xlu0 0
      %510 = vperm.xlu0 %509, %v506
      %v511 = vpop.permute.xlu0 %510
      %514 = vset.pattern.permute.xlu0 0
      %515 = vperm.xlu0 %514, %v507
      %v516 = vpop.permute.xlu0 %515
      %v518 = vadd.f32 %v500, %v511
      %v519 = vadd.f32 %v501, %v511
      %v520 = vadd.f32 %v502, %v511
      %v521 = vadd.f32 %v503, %v516
      %v522 = vadd.f32 %v504, %v516
      %v523 = vadd.f32 %v505, %v516
      %v524 = vtanh.pop %v518
      %v525 = vtanh.pop %v519
      %v526 = vtanh.pop %v520
      %v527 = vtanh.pop %v521
      %v528 = vtanh.pop %v522
      %v529 = vtanh.pop %v523
      %530 = vst [vmem:[%s333] sm:$0xff] %v524
      %531 = vst [vmem:[%s333 + $0x8] sm:$0xff] %v525
      %532 = vst [vmem:[%s333 + $0x10] sm:$0xff] %v526
      %533 = vst [vmem:[%s333 + $0x18] sm:$0xff] %v527
      %534 = vst [vmem:[%s333 + $0x20] sm:$0xff] %v528
      %535 = vst [vmem:[%s333 + $0x28] sm:$0xff] %v529
      %v536 = vld [vmem:[%s4] sm:$0xff]
      %v537 = vld [vmem:[%s4 + $0x8] sm:$0xff]
      %v538 = vld [vmem:[%s4 + $0x10] sm:$0xff]
      %v539 = vld [vmem:[%s4 + $0x18] sm:$0xff]
      %vm540 = vcmask 130048
      %v542 = vsel %vm540, %v536, 0
      %v545 = vsel %vm540, %v537, 0
      %v548 = vsel %vm540, %v538, 0
      %v551 = vsel %vm540, %v539, 0
      %553 = vmatprep.subr.mxu0 0.0
      %554 = vmatpush1.msra.mxu0 0.0
      %555 = vmatprep.subr.mxu0 0.0
      %556 = vmatpush1.msra.mxu0 0.0
      %557 = vmatprep.subr.mxu0 0.0
      %558 = vmatpush1.msra.mxu0 0.0
      %559 = vmatprep.subr.mxu0 0.0
      %560 = vmatpush1.msra.mxu0 0.0
      %561 = vmatprep.subr.mxu0 0.0
      %562 = vmatpush1.msra.mxu0 0.0
      %563 = vmatprep.subr.mxu0 0.0
      %564 = vmatpush1.msra.mxu0 0.0
      %565 = vmatprep.subr.mxu0 0.0
      %566 = vmatpush1.msra.mxu0 0.0
      %567 = vmatprep.subr.mxu0 0.0
      %568 = vmatpush1.msra.mxu0 0.0
      %569 = vmatprep.subr.mxu0 0.0
      %570 = vmatpush1.msra.mxu0 0.0
      %571 = vmatprep.subr.mxu0 0.0
      %572 = vmatpush1.msra.mxu0 0.0
      %573 = vmatprep.subr.mxu0 0.0
      %574 = vmatpush1.msra.mxu0 0.0
      %575 = vmatprep.subr.mxu0 0.0
      %576 = vmatpush1.msra.mxu0 0.0
      %577 = vmatprep.subr.mxu0 0.0
      %578 = vmatpush1.msra.mxu0 0.0
      %579 = vmatprep.subr.mxu0 0.0
      %580 = vmatpush1.msra.mxu0 0.0
      %581 = vmatprep.subr.mxu0 %v528
      %582 = vmatpush1.msra.mxu0 %v527
      %583 = vmatprep.subr.mxu0 %v525
      %584 = vmatpush1.msra.mxu0 %v524
      %585 = vmatprep.subr.mxu0 0.0
      %586 = vmatpush2.msra.mxu0 0.0
      %587 = vmatprep.subr.mxu0 0.0
      %588 = vmatpush2.msra.mxu0 0.0
      %589 = vmatprep.subr.mxu0 0.0
      %590 = vmatpush2.msra.mxu0 0.0
      %591 = vmatprep.subr.mxu0 0.0
      %592 = vmatpush2.msra.mxu0 0.0
      %593 = vmatprep.subr.mxu0 0.0
      %594 = vmatpush2.msra.mxu0 0.0
      %595 = vmatprep.subr.mxu0 0.0
      %596 = vmatpush2.msra.mxu0 0.0
      %597 = vmatprep.subr.mxu0 0.0
      %598 = vmatpush2.msra.mxu0 0.0
      %599 = vmatprep.subr.mxu0 0.0
      %600 = vmatpush2.msra.mxu0 0.0
      %601 = vmatprep.subr.mxu0 0.0
      %602 = vmatpush2.msra.mxu0 0.0
      %603 = vmatprep.subr.mxu0 0.0
      %604 = vmatpush2.msra.mxu0 0.0
      %605 = vmatprep.subr.mxu0 0.0
      %606 = vmatpush2.msra.mxu0 0.0
      %607 = vmatprep.subr.mxu0 0.0
      %608 = vmatpush2.msra.mxu0 0.0
      %609 = vmatprep.subr.mxu0 0.0
      %610 = vmatpush2.msra.mxu0 0.0
      %611 = vmatprep.subr.mxu0 0.0
      %612 = vmatpush2.msra.mxu0 0.0
      %613 = vmatprep.subr.mxu0 0.0
      %614 = vmatpush2.msra.mxu0 0.0
      %615 = vmatprep.subr.mxu0 0.0
      %616 = vmatpush2.msra.mxu0 0.0
      %617 = vmatprep.mubr.f32.mxu0 0.0
      %618 = vmatmul.mubr.f32.gmra.mxu0 %v542
      %v619 = vpop.f32.mrf.mxu0
      %v620 = vadd.f32 0.0, %v619
      %v621 = vpop.f32.mrf.mxu0
      %v622 = vadd.f32 0.0, %v621
      %623 = vmatprep.mubr.f32.mxu0 0.0
      %624 = vmatmul.mubr.f32.gmra.mxu0 %v545
      %v625 = vpop.f32.mrf.mxu0
      %v626 = vadd.f32 0.0, %v625
      %v627 = vpop.f32.mrf.mxu0
      %v628 = vadd.f32 0.0, %v627
      %629 = vmatprep.mubr.f32.mxu0 0.0
      %630 = vmatmul.mubr.f32.gmra.mxu0 %v548
      %v631 = vpop.f32.mrf.mxu0
      %v632 = vadd.f32 0.0, %v631
      %v633 = vpop.f32.mrf.mxu0
      %v634 = vadd.f32 0.0, %v633
      %635 = vmatprep.mubr.f32.mxu0 0.0
      %636 = vmatmul.mubr.f32.gmra.mxu0 %v551
      %v637 = vpop.f32.mrf.mxu0
      %v638 = vadd.f32 0.0, %v637
      %v639 = vpop.f32.mrf.mxu0
      %v640 = vadd.f32 0.0, %v639
      %641 = vdwg.mxu0
      %642 = vmatprep.subr.mxu0 0.0
      %643 = vmatpush1.msra.mxu0 0.0
      %644 = vmatprep.subr.mxu0 0.0
      %645 = vmatpush1.msra.mxu0 0.0
      %646 = vmatprep.subr.mxu0 0.0
      %647 = vmatpush1.msra.mxu0 0.0
      %648 = vmatprep.subr.mxu0 0.0
      %649 = vmatpush1.msra.mxu0 0.0
      %650 = vmatprep.subr.mxu0 0.0
      %651 = vmatpush1.msra.mxu0 0.0
      %652 = vmatprep.subr.mxu0 0.0
      %653 = vmatpush1.msra.mxu0 0.0
      %654 = vmatprep.subr.mxu0 0.0
      %655 = vmatpush1.msra.mxu0 0.0
      %656 = vmatprep.subr.mxu0 0.0
      %657 = vmatpush1.msra.mxu0 0.0
      %658 = vmatprep.subr.mxu0 0.0
      %659 = vmatpush1.msra.mxu0 0.0
      %660 = vmatprep.subr.mxu0 0.0
      %661 = vmatpush1.msra.mxu0 0.0
      %662 = vmatprep.subr.mxu0 0.0
      %663 = vmatpush1.msra.mxu0 0.0
      %664 = vmatprep.subr.mxu0 0.0
      %665 = vmatpush1.msra.mxu0 0.0
      %666 = vmatprep.subr.mxu0 0.0
      %667 = vmatpush1.msra.mxu0 0.0
      %668 = vmatprep.subr.mxu0 0.0
      %669 = vmatpush1.msra.mxu0 0.0
      %670 = vmatprep.subr.mxu0 0.0
      %671 = vmatpush1.msra.mxu0 %v529
      %672 = vmatprep.subr.mxu0 0.0
      %673 = vmatpush1.msra.mxu0 %v526
      %674 = vmatprep.subr.mxu0 0.0
      %675 = vmatpush2.msra.mxu0 0.0
      %676 = vmatprep.subr.mxu0 0.0
      %677 = vmatpush2.msra.mxu0 0.0
      %678 = vmatprep.subr.mxu0 0.0
      %679 = vmatpush2.msra.mxu0 0.0
      %680 = vmatprep.subr.mxu0 0.0
      %681 = vmatpush2.msra.mxu0 0.0
      %682 = vmatprep.subr.mxu0 0.0
      %683 = vmatpush2.msra.mxu0 0.0
      %684 = vmatprep.subr.mxu0 0.0
      %685 = vmatpush2.msra.mxu0 0.0
      %686 = vmatprep.subr.mxu0 0.0
      %687 = vmatpush2.msra.mxu0 0.0
      %688 = vmatprep.subr.mxu0 0.0
      %689 = vmatpush2.msra.mxu0 0.0
      %690 = vmatprep.subr.mxu0 0.0
      %691 = vmatpush2.msra.mxu0 0.0
      %692 = vmatprep.subr.mxu0 0.0
      %693 = vmatpush2.msra.mxu0 0.0
      %694 = vmatprep.subr.mxu0 0.0
      %695 = vmatpush2.msra.mxu0 0.0
      %696 = vmatprep.subr.mxu0 0.0
      %697 = vmatpush2.msra.mxu0 0.0
      %698 = vmatprep.subr.mxu0 0.0
      %699 = vmatpush2.msra.mxu0 0.0
      %700 = vmatprep.subr.mxu0 0.0
      %701 = vmatpush2.msra.mxu0 0.0
      %702 = vmatprep.subr.mxu0 0.0
      %703 = vmatpush2.msra.mxu0 0.0
      %704 = vmatprep.subr.mxu0 0.0
      %705 = vmatpush2.msra.mxu0 0.0
      %706 = vmatprep.mubr.f32.mxu0 0.0
      %707 = vmatmul.mubr.f32.gmra.mxu0 %v542
      %v708 = vpop.f32.mrf.mxu0
      %v709 = vadd.f32 0.0, %v708
      %v710 = vpop.f32.mrf.mxu0
      %711 = vmatprep.mubr.f32.mxu0 0.0
      %712 = vmatmul.mubr.f32.gmra.mxu0 %v545
      %v713 = vpop.f32.mrf.mxu0
      %v714 = vadd.f32 0.0, %v713
      %v715 = vpop.f32.mrf.mxu0
      %716 = vmatprep.mubr.f32.mxu0 0.0
      %717 = vmatmul.mubr.f32.gmra.mxu0 %v548
      %v718 = vpop.f32.mrf.mxu0
      %v719 = vadd.f32 0.0, %v718
      %v720 = vpop.f32.mrf.mxu0
      %721 = vmatprep.mubr.f32.mxu0 0.0
      %722 = vmatmul.mubr.f32.gmra.mxu0 %v551
      %v723 = vpop.f32.mrf.mxu0
      %v724 = vadd.f32 0.0, %v723
      %v725 = vpop.f32.mrf.mxu0
      %726 = vdwg.mxu0
      %v727 = vmul.f32 %v620, %v620
      %v728 = vmul.f32 %v626, %v626
      %v729 = vmul.f32 %v632, %v632
      %v730 = vmul.f32 %v638, %v638
      %v731 = vadd.f32 %v620, %v622
      %v732 = vadd.f32 %v626, %v628
      %v733 = vadd.f32 %v632, %v634
      %v734 = vadd.f32 %v638, %v640
      %v735 = vmul.f32 %v622, %v622
      %v736 = vmul.f32 %v628, %v628
      %v737 = vmul.f32 %v634, %v634
      %v738 = vmul.f32 %v640, %v640
      %v739 = vadd.f32 %v727, %v735
      %v740 = vadd.f32 %v728, %v736
      %v741 = vadd.f32 %v729, %v737
      %v742 = vadd.f32 %v730, %v738
      %v743 = vadd.f32 %v731, %v709
      %v744 = vadd.f32 %v732, %v714
      %v745 = vadd.f32 %v733, %v719
      %v746 = vadd.f32 %v734, %v724
      %v747 = vmul.f32 %v709, %v709
      %v748 = vmul.f32 %v714, %v714
      %v749 = vmul.f32 %v719, %v719
      %v750 = vmul.f32 %v724, %v724
      %v751 = vadd.f32 %v739, %v747
      %v752 = vadd.f32 %v740, %v748
      %v753 = vadd.f32 %v741, %v749
      %v754 = vadd.f32 %v742, %v750
      %p755 = scmp.eq.s32.totalorder %s24, 0
      // Predicated region
      $region41: #{pointnet_encoder.5} parent=39 // pred_check
        %p756 = pneg %p755
      $region42: #{pointnet_encoder.5} parent=39 // pred_check_branch
        %758 = sbr.rel (%p756) target = $region44
      $region43: #{pointnet_encoder.5} parent=39 // pred_region
        %759 = vst [vmem:[#allocation2] sm:$0xff] 0.0
        %760 = vst [vmem:[#allocation2 + $0x8] sm:$0xff] 0.0
        %761 = vst [vmem:[#allocation2 + $0x10] sm:$0xff] 0.0
        %762 = vst [vmem:[#allocation2 + $0x18] sm:$0xff] 0.0
        %763 = vst [vmem:[#allocation3] sm:$0xff] 0.0
        %764 = vst [vmem:[#allocation3 + $0x8] sm:$0xff] 0.0
        %765 = vst [vmem:[#allocation3 + $0x10] sm:$0xff] 0.0
        %766 = vst [vmem:[#allocation3 + $0x18] sm:$0xff] 0.0
      $region44: #{pointnet_encoder.5} parent=39 // pred_fallthru
        _
      %v767 = vld [vmem:[#allocation2] sm:$0xff]
      %v768 = vld [vmem:[#allocation2 + $0x8] sm:$0xff]
      %v769 = vld [vmem:[#allocation2 + $0x10] sm:$0xff]
      %v770 = vld [vmem:[#allocation2 + $0x18] sm:$0xff]
      %v771 = vadd.f32 %v767, %v743
      %v772 = vadd.f32 %v768, %v744
      %v773 = vadd.f32 %v769, %v745
      %v774 = vadd.f32 %v770, %v746
      %775 = vst [vmem:[#allocation2] sm:$0xff] %v771
      %776 = vst [vmem:[#allocation2 + $0x8] sm:$0xff] %v772
      %777 = vst [vmem:[#allocation2 + $0x10] sm:$0xff] %v773
      %778 = vst [vmem:[#allocation2 + $0x18] sm:$0xff] %v774
      %v779 = vld [vmem:[#allocation3] sm:$0xff]
      %v780 = vld [vmem:[#allocation3 + $0x8] sm:$0xff]
      %v781 = vld [vmem:[#allocation3 + $0x10] sm:$0xff]
      %v782 = vld [vmem:[#allocation3 + $0x18] sm:$0xff]
      %v783 = vadd.f32 %v779, %v751
      %v784 = vadd.f32 %v780, %v752
      %v785 = vadd.f32 %v781, %v753
      %v786 = vadd.f32 %v782, %v754
      %787 = vst [vmem:[#allocation3] sm:$0xff] %v783
      %788 = vst [vmem:[#allocation3 + $0x8] sm:$0xff] %v784
      %789 = vst [vmem:[#allocation3 + $0x10] sm:$0xff] %v785
      %790 = vst [vmem:[#allocation3 + $0x18] sm:$0xff] %v786
      // Predicated region
      $region45: #{pointnet_encoder.5} parent=39 // pred_check
        %p791 = pneg %p755
      $region46: #{pointnet_encoder.5} parent=39 // pred_check_branch
        %793 = sbr.rel (%p791) target = $region48
      $region47: #{pointnet_encoder.5} parent=39 // pred_region
        %v794 = vld [vmem:[#allocation2] sm:$0xff]
        %v795 = vld [vmem:[#allocation2 + $0x8] sm:$0xff]
        %v796 = vld [vmem:[#allocation2 + $0x10] sm:$0xff]
        %v797 = vld [vmem:[#allocation2 + $0x18] sm:$0xff]
        %798 = vst [vmem:[%s339] sm:$0xff] %v794
        %799 = vst [vmem:[%s339 + $0x8] sm:$0xff] %v795
        %800 = vst [vmem:[%s339 + $0x10] sm:$0xff] %v796
        %801 = vst [vmem:[%s339 + $0x18] sm:$0xff] %v797
        %v802 = vld [vmem:[#allocation3] sm:$0xff]
        %v803 = vld [vmem:[#allocation3 + $0x8] sm:$0xff]
        %v804 = vld [vmem:[#allocation3 + $0x10] sm:$0xff]
        %v805 = vld [vmem:[#allocation3 + $0x18] sm:$0xff]
        %806 = vst [vmem:[%s344] sm:$0xff] %v802
        %807 = vst [vmem:[%s344 + $0x8] sm:$0xff] %v803
        %808 = vst [vmem:[%s344 + $0x10] sm:$0xff] %v804
        %809 = vst [vmem:[%s344 + $0x18] sm:$0xff] %v805
      $region48: #{pointnet_encoder.5} parent=39 // pred_fallthru
        _
      %s810 = smul.u32 3, %s24
      %p811 = scmp.lt.s32.totalorder %s23, 1
      %s812 = scalar_select %p811, %s23, 1
      %p813 = scmp.lt.s32.totalorder %s810, 2
      %s814 = scalar_select %p813, %s810, 2
      %s815 = sadd.s32 %s814, 96
      %s816 = smul.addr %s812, 102
      %s817 = sadd.s32 %s815, %s816
      %s818 = smul.addr %s817, 8
      %s819 = scalar_lea.vmem %s5, %s818
      %p820 = scmp.lt.s32.totalorder %s23, 1
      %s821 = scalar_select %p820, %s23, 1
      %s822 = smul.addr %s821, 4
      %s823 = smul.addr %s822, 8
      %s824 = scalar_lea.vmem %s6, %s823
      %p825 = scmp.lt.s32.totalorder %s23, 1
      %s826 = scalar_select %p825, %s23, 1
      %s827 = smul.addr %s826, 4
      %s828 = smul.addr %s827, 8
      %s829 = scalar_lea.vmem %s7, %s828
      // Predicated region
      $region49: #{pointnet_encoder.5} parent=39 // pred_check
        %p830 = pneg %p163
      $region50: #{pointnet_encoder.5} parent=39 // pred_check_branch
        %832 = sbr.rel (%p830) target = $region52
      $region51: #{pointnet_encoder.5} parent=39 // pred_region
        %s833 = smul.u32 3, %s24
      $region52: #{pointnet_encoder.5} parent=39 // pred_fallthru
        _
      // Predicated region
      $region53: #{pointnet_encoder.5} parent=39 // pred_check
        %p834 = pneg %p189
      $region54: #{pointnet_encoder.5} parent=39 // pred_check_branch
        %836 = sbr.rel (%p834) target = $region56
      $region55: #{pointnet_encoder.5} parent=39 // pred_region
        _
      $region56: #{pointnet_encoder.5} parent=39 // pred_fallthru
        _
      // Predicated region
      $region57: #{pointnet_encoder.5} parent=39 // pred_check
        %p837 = pneg %p215
      $region58: #{pointnet_encoder.5} parent=39 // pred_check_branch
        %839 = sbr.rel (%p837) target = $region60
      $region59: #{pointnet_encoder.5} parent=39 // pred_region
        _
      $region60: #{pointnet_encoder.5} parent=39 // pred_fallthru
        _
    $region40: #{pointnet_encoder.5} parent=5 // pred_fallthru
      _
    %p840 = scmp.le.s32.totalorder 2, %s14
    // Predicated region
    $region61: #{pointnet_encoder.5} parent=5 // pred_check
      %p841 = pneg %p840
    $region62: #{pointnet_encoder.5} parent=5 // pred_check_branch
      %843 = sbr.rel (%p841) target = $region64
    $region63: #{pointnet_encoder.5} parent=5 // pred_region
      %s844 = ssub.s32 %s14, 2
      // Predicated region
      $region65: #{pointnet_encoder.5} parent=63 // pred_check
        %p845 = pneg %p169
      $region66: #{pointnet_encoder.5} parent=63 // pred_check_branch
        %847 = sbr.rel (%p845) target = $region68
      $region67: #{pointnet_encoder.5} parent=63 // pred_region
        %s848 = smul.u32 3, %s26
        %p849 = scmp.lt.s32.totalorder %s25, 1
        %s850 = scalar_select %p849, %s25, 1
        %p851 = scmp.lt.s32.totalorder %s848, 2
        %s852 = scalar_select %p851, %s848, 2
        %s853 = sadd.s32 %s852, 96
        %s854 = smul.addr %s850, 102
        %s855 = sadd.s32 %s853, %s854
        %s856 = smul.addr %s855, 8
        %s857 = scalar_lea.vmem %s5, %s856
      $region68: #{pointnet_encoder.5} parent=63 // pred_fallthru
        _
      // Predicated region
      $region69: #{pointnet_encoder.5} parent=63 // pred_check
        %p858 = pneg %p195
      $region70: #{pointnet_encoder.5} parent=63 // pred_check_branch
        %860 = sbr.rel (%p858) target = $region72
      $region71: #{pointnet_encoder.5} parent=63 // pred_region
        %p861 = scmp.lt.s32.totalorder %s25, 1
        %s862 = scalar_select %p861, %s25, 1
        %s863 = smul.addr %s862, 4
        %s864 = smul.addr %s863, 8
        %s865 = scalar_lea.vmem %s6, %s864
      $region72: #{pointnet_encoder.5} parent=63 // pred_fallthru
        _
      // Predicated region
      $region73: #{pointnet_encoder.5} parent=63 // pred_check
        %p866 = pneg %p221
      $region74: #{pointnet_encoder.5} parent=63 // pred_check_branch
        %868 = sbr.rel (%p866) target = $region76
      $region75: #{pointnet_encoder.5} parent=63 // pred_region
        %p869 = scmp.lt.s32.totalorder %s25, 1
        %s870 = scalar_select %p869, %s25, 1
        %s871 = smul.addr %s870, 4
        %s872 = smul.addr %s871, 8
        %s873 = scalar_lea.vmem %s7, %s872
      $region76: #{pointnet_encoder.5} parent=63 // pred_fallthru
        _
    $region64: #{pointnet_encoder.5} parent=5 // pred_fallthru
      _
  $region6: #{pointnet_encoder.5} parent=0 // loop_footer
    %s18 = sadd.s32 1, %s14
  $region7: #{pointnet_encoder.5} parent=0 // loop_footer_branch
    %13 = sbr.rel target = $region3
  $region8: #{pointnet_encoder.5} parent=0 // loop_exit
    _

// kernel: pointnet_encoder.7
$region0: #{pointnet_encoder.7}
  #allocation0 [shape = 'u32[]', space=smem, size = 0x4, offset = 0x4, fixed_abs, tag = 'smem constant byte address 0x4 - core index']
  #allocation1 [shape = 'u32[144,128]{1,0:T(1,128)}', space=vmem, size = 0x12000, scoped, tag = 'internal scratch']
  %s0 = inlined_call_operand.vmem [shape: f32[2,256,1], index: 0, kind: input, shape index: {}]
  %s1 = inlined_call_operand.hbm [shape: f32[2,272,384], index: 1, kind: input, shape index: {}, may-alias: {1,2}]
  %s2 = inlined_call_operand.hbm [shape: f32[2,272,384], index: 2, kind: output, shape index: {}, may-alias: {1,2}]
  %s3 = sld [smem:[#allocation0]]
  $region37: #{pointnet_encoder.7} parent=0
    _
  %s5 = ssub.s32 1, %s3
  %s6 = scalar_select 0, %s5, %s3
  $region1: #{pointnet_encoder.7} parent=0
    #allocation2 [shape = 'u8[786432]{0}', space=vmem, size = 0xc0000, scoped, tag = 'output window, operand 0']
    #allocation3 [shape = 's32[2]{0}', space=sflag, size = 0x8, scoped, tag = 'scoped memory for pointnet_encoder.7']
    %7 = vsyncpa [#allocation3], 0
    %s8 = scalar_lea.sflag [#allocation3], 1
    %9 = vsyncpa %s8, 0
    loop: start=0, step=1, limit=4
    $region2: #{pointnet_encoder.7} parent=1 // loop_pre_header
      _
    $region3: #{pointnet_encoder.7} parent=1 // loop_header
      %s11 = sphi 0, %s15
      %p12 = scmp.ge.s32.totalorder %s11, 4
      %s18 = sphi 0, %s30
      %s19 = sphi 0, %s26
      %s20 = sphi 0, %s18
      %s21 = sphi 0, %s19
      %s22 = sphi 0, %s20
      %s23 = sphi 0, %s21
      %s33 = sphi 0, %s35
      %s36 = sphi 0, %s33
      %s37 = sphi 0, %s36
      %s53 = sphi 0, %s37
      %s61 = sphi 0, %s63
      %s64 = sphi 0, %s61
      %s65 = sphi 0, %s64
      %s81 = sphi 0, %s65
    $region4: #{pointnet_encoder.7} parent=1 // loop_header_branch
      %14 = sbr.rel (%p12) target = $region8
    $region5: #{pointnet_encoder.7} parent=1 // loop_body
      %s16 = ssub.s32 %s11, 1
      %s17 = ssub.s32 %s11, 2
      %s24 = sadd.s32 1, %s19
      %p25 = scmp.ge.s32.totalorder %s24, 1
      %s26 = scalar_select %p25, 0, %s24
      %s27 = sadd.s32 1, %s18
      %s28 = scalar_select %p25, %s27, %s18
      %p29 = scmp.ge.s32.totalorder %s28, 2
      %s30 = scalar_select %p29, 0, %s28
      %s31 = ssub.s32 %s18, %s30
      %p32 = scmp.eq.s32.totalorder %s31, 0
      %s34 = sadd.s32 %s33, 1
      %s35 = scalar_select %p32, %s33, %s34
      %p38 = pneg %p32
      %p39 = scmp.eq.s32.totalorder %s11, 1
      %p40 = por %p38, %p39
      %p41 = scmp.ne.s32.totalorder %s33, %s36
      %p42 = scmp.eq.s32.totalorder %s11, 0
      %p43 = por %p41, %p42
      %p44 = scmp.ne.s32.totalorder %s33, %s36
      %p45 = scmp.eq.s32.totalorder %s16, 1
      %p46 = por %p44, %p45
      %p47 = scmp.ne.s32.totalorder %s36, %s37
      %p48 = scmp.eq.s32.totalorder %s16, 0
      %p49 = por %p47, %p48
      %p50 = scmp.ne.s32.totalorder %s36, %s37
      %p51 = scmp.eq.s32.totalorder %s17, 1
      %p52 = por %p50, %p51
      %p54 = scmp.ne.s32.totalorder %s37, %s53
      %p55 = scmp.eq.s32.totalorder %s17, 0
      %p56 = por %p54, %p55
      %s57 = ssub.s32 %s18, %s30
      %s58 = ssub.s32 %s19, %s26
      %s59 = sor.u32 %s57, %s58
      %p60 = scmp.eq.s32.totalorder %s59, 0
      %s62 = sadd.s32 %s61, 1
      %s63 = scalar_select %p60, %s61, %s62
      %p66 = pneg %p60
      %p67 = scmp.eq.s32.totalorder %s11, 1
      %p68 = por %p66, %p67
      %p69 = scmp.ne.s32.totalorder %s61, %s64
      %p70 = scmp.eq.s32.totalorder %s11, 0
      %p71 = por %p69, %p70
      %p72 = scmp.ne.s32.totalorder %s61, %s64
      %p73 = scmp.eq.s32.totalorder %s16, 1
      %p74 = por %p72, %p73
      %p75 = scmp.ne.s32.totalorder %s64, %s65
      %p76 = scmp.eq.s32.totalorder %s16, 0
      %p77 = por %p75, %p76
      %p78 = scmp.ne.s32.totalorder %s64, %s65
      %p79 = scmp.eq.s32.totalorder %s17, 1
      %p80 = por %p78, %p79
      %p82 = scmp.ne.s32.totalorder %s65, %s81
      %p83 = scmp.eq.s32.totalorder %s17, 0
      %p84 = por %p82, %p83
      %p85 = scmp.le.s32.totalorder 1, %s11
      %p86 = scmp.lt.s32.totalorder %s11, 3
      %p87 = pnand %p85, %p86
      %p88 = pneg %p87
      // Predicated region
      $region9: #{pointnet_encoder.7} parent=5 // pred_check
        _
      $region10: #{pointnet_encoder.7} parent=5 // pred_check_branch
        %90 = sbr.rel (%p87) target = $region12
      $region11: #{pointnet_encoder.7} parent=5 // pred_region
        %s91 = ssub.s32 %s11, 1
      $region12: #{pointnet_encoder.7} parent=5 // pred_fallthru
        _
      %p92 = scmp.lt.s32.totalorder %s11, 2
      // Predicated region
      $region13: #{pointnet_encoder.7} parent=5 // pred_check
        %p93 = pneg %p92
      $region14: #{pointnet_encoder.7} parent=5 // pred_check_branch
        %95 = sbr.rel (%p93) target = $region16
      $region15: #{pointnet_encoder.7} parent=5 // pred_region
        // Predicated region
        $region17: #{pointnet_encoder.7} parent=15 // pred_check
          %p96 = pneg %p43
        $region18: #{pointnet_encoder.7} parent=15 // pred_check_branch
          %98 = sbr.rel (%p96) target = $region20
        $region19: #{pointnet_encoder.7} parent=15 // pred_region
          %p99 = scmp.lt.s32.totalorder %s18, 1
          %s100 = scalar_select %p99, %s18, 1
          %s101 = smul.addr %s100, 32
          %s102 = smul.addr %s101, 8
          %s103 = scalar_lea.vmem %s0, %s102
        $region20: #{pointnet_encoder.7} parent=15 // pred_fallthru
          _
      $region16: #{pointnet_encoder.7} parent=5 // pred_fallthru
        _
      %p104 = scmp.le.s32.totalorder 1, %s11
      %p105 = scmp.lt.s32.totalorder %s11, 3
      %p106 = pnand %p104, %p105
      %p107 = pneg %p106
      // Predicated region
      $region21: #{pointnet_encoder.7} parent=5 // pred_check
        _
      $region22: #{pointnet_encoder.7} parent=5 // pred_check_branch
        %109 = sbr.rel (%p106) target = $region24
      $region23: #{pointnet_encoder.7} parent=5 // pred_region
        %s110 = ssub.s32 %s11, 1
        %p111 = scmp.lt.s32.totalorder %s20, 1
        %s112 = scalar_select %p111, %s20, 1
        %s113 = smul.addr %s112, 32
        %s114 = smul.addr %s113, 8
        %s115 = scalar_lea.vmem %s0, %s114
        %p116 = pneg %p49
        %p117 = pneg %p46
        %p118 = pneg %p77
        %p119 = pneg %p74
        %s120 = sand.u32 %s64, 1
        %s121 = scalar_lea.sflag [#allocation3], %s120
        %s122 = sand.u32 %s64, 1
        %s123 = smul.addr %s122, 768
        %s124 = scalar_lea.vmem [#allocation2], %s123
        %p125 = scmp.lt.s32.totalorder %s20, 1
        %s126 = scalar_select %p125, %s20, 1
        %s127 = smul.addr %s126, 32
        %s128 = smul.addr %s127, 8
        %s129 = scalar_lea.vmem %s0, %s128
        %s130 = smul.u32 3, %s21
        %v131 = vld [vmem:[%s129] sm:$0xff]
        %v132 = vld [vmem:[%s129 + $0x8] sm:$0xff]
        %v133 = vld [vmem:[%s129 + $0x10] sm:$0xff]
        %v134 = vld [vmem:[%s129 + $0x18] sm:$0xff]
        %v135 = vld [vmem:[%s129 + $0x20] sm:$0xff]
        %v136 = vld [vmem:[%s129 + $0x28] sm:$0xff]
        %v137 = vld [vmem:[%s129 + $0x30] sm:$0xff]
        %v138 = vld [vmem:[%s129 + $0x38] sm:$0xff]
        %v139 = vld [vmem:[%s129 + $0x40] sm:$0xff]
        %v140 = vld [vmem:[%s129 + $0x48] sm:$0xff]
        %v141 = vld [vmem:[%s129 + $0x50] sm:$0xff]
        %v142 = vld [vmem:[%s129 + $0x58] sm:$0xff]
        %v143 = vld [vmem:[%s129 + $0x60] sm:$0xff]
        %v144 = vld [vmem:[%s129 + $0x68] sm:$0xff]
        %v145 = vld [vmem:[%s129 + $0x70] sm:$0xff]
        %v146 = vld [vmem:[%s129 + $0x78] sm:$0xff]
        %v147 = vld [vmem:[%s129 + $0x80] sm:$0xff]
        %v148 = vld [vmem:[%s129 + $0x88] sm:$0xff]
        %v149 = vld [vmem:[%s129 + $0x90] sm:$0xff]
        %v150 = vld [vmem:[%s129 + $0x98] sm:$0xff]
        %v151 = vld [vmem:[%s129 + $0xa0] sm:$0xff]
        %v152 = vld [vmem:[%s129 + $0xa8] sm:$0xff]
        %v153 = vld [vmem:[%s129 + $0xb0] sm:$0xff]
        %v154 = vld [vmem:[%s129 + $0xb8] sm:$0xff]
        %v155 = vld [vmem:[%s129 + $0xc0] sm:$0xff]
        %v156 = vld [vmem:[%s129 + $0xc8] sm:$0xff]
        %v157 = vld [vmem:[%s129 + $0xd0] sm:$0xff]
        %v158 = vld [vmem:[%s129 + $0xd8] sm:$0xff]
        %v159 = vld [vmem:[%s129 + $0xe0] sm:$0xff]
        %v160 = vld [vmem:[%s129 + $0xe8] sm:$0xff]
        %v161 = vld [vmem:[%s129 + $0xf0] sm:$0xff]
        %v162 = vld [vmem:[%s129 + $0xf8] sm:$0xff]
        %164 = vset.pattern.permute.xlu0 0
        %165 = vperm.xlu0 %164, %v131
        %v166 = vpop.permute.xlu0 %165
        %169 = vset.pattern.permute.xlu0 0
        %170 = vperm.xlu0 %169, %v132
        %v171 = vpop.permute.xlu0 %170
        %174 = vset.pattern.permute.xlu0 0
        %175 = vperm.xlu0 %174, %v133
        %v176 = vpop.permute.xlu0 %175
        %179 = vset.pattern.permute.xlu0 0
        %180 = vperm.xlu0 %179, %v134
        %v181 = vpop.permute.xlu0 %180
        %184 = vset.pattern.permute.xlu0 0
        %185 = vperm.xlu0 %184, %v135
        %v186 = vpop.permute.xlu0 %185
        %189 = vset.pattern.permute.xlu0 0
        %190 = vperm.xlu0 %189, %v136
        %v191 = vpop.permute.xlu0 %190
        %194 = vset.pattern.permute.xlu0 0
        %195 = vperm.xlu0 %194, %v137
        %v196 = vpop.permute.xlu0 %195
        %199 = vset.pattern.permute.xlu0 0
        %200 = vperm.xlu0 %199, %v138
        %v201 = vpop.permute.xlu0 %200
        %204 = vset.pattern.permute.xlu0 0
        %205 = vperm.xlu0 %204, %v139
        %v206 = vpop.permute.xlu0 %205
        %209 = vset.pattern.permute.xlu0 0
        %210 = vperm.xlu0 %209, %v140
        %v211 = vpop.permute.xlu0 %210
        %214 = vset.pattern.permute.xlu0 0
        %215 = vperm.xlu0 %214, %v141
        %v216 = vpop.permute.xlu0 %215
        %219 = vset.pattern.permute.xlu0 0
        %220 = vperm.xlu0 %219, %v142
        %v221 = vpop.permute.xlu0 %220
        %224 = vset.pattern.permute.xlu0 0
        %225 = vperm.xlu0 %224, %v143
        %v226 = vpop.permute.xlu0 %225
        %229 = vset.pattern.permute.xlu0 0
        %230 = vperm.xlu0 %229, %v144
        %v231 = vpop.permute.xlu0 %230
        %234 = vset.pattern.permute.xlu0 0
        %235 = vperm.xlu0 %234, %v145
        %v236 = vpop.permute.xlu0 %235
        %239 = vset.pattern.permute.xlu0 0
        %240 = vperm.xlu0 %239, %v146
        %v241 = vpop.permute.xlu0 %240
        %244 = vset.pattern.permute.xlu0 0
        %245 = vperm.xlu0 %244, %v147
        %v246 = vpop.permute.xlu0 %245
        %249 = vset.pattern.permute.xlu0 0
        %250 = vperm.xlu0 %249, %v148
        %v251 = vpop.permute.xlu0 %250
        %254 = vset.pattern.permute.xlu0 0
        %255 = vperm.xlu0 %254, %v149
        %v256 = vpop.permute.xlu0 %255
        %259 = vset.pattern.permute.xlu0 0
        %260 = vperm.xlu0 %259, %v150
        %v261 = vpop.permute.xlu0 %260
        %264 = vset.pattern.permute.xlu0 0
        %265 = vperm.xlu0 %264, %v151
        %v266 = vpop.permute.xlu0 %265
        %269 = vset.pattern.permute.xlu0 0
        %270 = vperm.xlu0 %269, %v152
        %v271 = vpop.permute.xlu0 %270
        %274 = vset.pattern.permute.xlu0 0
        %275 = vperm.xlu0 %274, %v153
        %v276 = vpop.permute.xlu0 %275
        %279 = vset.pattern.permute.xlu0 0
        %280 = vperm.xlu0 %279, %v154
        %v281 = vpop.permute.xlu0 %280
        %284 = vset.pattern.permute.xlu0 0
        %285 = vperm.xlu0 %284, %v155
        %v286 = vpop.permute.xlu0 %285
        %289 = vset.pattern.permute.xlu0 0
        %290 = vperm.xlu0 %289, %v156
        %v291 = vpop.permute.xlu0 %290
        %294 = vset.pattern.permute.xlu0 0
        %295 = vperm.xlu0 %294, %v157
        %v296 = vpop.permute.xlu0 %295
        %299 = vset.pattern.permute.xlu0 0
        %300 = vperm.xlu0 %299, %v158
        %v301 = vpop.permute.xlu0 %300
        %304 = vset.pattern.permute.xlu0 0
        %305 = vperm.xlu0 %304, %v159
        %v306 = vpop.permute.xlu0 %305
        %309 = vset.pattern.permute.xlu0 0
        %310 = vperm.xlu0 %309, %v160
        %v311 = vpop.permute.xlu0 %310
        %314 = vset.pattern.permute.xlu0 0
        %315 = vperm.xlu0 %314, %v161
        %v316 = vpop.permute.xlu0 %315
        %319 = vset.pattern.permute.xlu0 0
        %320 = vperm.xlu0 %319, %v162
        %v321 = vpop.permute.xlu0 %320
        %323 = vst [vmem:[%s124] sm:$0xff] %v166
        %324 = vst [vmem:[%s124 + $0x8] sm:$0xff] %v166
        %325 = vst [vmem:[%s124 + $0x10] sm:$0xff] %v166
        %326 = vst [vmem:[%s124 + $0x18] sm:$0xff] %v171
        %327 = vst [vmem:[%s124 + $0x20] sm:$0xff] %v171
        %328 = vst [vmem:[%s124 + $0x28] sm:$0xff] %v171
        %329 = vst [vmem:[%s124 + $0x30] sm:$0xff] %v176
        %330 = vst [vmem:[%s124 + $0x38] sm:$0xff] %v176
        %331 = vst [vmem:[%s124 + $0x40] sm:$0xff] %v176
        %332 = vst [vmem:[%s124 + $0x48] sm:$0xff] %v181
        %333 = vst [vmem:[%s124 + $0x50] sm:$0xff] %v181
        %334 = vst [vmem:[%s124 + $0x58] sm:$0xff] %v181
        %335 = vst [vmem:[%s124 + $0x60] sm:$0xff] %v186
        %336 = vst [vmem:[%s124 + $0x68] sm:$0xff] %v186
        %337 = vst [vmem:[%s124 + $0x70] sm:$0xff] %v186
        %338 = vst [vmem:[%s124 + $0x78] sm:$0xff] %v191
        %339 = vst [vmem:[%s124 + $0x80] sm:$0xff] %v191
        %340 = vst [vmem:[%s124 + $0x88] sm:$0xff] %v191
        %341 = vst [vmem:[%s124 + $0x90] sm:$0xff] %v196
        %342 = vst [vmem:[%s124 + $0x98] sm:$0xff] %v196
        %343 = vst [vmem:[%s124 + $0xa0] sm:$0xff] %v196
        %344 = vst [vmem:[%s124 + $0xa8] sm:$0xff] %v201
        %345 = vst [vmem:[%s124 + $0xb0] sm:$0xff] %v201
        %346 = vst [vmem:[%s124 + $0xb8] sm:$0xff] %v201
        %347 = vst [vmem:[%s124 + $0xc0] sm:$0xff] %v206
        %348 = vst [vmem:[%s124 + $0xc8] sm:$0xff] %v206
        %349 = vst [vmem:[%s124 + $0xd0] sm:$0xff] %v206
        %350 = vst [vmem:[%s124 + $0xd8] sm:$0xff] %v211
        %351 = vst [vmem:[%s124 + $0xe0] sm:$0xff] %v211
        %352 = vst [vmem:[%s124 + $0xe8] sm:$0xff] %v211
        %353 = vst [vmem:[%s124 + $0xf0] sm:$0xff] %v216
        %354 = vst [vmem:[%s124 + $0xf8] sm:$0xff] %v216
        %355 = vst [vmem:[%s124 + $0x100] sm:$0xff] %v216
        %356 = vst [vmem:[%s124 + $0x108] sm:$0xff] %v221
        %357 = vst [vmem:[%s124 + $0x110] sm:$0xff] %v221
        %358 = vst [vmem:[%s124 + $0x118] sm:$0xff] %v221
        %359 = vst [vmem:[%s124 + $0x120] sm:$0xff] %v226
        %360 = vst [vmem:[%s124 + $0x128] sm:$0xff] %v226
        %361 = vst [vmem:[%s124 + $0x130] sm:$0xff] %v226
        %362 = vst [vmem:[%s124 + $0x138] sm:$0xff] %v231
        %363 = vst [vmem:[%s124 + $0x140] sm:$0xff] %v231
        %364 = vst [vmem:[%s124 + $0x148] sm:$0xff] %v231
        %365 = vst [vmem:[%s124 + $0x150] sm:$0xff] %v236
        %366 = vst [vmem:[%s124 + $0x158] sm:$0xff] %v236
        %367 = vst [vmem:[%s124 + $0x160] sm:$0xff] %v236
        %368 = vst [vmem:[%s124 + $0x168] sm:$0xff] %v241
        %369 = vst [vmem:[%s124 + $0x170] sm:$0xff] %v241
        %370 = vst [vmem:[%s124 + $0x178] sm:$0xff] %v241
        %371 = vst [vmem:[%s124 + $0x180] sm:$0xff] %v246
        %372 = vst [vmem:[%s124 + $0x188] sm:$0xff] %v246
        %373 = vst [vmem:[%s124 + $0x190] sm:$0xff] %v246
        %374 = vst [vmem:[%s124 + $0x198] sm:$0xff] %v251
        %375 = vst [vmem:[%s124 + $0x1a0] sm:$0xff] %v251
        %376 = vst [vmem:[%s124 + $0x1a8] sm:$0xff] %v251
        %377 = vst [vmem:[%s124 + $0x1b0] sm:$0xff] %v256
        %378 = vst [vmem:[%s124 + $0x1b8] sm:$0xff] %v256
        %379 = vst [vmem:[%s124 + $0x1c0] sm:$0xff] %v256
        %380 = vst [vmem:[%s124 + $0x1c8] sm:$0xff] %v261
        %381 = vst [vmem:[%s124 + $0x1d0] sm:$0xff] %v261
        %382 = vst [vmem:[%s124 + $0x1d8] sm:$0xff] %v261
        %383 = vst [vmem:[%s124 + $0x1e0] sm:$0xff] %v266
        %384 = vst [vmem:[%s124 + $0x1e8] sm:$0xff] %v266
        %385 = vst [vmem:[%s124 + $0x1f0] sm:$0xff] %v266
        %386 = vst [vmem:[%s124 + $0x1f8] sm:$0xff] %v271
        %387 = vst [vmem:[%s124 + $0x200] sm:$0xff] %v271
        %388 = vst [vmem:[%s124 + $0x208] sm:$0xff] %v271
        %389 = vst [vmem:[%s124 + $0x210] sm:$0xff] %v276
        %390 = vst [vmem:[%s124 + $0x218] sm:$0xff] %v276
        %391 = vst [vmem:[%s124 + $0x220] sm:$0xff] %v276
        %392 = vst [vmem:[%s124 + $0x228] sm:$0xff] %v281
        %393 = vst [vmem:[%s124 + $0x230] sm:$0xff] %v281
        %394 = vst [vmem:[%s124 + $0x238] sm:$0xff] %v281
        %395 = vst [vmem:[%s124 + $0x240] sm:$0xff] %v286
        %396 = vst [vmem:[%s124 + $0x248] sm:$0xff] %v286
        %397 = vst [vmem:[%s124 + $0x250] sm:$0xff] %v286
        %398 = vst [vmem:[%s124 + $0x258] sm:$0xff] %v291
        %399 = vst [vmem:[%s124 + $0x260] sm:$0xff] %v291
        %400 = vst [vmem:[%s124 + $0x268] sm:$0xff] %v291
        %401 = vst [vmem:[%s124 + $0x270] sm:$0xff] %v296
        %402 = vst [vmem:[%s124 + $0x278] sm:$0xff] %v296
        %403 = vst [vmem:[%s124 + $0x280] sm:$0xff] %v296
        %404 = vst [vmem:[%s124 + $0x288] sm:$0xff] %v301
        %405 = vst [vmem:[%s124 + $0x290] sm:$0xff] %v301
        %406 = vst [vmem:[%s124 + $0x298] sm:$0xff] %v301
        %407 = vst [vmem:[%s124 + $0x2a0] sm:$0xff] %v306
        %408 = vst [vmem:[%s124 + $0x2a8] sm:$0xff] %v306
        %409 = vst [vmem:[%s124 + $0x2b0] sm:$0xff] %v306
        %410 = vst [vmem:[%s124 + $0x2b8] sm:$0xff] %v311
        %411 = vst [vmem:[%s124 + $0x2c0] sm:$0xff] %v311
        %412 = vst [vmem:[%s124 + $0x2c8] sm:$0xff] %v311
        %413 = vst [vmem:[%s124 + $0x2d0] sm:$0xff] %v316
        %414 = vst [vmem:[%s124 + $0x2d8] sm:$0xff] %v316
        %415 = vst [vmem:[%s124 + $0x2e0] sm:$0xff] %v316
        %416 = vst [vmem:[%s124 + $0x2e8] sm:$0xff] %v321
        %417 = vst [vmem:[%s124 + $0x2f0] sm:$0xff] %v321
        %418 = vst [vmem:[%s124 + $0x2f8] sm:$0xff] %v321
        %s419 = sand.u32 %s64, 1
        %s420 = scalar_lea.sflag [#allocation3], %s419
        %s421 = sand.u32 %s64, 1
        %s422 = smul.addr %s421, 768
        %s423 = scalar_lea.vmem [#allocation2], %s422
        // Predicated region
        $region25: #{pointnet_encoder.7} parent=23 // pred_check
          %p424 = pneg %p74
        $region26: #{pointnet_encoder.7} parent=23 // pred_check_branch
          %426 = sbr.rel (%p424) target = $region28
        $region27: #{pointnet_encoder.7} parent=23 // pred_region
          %s427 = smul.u32 3, %s21
          %s429 = ssub.s32 12288, 12288
          %430 = vsyncadd %s420, %s429
          %s431 = smul.addr %s20, 102
          %s432 = sadd.s32 %s427, %s431
          %s433 = smul.addr %s432, 128
          %s434 = scalar_lea.hbm %s2, %s433
          %s435 = sshll.u32 %s423, 4
          %s436 = int_to_ptr.vmem [resolvable:$true] %s435
          %441 = dma.vmem_to_hbm [thread:$0]  %s436, 12288, %s434, %s420, 384, 384, 24
        $region28: #{pointnet_encoder.7} parent=23 // pred_fallthru
          _
      $region24: #{pointnet_encoder.7} parent=5 // pred_fallthru
        _
      %p442 = scmp.le.s32.totalorder 2, %s11
      // Predicated region
      $region29: #{pointnet_encoder.7} parent=5 // pred_check
        %p443 = pneg %p442
      $region30: #{pointnet_encoder.7} parent=5 // pred_check_branch
        %445 = sbr.rel (%p443) target = $region32
      $region31: #{pointnet_encoder.7} parent=5 // pred_region
        %s446 = ssub.s32 %s11, 2
        // Predicated region
        $region33: #{pointnet_encoder.7} parent=31 // pred_check
          %p447 = pneg %p80
        $region34: #{pointnet_encoder.7} parent=31 // pred_check_branch
          %449 = sbr.rel (%p447) target = $region36
        $region35: #{pointnet_encoder.7} parent=31 // pred_region
          %s450 = sand.u32 %s65, 1
          %s451 = scalar_lea.sflag [#allocation3], %s450
          %s452 = sand.u32 %s65, 1
          %s453 = smul.addr %s452, 768
          %s454 = scalar_lea.vmem [#allocation2], %s453
          %455 = dma.done %s451, 12288
        $region36: #{pointnet_encoder.7} parent=31 // pred_fallthru
          _
      $region32: #{pointnet_encoder.7} parent=5 // pred_fallthru
        _
    $region6: #{pointnet_encoder.7} parent=1 // loop_footer
      %s15 = sadd.s32 1, %s11
    $region7: #{pointnet_encoder.7} parent=1 // loop_footer_branch
      %10 = sbr.rel target = $region3
    $region8: #{pointnet_encoder.7} parent=1 // loop_exit
      _
    %456 = vsyncpa [#allocation3], 1
    %s457 = scalar_lea.sflag [#allocation3], 1
    %458 = vsyncpa %s457, 1

// kernel: pointnet_encoder.6
$region0: #{pointnet_encoder.6}
  #allocation0 [shape = 'u32[]', space=smem, size = 0x4, offset = 0x4, fixed_abs, tag = 'smem constant byte address 0x4 - core index']
  #allocation1 [shape = 'u32[144,128]{1,0:T(1,128)}', space=vmem, size = 0x12000, scoped, tag = 'internal scratch']
  #allocation2 [shape = 'f32[256,128]{1,0:T(8,128)}', space=vmem, size = 0x20000, scoped, tag = 'scratch operand']
  #allocation3 [shape = 'f32[256,128]{1,0:T(8,128)}', space=vmem, size = 0x20000, scoped, tag = 'scratch operand']
  #allocation4 [shape = 'f32[256,128]{1,0:T(8,128)}', space=vmem, size = 0x20000, scoped, tag = 'scratch operand']
  #allocation5 [shape = 'f32[256,128]{1,0:T(8,128)}', space=vmem, size = 0x20000, scoped, tag = 'scratch operand']
  %s0 = inlined_call_operand.vmem [shape: f32[2,272,384], index: 0, kind: input, shape index: {}]
  %s1 = inlined_call_operand.vmem [shape: f32[32,16], index: 1, kind: input, shape index: {}]
  %s2 = inlined_call_operand.vmem [shape: f32[32,1], index: 2, kind: input, shape index: {}]
  %s3 = inlined_call_operand.vmem [shape: f32[32,1], index: 3, kind: input, shape index: {}]
  %s4 = inlined_call_operand.vmem [shape: bf16[256,32], index: 4, kind: input, shape index: {}]
  %s5 = inlined_call_operand.vmem [shape: f32[2,256,128], index: 5, kind: output, shape index: {0}]
  %s6 = inlined_call_operand.vmem [shape: f32[2,256,128], index: 6, kind: output, shape index: {1}]
  %s7 = inlined_call_operand.vmem [shape: f32[2,256,128], index: 7, kind: output, shape index: {2}]
  %s8 = inlined_call_operand.vmem [shape: f32[2,256,128], index: 8, kind: output, shape index: {3}]
  %9 = xla_tuple %s5, %s6, %s7, %s8
  %s10 = sld [smem:[#allocation0]]
  $region85: #{pointnet_encoder.6} parent=0
    _
  %s12 = ssub.s32 1, %s10
  %s13 = scalar_select 0, %s12, %s10
  loop: start=0, step=1, limit=4
  $region2: #{pointnet_encoder.6} parent=0 // loop_pre_header
    _
  $region3: #{pointnet_encoder.6} parent=0 // loop_header
    %s15 = sphi 0, %s19
    %p16 = scmp.ge.s32.totalorder %s15, 4
    %s22 = sphi 0, %s34
    %s23 = sphi 0, %s30
    %s24 = sphi 0, %s22
    %s25 = sphi 0, %s23
    %s26 = sphi 0, %s24
    %s27 = sphi 0, %s25
    %s39 = sphi 0, %s41
    %s42 = sphi 0, %s39
    %s43 = sphi 0, %s42
    %s59 = sphi 0, %s43
    %s63 = sphi 0, %s63
    %s65 = sphi 0, %s63
    %s66 = sphi 0, %s65
    %s80 = sphi 0, %s66
    %s84 = sphi 0, %s84
    %s86 = sphi 0, %s84
    %s87 = sphi 0, %s86
    %s101 = sphi 0, %s87
    %s105 = sphi 0, %s105
    %s107 = sphi 0, %s105
    %s108 = sphi 0, %s107
    %s122 = sphi 0, %s108
    %s126 = sphi 0, %s126
    %s128 = sphi 0, %s126
    %s129 = sphi 0, %s128
    %s143 = sphi 0, %s129
    %s149 = sphi 0, %s151
    %s152 = sphi 0, %s149
    %s153 = sphi 0, %s152
    %s169 = sphi 0, %s153
    %s175 = sphi 0, %s177
    %s178 = sphi 0, %s175
    %s179 = sphi 0, %s178
    %s195 = sphi 0, %s179
    %s201 = sphi 0, %s203
    %s204 = sphi 0, %s201
    %s205 = sphi 0, %s204
    %s221 = sphi 0, %s205
    %s227 = sphi 0, %s229
    %s230 = sphi 0, %s227
    %s231 = sphi 0, %s230
    %s247 = sphi 0, %s231
  $region4: #{pointnet_encoder.6} parent=0 // loop_header_branch
    %18 = sbr.rel (%p16) target = $region8
  $region5: #{pointnet_encoder.6} parent=0 // loop_body
    %s20 = ssub.s32 %s15, 1
    %s21 = ssub.s32 %s15, 2
    %s28 = sadd.s32 1, %s23
    %p29 = scmp.ge.s32.totalorder %s28, 1
    %s30 = scalar_select %p29, 0, %s28
    %s31 = sadd.s32 1, %s22
    %s32 = scalar_select %p29, %s31, %s22
    %p33 = scmp.ge.s32.totalorder %s32, 2
    %s34 = scalar_select %p33, 0, %s32
    %s35 = ssub.s32 %s22, %s34
    %s36 = ssub.s32 %s23, %s30
    %s37 = sor.u32 %s35, %s36
    %p38 = scmp.eq.s32.totalorder %s37, 0
    %s40 = sadd.s32 %s39, 1
    %s41 = scalar_select %p38, %s39, %s40
    %p44 = pneg %p38
    %p45 = scmp.eq.s32.totalorder %s15, 1
    %p46 = por %p44, %p45
    %p47 = scmp.ne.s32.totalorder %s39, %s42
    %p48 = scmp.eq.s32.totalorder %s15, 0
    %p49 = por %p47, %p48
    %p50 = scmp.ne.s32.totalorder %s39, %s42
    %p51 = scmp.eq.s32.totalorder %s20, 1
    %p52 = por %p50, %p51
    %p53 = scmp.ne.s32.totalorder %s42, %s43
    %p54 = scmp.eq.s32.totalorder %s20, 0
    %p55 = por %p53, %p54
    %p56 = scmp.ne.s32.totalorder %s42, %s43
    %p57 = scmp.eq.s32.totalorder %s21, 1
    %p58 = por %p56, %p57
    %p60 = scmp.ne.s32.totalorder %s43, %s59
    %p61 = scmp.eq.s32.totalorder %s21, 0
    %p62 = por %p60, %p61
    %s64 = sadd.s32 %s63, 1
    %p67 = scmp.eq.s32.totalorder %s15, 1
    %p68 = scmp.ne.s32.totalorder %s63, %s65
    %p69 = scmp.eq.s32.totalorder %s15, 0
    %p70 = por %p68, %p69
    %p71 = scmp.ne.s32.totalorder %s63, %s65
    %p72 = scmp.eq.s32.totalorder %s20, 1
    %p73 = por %p71, %p72
    %p74 = scmp.ne.s32.totalorder %s65, %s66
    %p75 = scmp.eq.s32.totalorder %s20, 0
    %p76 = por %p74, %p75
    %p77 = scmp.ne.s32.totalorder %s65, %s66
    %p78 = scmp.eq.s32.totalorder %s21, 1
    %p79 = por %p77, %p78
    %p81 = scmp.ne.s32.totalorder %s66, %s80
    %p82 = scmp.eq.s32.totalorder %s21, 0
    %p83 = por %p81, %p82
    %s85 = sadd.s32 %s84, 1
    %p88 = scmp.eq.s32.totalorder %s15, 1
    %p89 = scmp.ne.s32.totalorder %s84, %s86
    %p90 = scmp.eq.s32.totalorder %s15, 0
    %p91 = por %p89, %p90
    %p92 = scmp.ne.s32.totalorder %s84, %s86
    %p93 = scmp.eq.s32.totalorder %s20, 1
    %p94 = por %p92, %p93
    %p95 = scmp.ne.s32.totalorder %s86, %s87
    %p96 = scmp.eq.s32.totalorder %s20, 0
    %p97 = por %p95, %p96
    %p98 = scmp.ne.s32.totalorder %s86, %s87
    %p99 = scmp.eq.s32.totalorder %s21, 1
    %p100 = por %p98, %p99
    %p102 = scmp.ne.s32.totalorder %s87, %s101
    %p103 = scmp.eq.s32.totalorder %s21, 0
    %p104 = por %p102, %p103
    %s106 = sadd.s32 %s105, 1
    %p109 = scmp.eq.s32.totalorder %s15, 1
    %p110 = scmp.ne.s32.totalorder %s105, %s107
    %p111 = scmp.eq.s32.totalorder %s15, 0
    %p112 = por %p110, %p111
    %p113 = scmp.ne.s32.totalorder %s105, %s107
    %p114 = scmp.eq.s32.totalorder %s20, 1
    %p115 = por %p113, %p114
    %p116 = scmp.ne.s32.totalorder %s107, %s108
    %p117 = scmp.eq.s32.totalorder %s20, 0
    %p118 = por %p116, %p117
    %p119 = scmp.ne.s32.totalorder %s107, %s108
    %p120 = scmp.eq.s32.totalorder %s21, 1
    %p121 = por %p119, %p120
    %p123 = scmp.ne.s32.totalorder %s108, %s122
    %p124 = scmp.eq.s32.totalorder %s21, 0
    %p125 = por %p123, %p124
    %s127 = sadd.s32 %s126, 1
    %p130 = scmp.eq.s32.totalorder %s15, 1
    %p131 = scmp.ne.s32.totalorder %s126, %s128
    %p132 = scmp.eq.s32.totalorder %s15, 0
    %p133 = por %p131, %p132
    %p134 = scmp.ne.s32.totalorder %s126, %s128
    %p135 = scmp.eq.s32.totalorder %s20, 1
    %p136 = por %p134, %p135
    %p137 = scmp.ne.s32.totalorder %s128, %s129
    %p138 = scmp.eq.s32.totalorder %s20, 0
    %p139 = por %p137, %p138
    %p140 = scmp.ne.s32.totalorder %s128, %s129
    %p141 = scmp.eq.s32.totalorder %s21, 1
    %p142 = por %p140, %p141
    %p144 = scmp.ne.s32.totalorder %s129, %s143
    %p145 = scmp.eq.s32.totalorder %s21, 0
    %p146 = por %p144, %p145
    %s147 = ssub.s32 %s22, %s34
    %p148 = scmp.eq.s32.totalorder %s147, 0
    %s150 = sadd.s32 %s149, 1
    %s151 = scalar_select %p148, %s149, %s150
    %p154 = pneg %p148
    %p155 = scmp.eq.s32.totalorder %s15, 1
    %p156 = por %p154, %p155
    %p157 = scmp.ne.s32.totalorder %s149, %s152
    %p158 = scmp.eq.s32.totalorder %s15, 0
    %p159 = por %p157, %p158
    %p160 = scmp.ne.s32.totalorder %s149, %s152
    %p161 = scmp.eq.s32.totalorder %s20, 1
    %p162 = por %p160, %p161
    %p163 = scmp.ne.s32.totalorder %s152, %s153
    %p164 = scmp.eq.s32.totalorder %s20, 0
    %p165 = por %p163, %p164
    %p166 = scmp.ne.s32.totalorder %s152, %s153
    %p167 = scmp.eq.s32.totalorder %s21, 1
    %p168 = por %p166, %p167
    %p170 = scmp.ne.s32.totalorder %s153, %s169
    %p171 = scmp.eq.s32.totalorder %s21, 0
    %p172 = por %p170, %p171
    %s173 = ssub.s32 %s22, %s34
    %p174 = scmp.eq.s32.totalorder %s173, 0
    %s176 = sadd.s32 %s175, 1
    %s177 = scalar_select %p174, %s175, %s176
    %p180 = pneg %p174
    %p181 = scmp.eq.s32.totalorder %s15, 1
    %p182 = por %p180, %p181
    %p183 = scmp.ne.s32.totalorder %s175, %s178
    %p184 = scmp.eq.s32.totalorder %s15, 0
    %p185 = por %p183, %p184
    %p186 = scmp.ne.s32.totalorder %s175, %s178
    %p187 = scmp.eq.s32.totalorder %s20, 1
    %p188 = por %p186, %p187
    %p189 = scmp.ne.s32.totalorder %s178, %s179
    %p190 = scmp.eq.s32.totalorder %s20, 0
    %p191 = por %p189, %p190
    %p192 = scmp.ne.s32.totalorder %s178, %s179
    %p193 = scmp.eq.s32.totalorder %s21, 1
    %p194 = por %p192, %p193
    %p196 = scmp.ne.s32.totalorder %s179, %s195
    %p197 = scmp.eq.s32.totalorder %s21, 0
    %p198 = por %p196, %p197
    %s199 = ssub.s32 %s22, %s34
    %p200 = scmp.eq.s32.totalorder %s199, 0
    %s202 = sadd.s32 %s201, 1
    %s203 = scalar_select %p200, %s201, %s202
    %p206 = pneg %p200
    %p207 = scmp.eq.s32.totalorder %s15, 1
    %p208 = por %p206, %p207
    %p209 = scmp.ne.s32.totalorder %s201, %s204
    %p210 = scmp.eq.s32.totalorder %s15, 0
    %p211 = por %p209, %p210
    %p212 = scmp.ne.s32.totalorder %s201, %s204
    %p213 = scmp.eq.s32.totalorder %s20, 1
    %p214 = por %p212, %p213
    %p215 = scmp.ne.s32.totalorder %s204, %s205
    %p216 = scmp.eq.s32.totalorder %s20, 0
    %p217 = por %p215, %p216
    %p218 = scmp.ne.s32.totalorder %s204, %s205
    %p219 = scmp.eq.s32.totalorder %s21, 1
    %p220 = por %p218, %p219
    %p222 = scmp.ne.s32.totalorder %s205, %s221
    %p223 = scmp.eq.s32.totalorder %s21, 0
    %p224 = por %p222, %p223
    %s225 = ssub.s32 %s22, %s34
    %p226 = scmp.eq.s32.totalorder %s225, 0
    %s228 = sadd.s32 %s227, 1
    %s229 = scalar_select %p226, %s227, %s228
    %p232 = pneg %p226
    %p233 = scmp.eq.s32.totalorder %s15, 1
    %p234 = por %p232, %p233
    %p235 = scmp.ne.s32.totalorder %s227, %s230
    %p236 = scmp.eq.s32.totalorder %s15, 0
    %p237 = por %p235, %p236
    %p238 = scmp.ne.s32.totalorder %s227, %s230
    %p239 = scmp.eq.s32.totalorder %s20, 1
    %p240 = por %p238, %p239
    %p241 = scmp.ne.s32.totalorder %s230, %s231
    %p242 = scmp.eq.s32.totalorder %s20, 0
    %p243 = por %p241, %p242
    %p244 = scmp.ne.s32.totalorder %s230, %s231
    %p245 = scmp.eq.s32.totalorder %s21, 1
    %p246 = por %p244, %p245
    %p248 = scmp.ne.s32.totalorder %s231, %s247
    %p249 = scmp.eq.s32.totalorder %s21, 0
    %p250 = por %p248, %p249
    %p251 = scmp.le.s32.totalorder 1, %s15
    %p252 = scmp.lt.s32.totalorder %s15, 3
    %p253 = pnand %p251, %p252
    %p254 = pneg %p253
    // Predicated region
    $region9: #{pointnet_encoder.6} parent=5 // pred_check
      _
    $region10: #{pointnet_encoder.6} parent=5 // pred_check_branch
      %256 = sbr.rel (%p253) target = $region12
    $region11: #{pointnet_encoder.6} parent=5 // pred_region
      %s257 = ssub.s32 %s15, 1
      // Predicated region
      $region13: #{pointnet_encoder.6} parent=11 // pred_check
        %p258 = pneg %p76
      $region14: #{pointnet_encoder.6} parent=11 // pred_check_branch
        %260 = sbr.rel (%p258) target = $region16
      $region15: #{pointnet_encoder.6} parent=11 // pred_region
        _
      $region16: #{pointnet_encoder.6} parent=11 // pred_fallthru
        _
      // Predicated region
      $region17: #{pointnet_encoder.6} parent=11 // pred_check
        %p261 = pneg %p97
      $region18: #{pointnet_encoder.6} parent=11 // pred_check_branch
        %263 = sbr.rel (%p261) target = $region20
      $region19: #{pointnet_encoder.6} parent=11 // pred_region
        _
      $region20: #{pointnet_encoder.6} parent=11 // pred_fallthru
        _
      // Predicated region
      $region21: #{pointnet_encoder.6} parent=11 // pred_check
        %p264 = pneg %p118
      $region22: #{pointnet_encoder.6} parent=11 // pred_check_branch
        %266 = sbr.rel (%p264) target = $region24
      $region23: #{pointnet_encoder.6} parent=11 // pred_region
        _
      $region24: #{pointnet_encoder.6} parent=11 // pred_fallthru
        _
      // Predicated region
      $region25: #{pointnet_encoder.6} parent=11 // pred_check
        %p267 = pneg %p139
      $region26: #{pointnet_encoder.6} parent=11 // pred_check_branch
        %269 = sbr.rel (%p267) target = $region28
      $region27: #{pointnet_encoder.6} parent=11 // pred_region
        _
      $region28: #{pointnet_encoder.6} parent=11 // pred_fallthru
        _
    $region12: #{pointnet_encoder.6} parent=5 // pred_fallthru
      _
    %p270 = scmp.lt.s32.totalorder %s15, 2
    // Predicated region
    $region29: #{pointnet_encoder.6} parent=5 // pred_check
      %p271 = pneg %p270
    $region30: #{pointnet_encoder.6} parent=5 // pred_check_branch
      %273 = sbr.rel (%p271) target = $region32
    $region31: #{pointnet_encoder.6} parent=5 // pred_region
      // Predicated region
      $region33: #{pointnet_encoder.6} parent=31 // pred_check
        %p274 = pneg %p49
      $region34: #{pointnet_encoder.6} parent=31 // pred_check_branch
        %276 = sbr.rel (%p274) target = $region36
      $region35: #{pointnet_encoder.6} parent=31 // pred_region
        %s277 = smul.u32 3, %s23
        %p278 = scmp.lt.s32.totalorder %s22, 1
        %s279 = scalar_select %p278, %s22, 1
        %p280 = scmp.lt.s32.totalorder %s277, 2
        %s281 = scalar_select %p280, %s277, 2
        %s282 = sadd.s32 %s281, 96
        %s283 = smul.addr %s279, 102
        %s284 = sadd.s32 %s282, %s283
        %s285 = smul.addr %s284, 8
        %s286 = scalar_lea.vmem %s0, %s285
        %s287 = smul.u32 3, %s23
      $region36: #{pointnet_encoder.6} parent=31 // pred_fallthru
        _
    $region32: #{pointnet_encoder.6} parent=5 // pred_fallthru
      _
    %p288 = scmp.le.s32.totalorder 1, %s15
    %p289 = scmp.lt.s32.totalorder %s15, 3
    %p290 = pnand %p288, %p289
    %p291 = pneg %p290
    // Predicated region
    $region37: #{pointnet_encoder.6} parent=5 // pred_check
      _
    $region38: #{pointnet_encoder.6} parent=5 // pred_check_branch
      %293 = sbr.rel (%p290) target = $region40
    $region39: #{pointnet_encoder.6} parent=5 // pred_region
      %s294 = ssub.s32 %s15, 1
      %s295 = smul.u32 3, %s25
      %p296 = scmp.lt.s32.totalorder %s24, 1
      %s297 = scalar_select %p296, %s24, 1
      %p298 = scmp.lt.s32.totalorder %s295, 2
      %s299 = scalar_select %p298, %s295, 2
      %s300 = sadd.s32 %s299, 96
      %s301 = smul.addr %s297, 102
      %s302 = sadd.s32 %s300, %s301
      %s303 = smul.addr %s302, 8
      %s304 = scalar_lea.vmem %s0, %s303
      %p305 = pneg %p55
      %p306 = pneg %p52
      %p307 = pneg %p76
      %p308 = pneg %p73
      %p309 = pneg %p97
      %p310 = pneg %p94
      %p311 = pneg %p118
      %p312 = pneg %p115
      %p313 = pneg %p139
      %p314 = pneg %p136
      %p315 = pneg %p165
      %p316 = pneg %p162
      %p317 = scmp.lt.s32.totalorder %s24, 1
      %s318 = scalar_select %p317, %s24, 1
      %s319 = smul.addr %s318, 32
      %s320 = smul.addr %s319, 8
      %s321 = scalar_lea.vmem %s5, %s320
      %p322 = pneg %p191
      %p323 = pneg %p188
      %p324 = scmp.lt.s32.totalorder %s24, 1
      %s325 = scalar_select %p324, %s24, 1
      %s326 = smul.addr %s325, 32
      %s327 = smul.addr %s326, 8
      %s328 = scalar_lea.vmem %s6, %s327
      %p329 = pneg %p217
      %p330 = pneg %p214
      %p331 = scmp.lt.s32.totalorder %s24, 1
      %s332 = scalar_select %p331, %s24, 1
      %s333 = smul.addr %s332, 32
      %s334 = smul.addr %s333, 8
      %s335 = scalar_lea.vmem %s7, %s334
      %p336 = pneg %p243
      %p337 = pneg %p240
      %p338 = scmp.lt.s32.totalorder %s24, 1
      %s339 = scalar_select %p338, %s24, 1
      %s340 = smul.addr %s339, 32
      %s341 = smul.addr %s340, 8
      %s342 = scalar_lea.vmem %s8, %s341
      %s343 = smul.u32 3, %s25
      %p344 = scmp.lt.s32.totalorder %s24, 1
      %s345 = scalar_select %p344, %s24, 1
      %p346 = scmp.lt.s32.totalorder %s343, 2
      %s347 = scalar_select %p346, %s343, 2
      %s348 = sadd.s32 %s347, 96
      %s349 = smul.addr %s345, 102
      %s350 = sadd.s32 %s348, %s349
      %s351 = smul.addr %s350, 8
      %s352 = scalar_lea.vmem %s0, %s351
      %s353 = smul.u32 3, %s25
      %p354 = scmp.lt.s32.totalorder %s24, 1
      %s355 = scalar_select %p354, %s24, 1
      %s356 = smul.addr %s355, 32
      %s357 = smul.addr %s356, 8
      %s358 = scalar_lea.vmem %s5, %s357
      %p359 = scmp.lt.s32.totalorder %s24, 1
      %s360 = scalar_select %p359, %s24, 1
      %s361 = smul.addr %s360, 32
      %s362 = smul.addr %s361, 8
      %s363 = scalar_lea.vmem %s6, %s362
      %p364 = scmp.lt.s32.totalorder %s24, 1
      %s365 = scalar_select %p364, %s24, 1
      %s366 = smul.addr %s365, 32
      %s367 = smul.addr %s366, 8
      %s368 = scalar_lea.vmem %s7, %s367
      %p369 = scmp.lt.s32.totalorder %s24, 1
      %s370 = scalar_select %p369, %s24, 1
      %s371 = smul.addr %s370, 32
      %s372 = smul.addr %s371, 8
      %s373 = scalar_lea.vmem %s8, %s372
      %v375 = vld [vmem:[%s352] sm:$0xff]
      %v376 = vld [vmem:[%s352 + $0x8] sm:$0xff]
      %v377 = vld [vmem:[%s352 + $0x10] sm:$0xff]
      %v378 = vld [vmem:[%s352 + $0x18] sm:$0xff]
      %v379 = vld [vmem:[%s352 + $0x20] sm:$0xff]
      %v380 = vld [vmem:[%s352 + $0x28] sm:$0xff]
      %v381 = vld [vmem:[%s1] sm:$0xff]
      %v382 = vld [vmem:[%s1 + $0x8] sm:$0xff]
      %v383 = vld [vmem:[%s1 + $0x10] sm:$0xff]
      %v384 = vld [vmem:[%s1 + $0x18] sm:$0xff]
      %vm385 = vcmask 130048
      %v387 = vsel %vm385, %v381, 0
      %v390 = vsel %vm385, %v382, 0
      %v393 = vsel %vm385, %v383, 0
      %v396 = vsel %vm385, %v384, 0
      %398 = vmatprep.subr.mxu0 0.0
      %399 = vmatpush1.msra.mxu0 0.0
      %400 = vmatprep.subr.mxu0 0.0
      %401 = vmatpush1.msra.mxu0 0.0
      %402 = vmatprep.subr.mxu0 0.0
      %403 = vmatpush1.msra.mxu0 0.0
      %404 = vmatprep.subr.mxu0 0.0
      %405 = vmatpush1.msra.mxu0 0.0
      %406 = vmatprep.subr.mxu0 0.0
      %407 = vmatpush1.msra.mxu0 0.0
      %408 = vmatprep.subr.mxu0 0.0
      %409 = vmatpush1.msra.mxu0 0.0
      %410 = vmatprep.subr.mxu0 0.0
      %411 = vmatpush1.msra.mxu0 0.0
      %412 = vmatprep.subr.mxu0 0.0
      %413 = vmatpush1.msra.mxu0 0.0
      %414 = vmatprep.subr.mxu0 0.0
      %415 = vmatpush1.msra.mxu0 0.0
      %416 = vmatprep.subr.mxu0 0.0
      %417 = vmatpush1.msra.mxu0 0.0
      %418 = vmatprep.subr.mxu0 0.0
      %419 = vmatpush1.msra.mxu0 0.0
      %420 = vmatprep.subr.mxu0 0.0
      %421 = vmatpush1.msra.mxu0 0.0
      %422 = vmatprep.subr.mxu0 0.0
      %423 = vmatpush1.msra.mxu0 0.0
      %424 = vmatprep.subr.mxu0 0.0
      %425 = vmatpush1.msra.mxu0 0.0
      %426 = vmatprep.subr.mxu0 %v379
      %427 = vmatpush1.msra.mxu0 %v378
      %428 = vmatprep.subr.mxu0 %v376
      %429 = vmatpush1.msra.mxu0 %v375
      %430 = vmatprep.subr.mxu0 0.0
      %431 = vmatpush2.msra.mxu0 0.0
      %432 = vmatprep.subr.mxu0 0.0
      %433 = vmatpush2.msra.mxu0 0.0
      %434 = vmatprep.subr.mxu0 0.0
      %435 = vmatpush2.msra.mxu0 0.0
      %436 = vmatprep.subr.mxu0 0.0
      %437 = vmatpush2.msra.mxu0 0.0
      %438 = vmatprep.subr.mxu0 0.0
      %439 = vmatpush2.msra.mxu0 0.0
      %440 = vmatprep.subr.mxu0 0.0
      %441 = vmatpush2.msra.mxu0 0.0
      %442 = vmatprep.subr.mxu0 0.0
      %443 = vmatpush2.msra.mxu0 0.0
      %444 = vmatprep.subr.mxu0 0.0
      %445 = vmatpush2.msra.mxu0 0.0
      %446 = vmatprep.subr.mxu0 0.0
      %447 = vmatpush2.msra.mxu0 0.0
      %448 = vmatprep.subr.mxu0 0.0
      %449 = vmatpush2.msra.mxu0 0.0
      %450 = vmatprep.subr.mxu0 0.0
      %451 = vmatpush2.msra.mxu0 0.0
      %452 = vmatprep.subr.mxu0 0.0
      %453 = vmatpush2.msra.mxu0 0.0
      %454 = vmatprep.subr.mxu0 0.0
      %455 = vmatpush2.msra.mxu0 0.0
      %456 = vmatprep.subr.mxu0 0.0
      %457 = vmatpush2.msra.mxu0 0.0
      %458 = vmatprep.subr.mxu0 0.0
      %459 = vmatpush2.msra.mxu0 0.0
      %460 = vmatprep.subr.mxu0 0.0
      %461 = vmatpush2.msra.mxu0 0.0
      %462 = vmatprep.mubr.f32.mxu0 0.0
      %463 = vmatmul.mubr.f32.gmra.mxu0 %v387
      %v464 = vpop.f32.mrf.mxu0
      %v465 = vadd.f32 0.0, %v464
      %v466 = vpop.f32.mrf.mxu0
      %v467 = vadd.f32 0.0, %v466
      %468 = vmatprep.mubr.f32.mxu0 0.0
      %469 = vmatmul.mubr.f32.gmra.mxu0 %v390
      %v470 = vpop.f32.mrf.mxu0
      %v471 = vadd.f32 0.0, %v470
      %v472 = vpop.f32.mrf.mxu0
      %v473 = vadd.f32 0.0, %v472
      %474 = vmatprep.mubr.f32.mxu0 0.0
      %475 = vmatmul.mubr.f32.gmra.mxu0 %v393
      %v476 = vpop.f32.mrf.mxu0
      %v477 = vadd.f32 0.0, %v476
      %v478 = vpop.f32.mrf.mxu0
      %v479 = vadd.f32 0.0, %v478
      %480 = vmatprep.mubr.f32.mxu0 0.0
      %481 = vmatmul.mubr.f32.gmra.mxu0 %v396
      %v482 = vpop.f32.mrf.mxu0
      %v483 = vadd.f32 0.0, %v482
      %v484 = vpop.f32.mrf.mxu0
      %v485 = vadd.f32 0.0, %v484
      %486 = vdwg.mxu0
      %487 = vmatprep.subr.mxu0 0.0
      %488 = vmatpush1.msra.mxu0 0.0
      %489 = vmatprep.subr.mxu0 0.0
      %490 = vmatpush1.msra.mxu0 0.0
      %491 = vmatprep.subr.mxu0 0.0
      %492 = vmatpush1.msra.mxu0 0.0
      %493 = vmatprep.subr.mxu0 0.0
      %494 = vmatpush1.msra.mxu0 0.0
      %495 = vmatprep.subr.mxu0 0.0
      %496 = vmatpush1.msra.mxu0 0.0
      %497 = vmatprep.subr.mxu0 0.0
      %498 = vmatpush1.msra.mxu0 0.0
      %499 = vmatprep.subr.mxu0 0.0
      %500 = vmatpush1.msra.mxu0 0.0
      %501 = vmatprep.subr.mxu0 0.0
      %502 = vmatpush1.msra.mxu0 0.0
      %503 = vmatprep.subr.mxu0 0.0
      %504 = vmatpush1.msra.mxu0 0.0
      %505 = vmatprep.subr.mxu0 0.0
      %506 = vmatpush1.msra.mxu0 0.0
      %507 = vmatprep.subr.mxu0 0.0
      %508 = vmatpush1.msra.mxu0 0.0
      %509 = vmatprep.subr.mxu0 0.0
      %510 = vmatpush1.msra.mxu0 0.0
      %511 = vmatprep.subr.mxu0 0.0
      %512 = vmatpush1.msra.mxu0 0.0
      %513 = vmatprep.subr.mxu0 0.0
      %514 = vmatpush1.msra.mxu0 0.0
      %515 = vmatprep.subr.mxu0 0.0
      %516 = vmatpush1.msra.mxu0 %v380
      %517 = vmatprep.subr.mxu0 0.0
      %518 = vmatpush1.msra.mxu0 %v377
      %519 = vmatprep.subr.mxu0 0.0
      %520 = vmatpush2.msra.mxu0 0.0
      %521 = vmatprep.subr.mxu0 0.0
      %522 = vmatpush2.msra.mxu0 0.0
      %523 = vmatprep.subr.mxu0 0.0
      %524 = vmatpush2.msra.mxu0 0.0
      %525 = vmatprep.subr.mxu0 0.0
      %526 = vmatpush2.msra.mxu0 0.0
      %527 = vmatprep.subr.mxu0 0.0
      %528 = vmatpush2.msra.mxu0 0.0
      %529 = vmatprep.subr.mxu0 0.0
      %530 = vmatpush2.msra.mxu0 0.0
      %531 = vmatprep.subr.mxu0 0.0
      %532 = vmatpush2.msra.mxu0 0.0
      %533 = vmatprep.subr.mxu0 0.0
      %534 = vmatpush2.msra.mxu0 0.0
      %535 = vmatprep.subr.mxu0 0.0
      %536 = vmatpush2.msra.mxu0 0.0
      %537 = vmatprep.subr.mxu0 0.0
      %538 = vmatpush2.msra.mxu0 0.0
      %539 = vmatprep.subr.mxu0 0.0
      %540 = vmatpush2.msra.mxu0 0.0
      %541 = vmatprep.subr.mxu0 0.0
      %542 = vmatpush2.msra.mxu0 0.0
      %543 = vmatprep.subr.mxu0 0.0
      %544 = vmatpush2.msra.mxu0 0.0
      %545 = vmatprep.subr.mxu0 0.0
      %546 = vmatpush2.msra.mxu0 0.0
      %547 = vmatprep.subr.mxu0 0.0
      %548 = vmatpush2.msra.mxu0 0.0
      %549 = vmatprep.subr.mxu0 0.0
      %550 = vmatpush2.msra.mxu0 0.0
      %551 = vmatprep.mubr.f32.mxu0 0.0
      %552 = vmatmul.mubr.f32.gmra.mxu0 %v387
      %v553 = vpop.f32.mrf.mxu0
      %v554 = vadd.f32 0.0, %v553
      %v555 = vpop.f32.mrf.mxu0
      %556 = vmatprep.mubr.f32.mxu0 0.0
      %557 = vmatmul.mubr.f32.gmra.mxu0 %v390
      %v558 = vpop.f32.mrf.mxu0
      %v559 = vadd.f32 0.0, %v558
      %v560 = vpop.f32.mrf.mxu0
      %561 = vmatprep.mubr.f32.mxu0 0.0
      %562 = vmatmul.mubr.f32.gmra.mxu0 %v393
      %v563 = vpop.f32.mrf.mxu0
      %v564 = vadd.f32 0.0, %v563
      %v565 = vpop.f32.mrf.mxu0
      %566 = vmatprep.mubr.f32.mxu0 0.0
      %567 = vmatmul.mubr.f32.gmra.mxu0 %v396
      %v568 = vpop.f32.mrf.mxu0
      %v569 = vadd.f32 0.0, %v568
      %v570 = vpop.f32.mrf.mxu0
      %571 = vdwg.mxu0
      %v572 = vld [vmem:[%s2] sm:$0xff]
      %v573 = vld [vmem:[%s2 + $0x8] sm:$0xff]
      %v574 = vld [vmem:[%s2 + $0x10] sm:$0xff]
      %v575 = vld [vmem:[%s2 + $0x18] sm:$0xff]
      %577 = vset.pattern.permute.xlu0 0
      %578 = vperm.xlu0 %577, %v572
      %v579 = vpop.permute.xlu0 %578
      %582 = vset.pattern.permute.xlu0 0
      %583 = vperm.xlu0 %582, %v573
      %v584 = vpop.permute.xlu0 %583
      %587 = vset.pattern.permute.xlu0 0
      %588 = vperm.xlu0 %587, %v574
      %v589 = vpop.permute.xlu0 %588
      %592 = vset.pattern.permute.xlu0 0
      %593 = vperm.xlu0 %592, %v575
      %v594 = vpop.permute.xlu0 %593
      %v596 = vmul.f32 %v465, %v579
      %v597 = vmul.f32 %v467, %v579
      %v598 = vmul.f32 %v554, %v579
      %v599 = vmul.f32 %v471, %v584
      %v600 = vmul.f32 %v473, %v584
      %v601 = vmul.f32 %v559, %v584
      %v602 = vmul.f32 %v477, %v589
      %v603 = vmul.f32 %v479, %v589
      %v604 = vmul.f32 %v564, %v589
      %v605 = vmul.f32 %v483, %v594
      %v606 = vmul.f32 %v485, %v594
      %v607 = vmul.f32 %v569, %v594
      %v608 = vld [vmem:[%s3] sm:$0xff]
      %v609 = vld [vmem:[%s3 + $0x8] sm:$0xff]
      %v610 = vld [vmem:[%s3 + $0x10] sm:$0xff]
      %v611 = vld [vmem:[%s3 + $0x18] sm:$0xff]
      %613 = vset.pattern.permute.xlu0 0
      %614 = vperm.xlu0 %613, %v608
      %v615 = vpop.permute.xlu0 %614
      %618 = vset.pattern.permute.xlu0 0
      %619 = vperm.xlu0 %618, %v609
      %v620 = vpop.permute.xlu0 %619
      %623 = vset.pattern.permute.xlu0 0
      %624 = vperm.xlu0 %623, %v610
      %v625 = vpop.permute.xlu0 %624
      %628 = vset.pattern.permute.xlu0 0
      %629 = vperm.xlu0 %628, %v611
      %v630 = vpop.permute.xlu0 %629
      %v632 = vadd.f32 %v596, %v615
      %v633 = vadd.f32 %v597, %v615
      %v634 = vadd.f32 %v598, %v615
      %v635 = vadd.f32 %v599, %v620
      %v636 = vadd.f32 %v600, %v620
      %v637 = vadd.f32 %v601, %v620
      %v638 = vadd.f32 %v602, %v625
      %v639 = vadd.f32 %v603, %v625
      %v640 = vadd.f32 %v604, %v625
      %v641 = vadd.f32 %v605, %v630
      %v642 = vadd.f32 %v606, %v630
      %v643 = vadd.f32 %v607, %v630
      %v644 = vtanh.pop %v632
      %v645 = vtanh.pop %v633
      %v646 = vtanh.pop %v634
      %v647 = vtanh.pop %v635
      %v648 = vtanh.pop %v636
      %v649 = vtanh.pop %v637
      %v650 = vtanh.pop %v638
      %v651 = vtanh.pop %v639
      %v652 = vtanh.pop %v640
      %v653 = vtanh.pop %v641
      %v654 = vtanh.pop %v642
      %v655 = vtanh.pop %v643
      %v656 = vld [vmem:[%s4] sm:$0xf]
      %v657 = vld [vmem:[%s4 + $0x4] sm:$0xf]
      %v658 = vld [vmem:[%s4 + $0x8] sm:$0xf]
      %v659 = vld [vmem:[%s4 + $0xc] sm:$0xf]
      %v660 = vld [vmem:[%s4 + $0x10] sm:$0xf]
      %v661 = vld [vmem:[%s4 + $0x14] sm:$0xf]
      %v662 = vld [vmem:[%s4 + $0x18] sm:$0xf]
      %v663 = vld [vmem:[%s4 + $0x1c] sm:$0xf]
      %v664 = vld [vmem:[%s4 + $0x20] sm:$0xf]
      %v665 = vld [vmem:[%s4 + $0x24] sm:$0xf]
      %v666 = vld [vmem:[%s4 + $0x28] sm:$0xf]
      %v667 = vld [vmem:[%s4 + $0x2c] sm:$0xf]
      %v668 = vld [vmem:[%s4 + $0x30] sm:$0xf]
      %v669 = vld [vmem:[%s4 + $0x34] sm:$0xf]
      %v670 = vld [vmem:[%s4 + $0x38] sm:$0xf]
      %v671 = vld [vmem:[%s4 + $0x3c] sm:$0xf]
      %v672 = vld [vmem:[%s4 + $0x40] sm:$0xf]
      %v673 = vld [vmem:[%s4 + $0x44] sm:$0xf]
      %v674 = vld [vmem:[%s4 + $0x48] sm:$0xf]
      %v675 = vld [vmem:[%s4 + $0x4c] sm:$0xf]
      %v676 = vld [vmem:[%s4 + $0x50] sm:$0xf]
      %v677 = vld [vmem:[%s4 + $0x54] sm:$0xf]
      %v678 = vld [vmem:[%s4 + $0x58] sm:$0xf]
      %v679 = vld [vmem:[%s4 + $0x5c] sm:$0xf]
      %v680 = vld [vmem:[%s4 + $0x60] sm:$0xf]
      %v681 = vld [vmem:[%s4 + $0x64] sm:$0xf]
      %v682 = vld [vmem:[%s4 + $0x68] sm:$0xf]
      %v683 = vld [vmem:[%s4 + $0x6c] sm:$0xf]
      %v684 = vld [vmem:[%s4 + $0x70] sm:$0xf]
      %v685 = vld [vmem:[%s4 + $0x74] sm:$0xf]
      %v686 = vld [vmem:[%s4 + $0x78] sm:$0xf]
      %v687 = vld [vmem:[%s4 + $0x7c] sm:$0xf]
      %v688 = vpack.c.bf16 %v647, %v644
      %v689 = vpack.c.bf16 %v648, %v645
      %v690 = vpack.c.bf16 %v649, %v646
      %v691 = vpack.c.bf16 %v653, %v650
      %v692 = vpack.c.bf16 %v654, %v651
      %v693 = vpack.c.bf16 %v655, %v652
      %v726 = vunpack.c.l.b16 %v656
      %v727 = vunpack.c.l.b16 %v657
      %v728 = vunpack.c.l.b16 %v658
      %v729 = vunpack.c.l.b16 %v659
      %v730 = vunpack.c.l.b16 %v660
      %v731 = vunpack.c.l.b16 %v661
      %v732 = vunpack.c.l.b16 %v662
      %v733 = vunpack.c.l.b16 %v663
      %v734 = vunpack.c.l.b16 %v664
      %v735 = vunpack.c.l.b16 %v665
      %v736 = vunpack.c.l.b16 %v666
      %v737 = vunpack.c.l.b16 %v667
      %v738 = vunpack.c.l.b16 %v668
      %v739 = vunpack.c.l.b16 %v669
      %v740 = vunpack.c.l.b16 %v670
      %v741 = vunpack.c.l.b16 %v671
      %v742 = vunpack.c.l.b16 %v672
      %v743 = vunpack.c.l.b16 %v673
      %v744 = vunpack.c.l.b16 %v674
      %v745 = vunpack.c.l.b16 %v675
      %v746 = vunpack.c.l.b16 %v676
      %v747 = vunpack.c.l.b16 %v677
      %v748 = vunpack.c.l.b16 %v678
      %v749 = vunpack.c.l.b16 %v679
      %v750 = vunpack.c.l.b16 %v680
      %v751 = vunpack.c.l.b16 %v681
      %v752 = vunpack.c.l.b16 %v682
      %v753 = vunpack.c.l.b16 %v683
      %v754 = vunpack.c.l.b16 %v684
      %v755 = vunpack.c.l.b16 %v685
      %v756 = vunpack.c.l.b16 %v686
      %v757 = vunpack.c.l.b16 %v687
      %v758 = vpack.c.b16 %v727, %v726
      %v759 = vpack.c.b16 %v729, %v728
      %v760 = vpack.c.b16 %v731, %v730
      %v761 = vpack.c.b16 %v733, %v732
      %v762 = vpack.c.b16 %v735, %v734
      %v763 = vpack.c.b16 %v737, %v736
      %v764 = vpack.c.b16 %v739, %v738
      %v765 = vpack.c.b16 %v741, %v740
      %v766 = vpack.c.b16 %v743, %v742
      %v767 = vpack.c.b16 %v745, %v744
      %v768 = vpack.c.b16 %v747, %v746
      %v769 = vpack.c.b16 %v749, %v748
      %v770 = vpack.c.b16 %v751, %v750
      %v771 = vpack.c.b16 %v753, %v752
      %v772 = vpack.c.b16 %v755, %v754
      %v773 = vpack.c.b16 %v757, %v756
      %vm774 = vcmask 261120
      %v776 = vsel %vm774, %v758, 0
      %v779 = vsel %vm774, %v759, 0
      %v782 = vsel %vm774, %v760, 0
      %v785 = vsel %vm774, %v761, 0
      %v788 = vsel %vm774, %v762, 0
      %v791 = vsel %vm774, %v763, 0
      %v794 = vsel %vm774, %v764, 0
      %v797 = vsel %vm774, %v765, 0
      %v800 = vsel %vm774, %v766, 0
      %v803 = vsel %vm774, %v767, 0
      %v806 = vsel %vm774, %v768, 0
      %v809 = vsel %vm774, %v769, 0
      %v812 = vsel %vm774, %v770, 0
      %v815 = vsel %vm774, %v771, 0
      %v818 = vsel %vm774, %v772, 0
      %v821 = vsel %vm774, %v773, 0
      %823 = vmatprep.subr.bf16.mxu0 0
      %824 = vmatpush1.bf16.msra.mxu0 0
      %825 = vmatprep.subr.bf16.mxu0 0
      %826 = vmatpush1.bf16.msra.mxu0 0
      %827 = vmatprep.subr.bf16.mxu0 0
      %828 = vmatpush1.bf16.msra.mxu0 0
      %829 = vmatprep.subr.bf16.mxu0 0
      %830 = vmatpush1.bf16.msra.mxu0 0
      %831 = vmatprep.subr.bf16.mxu0 0
      %832 = vmatpush1.bf16.msra.mxu0 0
      %833 = vmatprep.subr.bf16.mxu0 0
      %834 = vmatpush1.bf16.msra.mxu0 0
      %835 = vmatprep.subr.bf16.mxu0 %v692
      %836 = vmatpush1.bf16.msra.mxu0 %v691
      %837 = vmatprep.subr.bf16.mxu0 %v689
      %838 = vmatpush1.bf16.msra.mxu0 %v688
      %839 = vmatprep.subr.bf16.mxu0 0
      %840 = vmatpush2.bf16.msra.mxu0 0
      %841 = vmatprep.subr.bf16.mxu0 0
      %842 = vmatpush2.bf16.msra.mxu0 0
      %843 = vmatprep.subr.bf16.mxu0 0
      %844 = vmatpush2.bf16.msra.mxu0 0
      %845 = vmatprep.subr.bf16.mxu0 0
      %846 = vmatpush2.bf16.msra.mxu0 0
      %847 = vmatprep.subr.bf16.mxu0 0
      %848 = vmatpush2.bf16.msra.mxu0 0
      %849 = vmatprep.subr.bf16.mxu0 0
      %850 = vmatpush2.bf16.msra.mxu0 0
      %851 = vmatprep.subr.bf16.mxu0 0
      %852 = vmatpush2.bf16.msra.mxu0 0
      %853 = vmatprep.subr.bf16.mxu0 0
      %854 = vmatpush2.bf16.msra.mxu0 0
      %855 = vmatprep.mubr.bf16.mxu0 0
      %856 = vmatmul.mubr.bf16.gmra.mxu0 %v776
      %v857 = vpop.f32.mrf.mxu0
      %v858 = vadd.f32 0.0, %v857
      %v859 = vpop.f32.mrf.mxu0
      %v860 = vadd.f32 0.0, %v859
      %v861 = vpop.f32.mrf.mxu0
      %v862 = vadd.f32 0.0, %v861
      %v863 = vpop.f32.mrf.mxu0
      %v864 = vadd.f32 0.0, %v863
      %865 = vmatprep.mubr.bf16.mxu0 0
      %866 = vmatmul.mubr.bf16.gmra.mxu0 %v779
      %v867 = vpop.f32.mrf.mxu0
      %v868 = vadd.f32 0.0, %v867
      %v869 = vpop.f32.mrf.mxu0
      %v870 = vadd.f32 0.0, %v869
      %v871 = vpop.f32.mrf.mxu0
      %v872 = vadd.f32 0.0, %v871
      %v873 = vpop.f32.mrf.mxu0
      %v874 = vadd.f32 0.0, %v873
      %875 = vmatprep.mubr.bf16.mxu0 0
      %876 = vmatmul.mubr.bf16.gmra.mxu0 %v782
      %v877 = vpop.f32.mrf.mxu0
      %v878 = vadd.f32 0.0, %v877
      %v879 = vpop.f32.mrf.mxu0
      %v880 = vadd.f32 0.0, %v879
      %v881 = vpop.f32.mrf.mxu0
      %v882 = vadd.f32 0.0, %v881
      %v883 = vpop.f32.mrf.mxu0
      %v884 = vadd.f32 0.0, %v883
      %885 = vmatprep.mubr.bf16.mxu0 0
      %886 = vmatmul.mubr.bf16.gmra.mxu0 %v785
      %v887 = vpop.f32.mrf.mxu0
      %v888 = vadd.f32 0.0, %v887
      %v889 = vpop.f32.mrf.mxu0
      %v890 = vadd.f32 0.0, %v889
      %v891 = vpop.f32.mrf.mxu0
      %v892 = vadd.f32 0.0, %v891
      %v893 = vpop.f32.mrf.mxu0
      %v894 = vadd.f32 0.0, %v893
      %895 = vmatprep.mubr.bf16.mxu0 0
      %896 = vmatmul.mubr.bf16.gmra.mxu0 %v788
      %v897 = vpop.f32.mrf.mxu0
      %v898 = vadd.f32 0.0, %v897
      %v899 = vpop.f32.mrf.mxu0
      %v900 = vadd.f32 0.0, %v899
      %v901 = vpop.f32.mrf.mxu0
      %v902 = vadd.f32 0.0, %v901
      %v903 = vpop.f32.mrf.mxu0
      %v904 = vadd.f32 0.0, %v903
      %905 = vmatprep.mubr.bf16.mxu0 0
      %906 = vmatmul.mubr.bf16.gmra.mxu0 %v791
      %v907 = vpop.f32.mrf.mxu0
      %v908 = vadd.f32 0.0, %v907
      %v909 = vpop.f32.mrf.mxu0
      %v910 = vadd.f32 0.0, %v909
      %v911 = vpop.f32.mrf.mxu0
      %v912 = vadd.f32 0.0, %v911
      %v913 = vpop.f32.mrf.mxu0
      %v914 = vadd.f32 0.0, %v913
      %915 = vmatprep.mubr.bf16.mxu0 0
      %916 = vmatmul.mubr.bf16.gmra.mxu0 %v794
      %v917 = vpop.f32.mrf.mxu0
      %v918 = vadd.f32 0.0, %v917
      %v919 = vpop.f32.mrf.mxu0
      %v920 = vadd.f32 0.0, %v919
      %v921 = vpop.f32.mrf.mxu0
      %v922 = vadd.f32 0.0, %v921
      %v923 = vpop.f32.mrf.mxu0
      %v924 = vadd.f32 0.0, %v923
      %925 = vmatprep.mubr.bf16.mxu0 0
      %926 = vmatmul.mubr.bf16.gmra.mxu0 %v797
      %v927 = vpop.f32.mrf.mxu0
      %v928 = vadd.f32 0.0, %v927
      %v929 = vpop.f32.mrf.mxu0
      %v930 = vadd.f32 0.0, %v929
      %v931 = vpop.f32.mrf.mxu0
      %v932 = vadd.f32 0.0, %v931
      %v933 = vpop.f32.mrf.mxu0
      %v934 = vadd.f32 0.0, %v933
      %935 = vmatprep.mubr.bf16.mxu0 0
      %936 = vmatmul.mubr.bf16.gmra.mxu0 %v800
      %v937 = vpop.f32.mrf.mxu0
      %v938 = vadd.f32 0.0, %v937
      %v939 = vpop.f32.mrf.mxu0
      %v940 = vadd.f32 0.0, %v939
      %v941 = vpop.f32.mrf.mxu0
      %v942 = vadd.f32 0.0, %v941
      %v943 = vpop.f32.mrf.mxu0
      %v944 = vadd.f32 0.0, %v943
      %945 = vmatprep.mubr.bf16.mxu0 0
      %946 = vmatmul.mubr.bf16.gmra.mxu0 %v803
      %v947 = vpop.f32.mrf.mxu0
      %v948 = vadd.f32 0.0, %v947
      %v949 = vpop.f32.mrf.mxu0
      %v950 = vadd.f32 0.0, %v949
      %v951 = vpop.f32.mrf.mxu0
      %v952 = vadd.f32 0.0, %v951
      %v953 = vpop.f32.mrf.mxu0
      %v954 = vadd.f32 0.0, %v953
      %955 = vmatprep.mubr.bf16.mxu0 0
      %956 = vmatmul.mubr.bf16.gmra.mxu0 %v806
      %v957 = vpop.f32.mrf.mxu0
      %v958 = vadd.f32 0.0, %v957
      %v959 = vpop.f32.mrf.mxu0
      %v960 = vadd.f32 0.0, %v959
      %v961 = vpop.f32.mrf.mxu0
      %v962 = vadd.f32 0.0, %v961
      %v963 = vpop.f32.mrf.mxu0
      %v964 = vadd.f32 0.0, %v963
      %965 = vmatprep.mubr.bf16.mxu0 0
      %966 = vmatmul.mubr.bf16.gmra.mxu0 %v809
      %v967 = vpop.f32.mrf.mxu0
      %v968 = vadd.f32 0.0, %v967
      %v969 = vpop.f32.mrf.mxu0
      %v970 = vadd.f32 0.0, %v969
      %v971 = vpop.f32.mrf.mxu0
      %v972 = vadd.f32 0.0, %v971
      %v973 = vpop.f32.mrf.mxu0
      %v974 = vadd.f32 0.0, %v973
      %975 = vmatprep.mubr.bf16.mxu0 0
      %976 = vmatmul.mubr.bf16.gmra.mxu0 %v812
      %v977 = vpop.f32.mrf.mxu0
      %v978 = vadd.f32 0.0, %v977
      %v979 = vpop.f32.mrf.mxu0
      %v980 = vadd.f32 0.0, %v979
      %v981 = vpop.f32.mrf.mxu0
      %v982 = vadd.f32 0.0, %v981
      %v983 = vpop.f32.mrf.mxu0
      %v984 = vadd.f32 0.0, %v983
      %985 = vmatprep.mubr.bf16.mxu0 0
      %986 = vmatmul.mubr.bf16.gmra.mxu0 %v815
      %v987 = vpop.f32.mrf.mxu0
      %v988 = vadd.f32 0.0, %v987
      %v989 = vpop.f32.mrf.mxu0
      %v990 = vadd.f32 0.0, %v989
      %v991 = vpop.f32.mrf.mxu0
      %v992 = vadd.f32 0.0, %v991
      %v993 = vpop.f32.mrf.mxu0
      %v994 = vadd.f32 0.0, %v993
      %995 = vmatprep.mubr.bf16.mxu0 0
      %996 = vmatmul.mubr.bf16.gmra.mxu0 %v818
      %v997 = vpop.f32.mrf.mxu0
      %v998 = vadd.f32 0.0, %v997
      %v999 = vpop.f32.mrf.mxu0
      %v1000 = vadd.f32 0.0, %v999
      %v1001 = vpop.f32.mrf.mxu0
      %v1002 = vadd.f32 0.0, %v1001
      %v1003 = vpop.f32.mrf.mxu0
      %v1004 = vadd.f32 0.0, %v1003
      %1005 = vmatprep.mubr.bf16.mxu0 0
      %1006 = vmatmul.mubr.bf16.gmra.mxu0 %v821
      %v1007 = vpop.f32.mrf.mxu0
      %v1008 = vadd.f32 0.0, %v1007
      %v1009 = vpop.f32.mrf.mxu0
      %v1010 = vadd.f32 0.0, %v1009
      %v1011 = vpop.f32.mrf.mxu0
      %v1012 = vadd.f32 0.0, %v1011
      %v1013 = vpop.f32.mrf.mxu0
      %v1014 = vadd.f32 0.0, %v1013
      %1015 = vdwg.mxu0
      %1016 = vmatprep.subr.bf16.mxu0 0
      %1017 = vmatpush1.bf16.msra.mxu0 0
      %1018 = vmatprep.subr.bf16.mxu0 0
      %1019 = vmatpush1.bf16.msra.mxu0 0
      %1020 = vmatprep.subr.bf16.mxu0 0
      %1021 = vmatpush1.bf16.msra.mxu0 0
      %1022 = vmatprep.subr.bf16.mxu0 0
      %1023 = vmatpush1.bf16.msra.mxu0 0
      %1024 = vmatprep.subr.bf16.mxu0 0
      %1025 = vmatpush1.bf16.msra.mxu0 0
      %1026 = vmatprep.subr.bf16.mxu0 0
      %1027 = vmatpush1.bf16.msra.mxu0 0
      %1028 = vmatprep.subr.bf16.mxu0 0
      %1029 = vmatpush1.bf16.msra.mxu0 %v693
      %1030 = vmatprep.subr.bf16.mxu0 0
      %1031 = vmatpush1.bf16.msra.mxu0 %v690
      %1032 = vmatprep.subr.bf16.mxu0 0
      %1033 = vmatpush2.bf16.msra.mxu0 0
      %1034 = vmatprep.subr.bf16.mxu0 0
      %1035 = vmatpush2.bf16.msra.mxu0 0
      %1036 = vmatprep.subr.bf16.mxu0 0
      %1037 = vmatpush2.bf16.msra.mxu0 0
      %1038 = vmatprep.subr.bf16.mxu0 0
      %1039 = vmatpush2.bf16.msra.mxu0 0
      %1040 = vmatprep.subr.bf16.mxu0 0
      %1041 = vmatpush2.bf16.msra.mxu0 0
      %1042 = vmatprep.subr.bf16.mxu0 0
      %1043 = vmatpush2.bf16.msra.mxu0 0
      %1044 = vmatprep.subr.bf16.mxu0 0
      %1045 = vmatpush2.bf16.msra.mxu0 0
      %1046 = vmatprep.subr.bf16.mxu0 0
      %1047 = vmatpush2.bf16.msra.mxu0 0
      %1048 = vmatprep.mubr.bf16.mxu0 0
      %1049 = vmatmul.mubr.bf16.gmra.mxu0 %v776
      %v1050 = vpop.f32.mrf.mxu0
      %v1051 = vadd.f32 0.0, %v1050
      %v1052 = vpop.f32.mrf.mxu0
      %v1053 = vpop.f32.mrf.mxu0
      %v1054 = vadd.f32 0.0, %v1053
      %v1055 = vpop.f32.mrf.mxu0
      %1056 = vmatprep.mubr.bf16.mxu0 0
      %1057 = vmatmul.mubr.bf16.gmra.mxu0 %v779
      %v1058 = vpop.f32.mrf.mxu0
      %v1059 = vadd.f32 0.0, %v1058
      %v1060 = vpop.f32.mrf.mxu0
      %v1061 = vpop.f32.mrf.mxu0
      %v1062 = vadd.f32 0.0, %v1061
      %v1063 = vpop.f32.mrf.mxu0
      %1064 = vmatprep.mubr.bf16.mxu0 0
      %1065 = vmatmul.mubr.bf16.gmra.mxu0 %v782
      %v1066 = vpop.f32.mrf.mxu0
      %v1067 = vadd.f32 0.0, %v1066
      %v1068 = vpop.f32.mrf.mxu0
      %v1069 = vpop.f32.mrf.mxu0
      %v1070 = vadd.f32 0.0, %v1069
      %v1071 = vpop.f32.mrf.mxu0
      %1072 = vmatprep.mubr.bf16.mxu0 0
      %1073 = vmatmul.mubr.bf16.gmra.mxu0 %v785
      %v1074 = vpop.f32.mrf.mxu0
      %v1075 = vadd.f32 0.0, %v1074
      %v1076 = vpop.f32.mrf.mxu0
      %v1077 = vpop.f32.mrf.mxu0
      %v1078 = vadd.f32 0.0, %v1077
      %v1079 = vpop.f32.mrf.mxu0
      %1080 = vmatprep.mubr.bf16.mxu0 0
      %1081 = vmatmul.mubr.bf16.gmra.mxu0 %v788
      %v1082 = vpop.f32.mrf.mxu0
      %v1083 = vadd.f32 0.0, %v1082
      %v1084 = vpop.f32.mrf.mxu0
      %v1085 = vpop.f32.mrf.mxu0
      %v1086 = vadd.f32 0.0, %v1085
      %v1087 = vpop.f32.mrf.mxu0
      %1088 = vmatprep.mubr.bf16.mxu0 0
      %1089 = vmatmul.mubr.bf16.gmra.mxu0 %v791
      %v1090 = vpop.f32.mrf.mxu0
      %v1091 = vadd.f32 0.0, %v1090
      %v1092 = vpop.f32.mrf.mxu0
      %v1093 = vpop.f32.mrf.mxu0
      %v1094 = vadd.f32 0.0, %v1093
      %v1095 = vpop.f32.mrf.mxu0
      %1096 = vmatprep.mubr.bf16.mxu0 0
      %1097 = vmatmul.mubr.bf16.gmra.mxu0 %v794
      %v1098 = vpop.f32.mrf.mxu0
      %v1099 = vadd.f32 0.0, %v1098
      %v1100 = vpop.f32.mrf.mxu0
      %v1101 = vpop.f32.mrf.mxu0
      %v1102 = vadd.f32 0.0, %v1101
      %v1103 = vpop.f32.mrf.mxu0
      %1104 = vmatprep.mubr.bf16.mxu0 0
      %1105 = vmatmul.mubr.bf16.gmra.mxu0 %v797
      %v1106 = vpop.f32.mrf.mxu0
      %v1107 = vadd.f32 0.0, %v1106
      %v1108 = vpop.f32.mrf.mxu0
      %v1109 = vpop.f32.mrf.mxu0
      %v1110 = vadd.f32 0.0, %v1109
      %v1111 = vpop.f32.mrf.mxu0
      %1112 = vmatprep.mubr.bf16.mxu0 0
      %1113 = vmatmul.mubr.bf16.gmra.mxu0 %v800
      %v1114 = vpop.f32.mrf.mxu0
      %v1115 = vadd.f32 0.0, %v1114
      %v1116 = vpop.f32.mrf.mxu0
      %v1117 = vpop.f32.mrf.mxu0
      %v1118 = vadd.f32 0.0, %v1117
      %v1119 = vpop.f32.mrf.mxu0
      %1120 = vmatprep.mubr.bf16.mxu0 0
      %1121 = vmatmul.mubr.bf16.gmra.mxu0 %v803
      %v1122 = vpop.f32.mrf.mxu0
      %v1123 = vadd.f32 0.0, %v1122
      %v1124 = vpop.f32.mrf.mxu0
      %v1125 = vpop.f32.mrf.mxu0
      %v1126 = vadd.f32 0.0, %v1125
      %v1127 = vpop.f32.mrf.mxu0
      %1128 = vmatprep.mubr.bf16.mxu0 0
      %1129 = vmatmul.mubr.bf16.gmra.mxu0 %v806
      %v1130 = vpop.f32.mrf.mxu0
      %v1131 = vadd.f32 0.0, %v1130
      %v1132 = vpop.f32.mrf.mxu0
      %v1133 = vpop.f32.mrf.mxu0
      %v1134 = vadd.f32 0.0, %v1133
      %v1135 = vpop.f32.mrf.mxu0
      %1136 = vmatprep.mubr.bf16.mxu0 0
      %1137 = vmatmul.mubr.bf16.gmra.mxu0 %v809
      %v1138 = vpop.f32.mrf.mxu0
      %v1139 = vadd.f32 0.0, %v1138
      %v1140 = vpop.f32.mrf.mxu0
      %v1141 = vpop.f32.mrf.mxu0
      %v1142 = vadd.f32 0.0, %v1141
      %v1143 = vpop.f32.mrf.mxu0
      %1144 = vmatprep.mubr.bf16.mxu0 0
      %1145 = vmatmul.mubr.bf16.gmra.mxu0 %v812
      %v1146 = vpop.f32.mrf.mxu0
      %v1147 = vadd.f32 0.0, %v1146
      %v1148 = vpop.f32.mrf.mxu0
      %v1149 = vpop.f32.mrf.mxu0
      %v1150 = vadd.f32 0.0, %v1149
      %v1151 = vpop.f32.mrf.mxu0
      %1152 = vmatprep.mubr.bf16.mxu0 0
      %1153 = vmatmul.mubr.bf16.gmra.mxu0 %v815
      %v1154 = vpop.f32.mrf.mxu0
      %v1155 = vadd.f32 0.0, %v1154
      %v1156 = vpop.f32.mrf.mxu0
      %v1157 = vpop.f32.mrf.mxu0
      %v1158 = vadd.f32 0.0, %v1157
      %v1159 = vpop.f32.mrf.mxu0
      %1160 = vmatprep.mubr.bf16.mxu0 0
      %1161 = vmatmul.mubr.bf16.gmra.mxu0 %v818
      %v1162 = vpop.f32.mrf.mxu0
      %v1163 = vadd.f32 0.0, %v1162
      %v1164 = vpop.f32.mrf.mxu0
      %v1165 = vpop.f32.mrf.mxu0
      %v1166 = vadd.f32 0.0, %v1165
      %v1167 = vpop.f32.mrf.mxu0
      %1168 = vmatprep.mubr.bf16.mxu0 0
      %1169 = vmatmul.mubr.bf16.gmra.mxu0 %v821
      %v1170 = vpop.f32.mrf.mxu0
      %v1171 = vadd.f32 0.0, %v1170
      %v1172 = vpop.f32.mrf.mxu0
      %v1173 = vpop.f32.mrf.mxu0
      %v1174 = vadd.f32 0.0, %v1173
      %v1175 = vpop.f32.mrf.mxu0
      %1176 = vdwg.mxu0
      %v1177 = vmul.f32 %v858, %v858
      %v1178 = vmul.f32 %v862, %v862
      %v1179 = vmul.f32 %v868, %v868
      %v1180 = vmul.f32 %v872, %v872
      %v1181 = vmul.f32 %v878, %v878
      %v1182 = vmul.f32 %v882, %v882
      %v1183 = vmul.f32 %v888, %v888
      %v1184 = vmul.f32 %v892, %v892
      %v1185 = vmul.f32 %v898, %v898
      %v1186 = vmul.f32 %v902, %v902
      %v1187 = vmul.f32 %v908, %v908
      %v1188 = vmul.f32 %v912, %v912
      %v1189 = vmul.f32 %v918, %v918
      %v1190 = vmul.f32 %v922, %v922
      %v1191 = vmul.f32 %v928, %v928
      %v1192 = vmul.f32 %v932, %v932
      %v1193 = vmul.f32 %v938, %v938
      %v1194 = vmul.f32 %v942, %v942
      %v1195 = vmul.f32 %v948, %v948
      %v1196 = vmul.f32 %v952, %v952
      %v1197 = vmul.f32 %v958, %v958
      %v1198 = vmul.f32 %v962, %v962
      %v1199 = vmul.f32 %v968, %v968
      %v1200 = vmul.f32 %v972, %v972
      %v1201 = vmul.f32 %v978, %v978
      %v1202 = vmul.f32 %v982, %v982
      %v1203 = vmul.f32 %v988, %v988
      %v1204 = vmul.f32 %v992, %v992
      %v1205 = vmul.f32 %v998, %v998
      %v1206 = vmul.f32 %v1002, %v1002
      %v1207 = vmul.f32 %v1008, %v1008
      %v1208 = vmul.f32 %v1012, %v1012
      %v1209 = vadd.f32 %v858, %v860
      %v1210 = vadd.f32 %v862, %v864
      %v1211 = vadd.f32 %v868, %v870
      %v1212 = vadd.f32 %v872, %v874
      %v1213 = vadd.f32 %v878, %v880
      %v1214 = vadd.f32 %v882, %v884
      %v1215 = vadd.f32 %v888, %v890
      %v1216 = vadd.f32 %v892, %v894
      %v1217 = vadd.f32 %v898, %v900
      %v1218 = vadd.f32 %v902, %v904
      %v1219 = vadd.f32 %v908, %v910
      %v1220 = vadd.f32 %v912, %v914
      %v1221 = vadd.f32 %v918, %v920
      %v1222 = vadd.f32 %v922, %v924
      %v1223 = vadd.f32 %v928, %v930
      %v1224 = vadd.f32 %v932, %v934
      %v1225 = vadd.f32 %v938, %v940
      %v1226 = vadd.f32 %v942, %v944
      %v1227 = vadd.f32 %v948, %v950
      %v1228 = vadd.f32 %v952, %v954
      %v1229 = vadd.f32 %v958, %v960
      %v1230 = vadd.f32 %v962, %v964
      %v1231 = vadd.f32 %v968, %v970
      %v1232 = vadd.f32 %v972, %v974
      %v1233 = vadd.f32 %v978, %v980
      %v1234 = vadd.f32 %v982, %v984
      %v1235 = vadd.f32 %v988, %v990
      %v1236 = vadd.f32 %v992, %v994
      %v1237 = vadd.f32 %v998, %v1000
      %v1238 = vadd.f32 %v1002, %v1004
      %v1239 = vadd.f32 %v1008, %v1010
      %v1240 = vadd.f32 %v1012, %v1014
      %v1241 = vmul.f32 %v860, %v860
      %v1242 = vmul.f32 %v864, %v864
      %v1243 = vmul.f32 %v870, %v870
      %v1244 = vmul.f32 %v874, %v874
      %v1245 = vmul.f32 %v880, %v880
      %v1246 = vmul.f32 %v884, %v884
      %v1247 = vmul.f32 %v890, %v890
      %v1248 = vmul.f32 %v894, %v894
      %v1249 = vmul.f32 %v900, %v900
      %v1250 = vmul.f32 %v904, %v904
      %v1251 = vmul.f32 %v910, %v910
      %v1252 = vmul.f32 %v914, %v914
      %v1253 = vmul.f32 %v920, %v920
      %v1254 = vmul.f32 %v924, %v924
      %v1255 = vmul.f32 %v930, %v930
      %v1256 = vmul.f32 %v934, %v934
      %v1257 = vmul.f32 %v940, %v940
      %v1258 = vmul.f32 %v944, %v944
      %v1259 = vmul.f32 %v950, %v950
      %v1260 = vmul.f32 %v954, %v954
      %v1261 = vmul.f32 %v960, %v960
      %v1262 = vmul.f32 %v964, %v964
      %v1263 = vmul.f32 %v970, %v970
      %v1264 = vmul.f32 %v974, %v974
      %v1265 = vmul.f32 %v980, %v980
      %v1266 = vmul.f32 %v984, %v984
      %v1267 = vmul.f32 %v990, %v990
      %v1268 = vmul.f32 %v994, %v994
      %v1269 = vmul.f32 %v1000, %v1000
      %v1270 = vmul.f32 %v1004, %v1004
      %v1271 = vmul.f32 %v1010, %v1010
      %v1272 = vmul.f32 %v1014, %v1014
      %v1273 = vadd.f32 %v1177, %v1241
      %v1274 = vadd.f32 %v1178, %v1242
      %v1275 = vadd.f32 %v1179, %v1243
      %v1276 = vadd.f32 %v1180, %v1244
      %v1277 = vadd.f32 %v1181, %v1245
      %v1278 = vadd.f32 %v1182, %v1246
      %v1279 = vadd.f32 %v1183, %v1247
      %v1280 = vadd.f32 %v1184, %v1248
      %v1281 = vadd.f32 %v1185, %v1249
      %v1282 = vadd.f32 %v1186, %v1250
      %v1283 = vadd.f32 %v1187, %v1251
      %v1284 = vadd.f32 %v1188, %v1252
      %v1285 = vadd.f32 %v1189, %v1253
      %v1286 = vadd.f32 %v1190, %v1254
      %v1287 = vadd.f32 %v1191, %v1255
      %v1288 = vadd.f32 %v1192, %v1256
      %v1289 = vadd.f32 %v1193, %v1257
      %v1290 = vadd.f32 %v1194, %v1258
      %v1291 = vadd.f32 %v1195, %v1259
      %v1292 = vadd.f32 %v1196, %v1260
      %v1293 = vadd.f32 %v1197, %v1261
      %v1294 = vadd.f32 %v1198, %v1262
      %v1295 = vadd.f32 %v1199, %v1263
      %v1296 = vadd.f32 %v1200, %v1264
      %v1297 = vadd.f32 %v1201, %v1265
      %v1298 = vadd.f32 %v1202, %v1266
      %v1299 = vadd.f32 %v1203, %v1267
      %v1300 = vadd.f32 %v1204, %v1268
      %v1301 = vadd.f32 %v1205, %v1269
      %v1302 = vadd.f32 %v1206, %v1270
      %v1303 = vadd.f32 %v1207, %v1271
      %v1304 = vadd.f32 %v1208, %v1272
      %v1305 = vmax.f32 %v858, %v860
      %v1306 = vmax.f32 %v862, %v864
      %v1307 = vmax.f32 %v868, %v870
      %v1308 = vmax.f32 %v872, %v874
      %v1309 = vmax.f32 %v878, %v880
      %v1310 = vmax.f32 %v882, %v884
      %v1311 = vmax.f32 %v888, %v890
      %v1312 = vmax.f32 %v892, %v894
      %v1313 = vmax.f32 %v898, %v900
      %v1314 = vmax.f32 %v902, %v904
      %v1315 = vmax.f32 %v908, %v910
      %v1316 = vmax.f32 %v912, %v914
      %v1317 = vmax.f32 %v918, %v920
      %v1318 = vmax.f32 %v922, %v924
      %v1319 = vmax.f32 %v928, %v930
      %v1320 = vmax.f32 %v932, %v934
      %v1321 = vmax.f32 %v938, %v940
      %v1322 = vmax.f32 %v942, %v944
      %v1323 = vmax.f32 %v948, %v950
      %v1324 = vmax.f32 %v952, %v954
      %v1325 = vmax.f32 %v958, %v960
      %v1326 = vmax.f32 %v962, %v964
      %v1327 = vmax.f32 %v968, %v970
      %v1328 = vmax.f32 %v972, %v974
      %v1329 = vmax.f32 %v978, %v980
      %v1330 = vmax.f32 %v982, %v984
      %v1331 = vmax.f32 %v988, %v990
      %v1332 = vmax.f32 %v992, %v994
      %v1333 = vmax.f32 %v998, %v1000
      %v1334 = vmax.f32 %v1002, %v1004
      %v1335 = vmax.f32 %v1008, %v1010
      %v1336 = vmax.f32 %v1012, %v1014
      %v1337 = vmin.f32 %v858, %v860
      %v1338 = vmin.f32 %v862, %v864
      %v1339 = vmin.f32 %v868, %v870
      %v1340 = vmin.f32 %v872, %v874
      %v1341 = vmin.f32 %v878, %v880
      %v1342 = vmin.f32 %v882, %v884
      %v1343 = vmin.f32 %v888, %v890
      %v1344 = vmin.f32 %v892, %v894
      %v1345 = vmin.f32 %v898, %v900
      %v1346 = vmin.f32 %v902, %v904
      %v1347 = vmin.f32 %v908, %v910
      %v1348 = vmin.f32 %v912, %v914
      %v1349 = vmin.f32 %v918, %v920
      %v1350 = vmin.f32 %v922, %v924
      %v1351 = vmin.f32 %v928, %v930
      %v1352 = vmin.f32 %v932, %v934
      %v1353 = vmin.f32 %v938, %v940
      %v1354 = vmin.f32 %v942, %v944
      %v1355 = vmin.f32 %v948, %v950
      %v1356 = vmin.f32 %v952, %v954
      %v1357 = vmin.f32 %v958, %v960
      %v1358 = vmin.f32 %v962, %v964
      %v1359 = vmin.f32 %v968, %v970
      %v1360 = vmin.f32 %v972, %v974
      %v1361 = vmin.f32 %v978, %v980
      %v1362 = vmin.f32 %v982, %v984
      %v1363 = vmin.f32 %v988, %v990
      %v1364 = vmin.f32 %v992, %v994
      %v1365 = vmin.f32 %v998, %v1000
      %v1366 = vmin.f32 %v1002, %v1004
      %v1367 = vmin.f32 %v1008, %v1010
      %v1368 = vmin.f32 %v1012, %v1014
      %v1369 = vadd.f32 %v1209, %v1051
      %v1370 = vadd.f32 %v1210, %v1054
      %v1371 = vadd.f32 %v1211, %v1059
      %v1372 = vadd.f32 %v1212, %v1062
      %v1373 = vadd.f32 %v1213, %v1067
      %v1374 = vadd.f32 %v1214, %v1070
      %v1375 = vadd.f32 %v1215, %v1075
      %v1376 = vadd.f32 %v1216, %v1078
      %v1377 = vadd.f32 %v1217, %v1083
      %v1378 = vadd.f32 %v1218, %v1086
      %v1379 = vadd.f32 %v1219, %v1091
      %v1380 = vadd.f32 %v1220, %v1094
      %v1381 = vadd.f32 %v1221, %v1099
      %v1382 = vadd.f32 %v1222, %v1102
      %v1383 = vadd.f32 %v1223, %v1107
      %v1384 = vadd.f32 %v1224, %v1110
      %v1385 = vadd.f32 %v1225, %v1115
      %v1386 = vadd.f32 %v1226, %v1118
      %v1387 = vadd.f32 %v1227, %v1123
      %v1388 = vadd.f32 %v1228, %v1126
      %v1389 = vadd.f32 %v1229, %v1131
      %v1390 = vadd.f32 %v1230, %v1134
      %v1391 = vadd.f32 %v1231, %v1139
      %v1392 = vadd.f32 %v1232, %v1142
      %v1393 = vadd.f32 %v1233, %v1147
      %v1394 = vadd.f32 %v1234, %v1150
      %v1395 = vadd.f32 %v1235, %v1155
      %v1396 = vadd.f32 %v1236, %v1158
      %v1397 = vadd.f32 %v1237, %v1163
      %v1398 = vadd.f32 %v1238, %v1166
      %v1399 = vadd.f32 %v1239, %v1171
      %v1400 = vadd.f32 %v1240, %v1174
      %v1401 = vmul.f32 %v1051, %v1051
      %v1402 = vmul.f32 %v1054, %v1054
      %v1403 = vmul.f32 %v1059, %v1059
      %v1404 = vmul.f32 %v1062, %v1062
      %v1405 = vmul.f32 %v1067, %v1067
      %v1406 = vmul.f32 %v1070, %v1070
      %v1407 = vmul.f32 %v1075, %v1075
      %v1408 = vmul.f32 %v1078, %v1078
      %v1409 = vmul.f32 %v1083, %v1083
      %v1410 = vmul.f32 %v1086, %v1086
      %v1411 = vmul.f32 %v1091, %v1091
      %v1412 = vmul.f32 %v1094, %v1094
      %v1413 = vmul.f32 %v1099, %v1099
      %v1414 = vmul.f32 %v1102, %v1102
      %v1415 = vmul.f32 %v1107, %v1107
      %v1416 = vmul.f32 %v1110, %v1110
      %v1417 = vmul.f32 %v1115, %v1115
      %v1418 = vmul.f32 %v1118, %v1118
      %v1419 = vmul.f32 %v1123, %v1123
      %v1420 = vmul.f32 %v1126, %v1126
      %v1421 = vmul.f32 %v1131, %v1131
      %v1422 = vmul.f32 %v1134, %v1134
      %v1423 = vmul.f32 %v1139, %v1139
      %v1424 = vmul.f32 %v1142, %v1142
      %v1425 = vmul.f32 %v1147, %v1147
      %v1426 = vmul.f32 %v1150, %v1150
      %v1427 = vmul.f32 %v1155, %v1155
      %v1428 = vmul.f32 %v1158, %v1158
      %v1429 = vmul.f32 %v1163, %v1163
      %v1430 = vmul.f32 %v1166, %v1166
      %v1431 = vmul.f32 %v1171, %v1171
      %v1432 = vmul.f32 %v1174, %v1174
      %v1433 = vadd.f32 %v1273, %v1401
      %v1434 = vadd.f32 %v1274, %v1402
      %v1435 = vadd.f32 %v1275, %v1403
      %v1436 = vadd.f32 %v1276, %v1404
      %v1437 = vadd.f32 %v1277, %v1405
      %v1438 = vadd.f32 %v1278, %v1406
      %v1439 = vadd.f32 %v1279, %v1407
      %v1440 = vadd.f32 %v1280, %v1408
      %v1441 = vadd.f32 %v1281, %v1409
      %v1442 = vadd.f32 %v1282, %v1410
      %v1443 = vadd.f32 %v1283, %v1411
      %v1444 = vadd.f32 %v1284, %v1412
      %v1445 = vadd.f32 %v1285, %v1413
      %v1446 = vadd.f32 %v1286, %v1414
      %v1447 = vadd.f32 %v1287, %v1415
      %v1448 = vadd.f32 %v1288, %v1416
      %v1449 = vadd.f32 %v1289, %v1417
      %v1450 = vadd.f32 %v1290, %v1418
      %v1451 = vadd.f32 %v1291, %v1419
      %v1452 = vadd.f32 %v1292, %v1420
      %v1453 = vadd.f32 %v1293, %v1421
      %v1454 = vadd.f32 %v1294, %v1422
      %v1455 = vadd.f32 %v1295, %v1423
      %v1456 = vadd.f32 %v1296, %v1424
      %v1457 = vadd.f32 %v1297, %v1425
      %v1458 = vadd.f32 %v1298, %v1426
      %v1459 = vadd.f32 %v1299, %v1427
      %v1460 = vadd.f32 %v1300, %v1428
      %v1461 = vadd.f32 %v1301, %v1429
      %v1462 = vadd.f32 %v1302, %v1430
      %v1463 = vadd.f32 %v1303, %v1431
      %v1464 = vadd.f32 %v1304, %v1432
      %v1465 = vmax.f32 %v1305, %v1051
      %v1466 = vmax.f32 %v1306, %v1054
      %v1467 = vmax.f32 %v1307, %v1059
      %v1468 = vmax.f32 %v1308, %v1062
      %v1469 = vmax.f32 %v1309, %v1067
      %v1470 = vmax.f32 %v1310, %v1070
      %v1471 = vmax.f32 %v1311, %v1075
      %v1472 = vmax.f32 %v1312, %v1078
      %v1473 = vmax.f32 %v1313, %v1083
      %v1474 = vmax.f32 %v1314, %v1086
      %v1475 = vmax.f32 %v1315, %v1091
      %v1476 = vmax.f32 %v1316, %v1094
      %v1477 = vmax.f32 %v1317, %v1099
      %v1478 = vmax.f32 %v1318, %v1102
      %v1479 = vmax.f32 %v1319, %v1107
      %v1480 = vmax.f32 %v1320, %v1110
      %v1481 = vmax.f32 %v1321, %v1115
      %v1482 = vmax.f32 %v1322, %v1118
      %v1483 = vmax.f32 %v1323, %v1123
      %v1484 = vmax.f32 %v1324, %v1126
      %v1485 = vmax.f32 %v1325, %v1131
      %v1486 = vmax.f32 %v1326, %v1134
      %v1487 = vmax.f32 %v1327, %v1139
      %v1488 = vmax.f32 %v1328, %v1142
      %v1489 = vmax.f32 %v1329, %v1147
      %v1490 = vmax.f32 %v1330, %v1150
      %v1491 = vmax.f32 %v1331, %v1155
      %v1492 = vmax.f32 %v1332, %v1158
      %v1493 = vmax.f32 %v1333, %v1163
      %v1494 = vmax.f32 %v1334, %v1166
      %v1495 = vmax.f32 %v1335, %v1171
      %v1496 = vmax.f32 %v1336, %v1174
      %v1497 = vmin.f32 %v1337, %v1051
      %v1498 = vmin.f32 %v1338, %v1054
      %v1499 = vmin.f32 %v1339, %v1059
      %v1500 = vmin.f32 %v1340, %v1062
      %v1501 = vmin.f32 %v1341, %v1067
      %v1502 = vmin.f32 %v1342, %v1070
      %v1503 = vmin.f32 %v1343, %v1075
      %v1504 = vmin.f32 %v1344, %v1078
      %v1505 = vmin.f32 %v1345, %v1083
      %v1506 = vmin.f32 %v1346, %v1086
      %v1507 = vmin.f32 %v1347, %v1091
      %v1508 = vmin.f32 %v1348, %v1094
      %v1509 = vmin.f32 %v1349, %v1099
      %v1510 = vmin.f32 %v1350, %v1102
      %v1511 = vmin.f32 %v1351, %v1107
      %v1512 = vmin.f32 %v1352, %v1110
      %v1513 = vmin.f32 %v1353, %v1115
      %v1514 = vmin.f32 %v1354, %v1118
      %v1515 = vmin.f32 %v1355, %v1123
      %v1516 = vmin.f32 %v1356, %v1126
      %v1517 = vmin.f32 %v1357, %v1131
      %v1518 = vmin.f32 %v1358, %v1134
      %v1519 = vmin.f32 %v1359, %v1139
      %v1520 = vmin.f32 %v1360, %v1142
      %v1521 = vmin.f32 %v1361, %v1147
      %v1522 = vmin.f32 %v1362, %v1150
      %v1523 = vmin.f32 %v1363, %v1155
      %v1524 = vmin.f32 %v1364, %v1158
      %v1525 = vmin.f32 %v1365, %v1163
      %v1526 = vmin.f32 %v1366, %v1166
      %v1527 = vmin.f32 %v1367, %v1171
      %v1528 = vmin.f32 %v1368, %v1174
      %p1529 = scmp.eq.s32.totalorder %s25, 0
      // Predicated region
      $region41: #{pointnet_encoder.6} parent=39 // pred_check
        %p1530 = pneg %p1529
      $region42: #{pointnet_encoder.6} parent=39 // pred_check_branch
        %1532 = sbr.rel (%p1530) target = $region44
      $region43: #{pointnet_encoder.6} parent=39 // pred_region
        %1533 = vst [vmem:[#allocation2] sm:$0xff] 0.0
        %1534 = vst [vmem:[#allocation2 + $0x8] sm:$0xff] 0.0
        %1535 = vst [vmem:[#allocation2 + $0x10] sm:$0xff] 0.0
        %1536 = vst [vmem:[#allocation2 + $0x18] sm:$0xff] 0.0
        %1537 = vst [vmem:[#allocation2 + $0x20] sm:$0xff] 0.0
        %1538 = vst [vmem:[#allocation2 + $0x28] sm:$0xff] 0.0
        %1539 = vst [vmem:[#allocation2 + $0x30] sm:$0xff] 0.0
        %1540 = vst [vmem:[#allocation2 + $0x38] sm:$0xff] 0.0
        %1541 = vst [vmem:[#allocation2 + $0x40] sm:$0xff] 0.0
        %1542 = vst [vmem:[#allocation2 + $0x48] sm:$0xff] 0.0
        %1543 = vst [vmem:[#allocation2 + $0x50] sm:$0xff] 0.0
        %1544 = vst [vmem:[#allocation2 + $0x58] sm:$0xff] 0.0
        %1545 = vst [vmem:[#allocation2 + $0x60] sm:$0xff] 0.0
        %1546 = vst [vmem:[#allocation2 + $0x68] sm:$0xff] 0.0
        %1547 = vst [vmem:[#allocation2 + $0x70] sm:$0xff] 0.0
        %1548 = vst [vmem:[#allocation2 + $0x78] sm:$0xff] 0.0
        %1549 = vst [vmem:[#allocation2 + $0x80] sm:$0xff] 0.0
        %1550 = vst [vmem:[#allocation2 + $0x88] sm:$0xff] 0.0
        %1551 = vst [vmem:[#allocation2 + $0x90] sm:$0xff] 0.0
        %1552 = vst [vmem:[#allocation2 + $0x98] sm:$0xff] 0.0
        %1553 = vst [vmem:[#allocation2 + $0xa0] sm:$0xff] 0.0
        %1554 = vst [vmem:[#allocation2 + $0xa8] sm:$0xff] 0.0
        %1555 = vst [vmem:[#allocation2 + $0xb0] sm:$0xff] 0.0
        %1556 = vst [vmem:[#allocation2 + $0xb8] sm:$0xff] 0.0
        %1557 = vst [vmem:[#allocation2 + $0xc0] sm:$0xff] 0.0
        %1558 = vst [vmem:[#allocation2 + $0xc8] sm:$0xff] 0.0
        %1559 = vst [vmem:[#allocation2 + $0xd0] sm:$0xff] 0.0
        %1560 = vst [vmem:[#allocation2 + $0xd8] sm:$0xff] 0.0
        %1561 = vst [vmem:[#allocation2 + $0xe0] sm:$0xff] 0.0
        %1562 = vst [vmem:[#allocation2 + $0xe8] sm:$0xff] 0.0
        %1563 = vst [vmem:[#allocation2 + $0xf0] sm:$0xff] 0.0
        %1564 = vst [vmem:[#allocation2 + $0xf8] sm:$0xff] 0.0
        %1565 = vst [vmem:[#allocation3] sm:$0xff] 0.0
        %1566 = vst [vmem:[#allocation3 + $0x8] sm:$0xff] 0.0
        %1567 = vst [vmem:[#allocation3 + $0x10] sm:$0xff] 0.0
        %1568 = vst [vmem:[#allocation3 + $0x18] sm:$0xff] 0.0
        %1569 = vst [vmem:[#allocation3 + $0x20] sm:$0xff] 0.0
        %1570 = vst [vmem:[#allocation3 + $0x28] sm:$0xff] 0.0
        %1571 = vst [vmem:[#allocation3 + $0x30] sm:$0xff] 0.0
        %1572 = vst [vmem:[#allocation3 + $0x38] sm:$0xff] 0.0
        %1573 = vst [vmem:[#allocation3 + $0x40] sm:$0xff] 0.0
        %1574 = vst [vmem:[#allocation3 + $0x48] sm:$0xff] 0.0
        %1575 = vst [vmem:[#allocation3 + $0x50] sm:$0xff] 0.0
        %1576 = vst [vmem:[#allocation3 + $0x58] sm:$0xff] 0.0
        %1577 = vst [vmem:[#allocation3 + $0x60] sm:$0xff] 0.0
        %1578 = vst [vmem:[#allocation3 + $0x68] sm:$0xff] 0.0
        %1579 = vst [vmem:[#allocation3 + $0x70] sm:$0xff] 0.0
        %1580 = vst [vmem:[#allocation3 + $0x78] sm:$0xff] 0.0
        %1581 = vst [vmem:[#allocation3 + $0x80] sm:$0xff] 0.0
        %1582 = vst [vmem:[#allocation3 + $0x88] sm:$0xff] 0.0
        %1583 = vst [vmem:[#allocation3 + $0x90] sm:$0xff] 0.0
        %1584 = vst [vmem:[#allocation3 + $0x98] sm:$0xff] 0.0
        %1585 = vst [vmem:[#allocation3 + $0xa0] sm:$0xff] 0.0
        %1586 = vst [vmem:[#allocation3 + $0xa8] sm:$0xff] 0.0
        %1587 = vst [vmem:[#allocation3 + $0xb0] sm:$0xff] 0.0
        %1588 = vst [vmem:[#allocation3 + $0xb8] sm:$0xff] 0.0
        %1589 = vst [vmem:[#allocation3 + $0xc0] sm:$0xff] 0.0
        %1590 = vst [vmem:[#allocation3 + $0xc8] sm:$0xff] 0.0
        %1591 = vst [vmem:[#allocation3 + $0xd0] sm:$0xff] 0.0
        %1592 = vst [vmem:[#allocation3 + $0xd8] sm:$0xff] 0.0
        %1593 = vst [vmem:[#allocation3 + $0xe0] sm:$0xff] 0.0
        %1594 = vst [vmem:[#allocation3 + $0xe8] sm:$0xff] 0.0
        %1595 = vst [vmem:[#allocation3 + $0xf0] sm:$0xff] 0.0
        %1596 = vst [vmem:[#allocation3 + $0xf8] sm:$0xff] 0.0
        %1597 = vst [vmem:[#allocation4] sm:$0xff] -inf
        %1598 = vst [vmem:[#allocation4 + $0x8] sm:$0xff] -inf
        %1599 = vst [vmem:[#allocation4 + $0x10] sm:$0xff] -inf
        %1600 = vst [vmem:[#allocation4 + $0x18] sm:$0xff] -inf
        %1601 = vst [vmem:[#allocation4 + $0x20] sm:$0xff] -inf
        %1602 = vst [vmem:[#allocation4 + $0x28] sm:$0xff] -inf
        %1603 = vst [vmem:[#allocation4 + $0x30] sm:$0xff] -inf
        %1604 = vst [vmem:[#allocation4 + $0x38] sm:$0xff] -inf
        %1605 = vst [vmem:[#allocation4 + $0x40] sm:$0xff] -inf
        %1606 = vst [vmem:[#allocation4 + $0x48] sm:$0xff] -inf
        %1607 = vst [vmem:[#allocation4 + $0x50] sm:$0xff] -inf
        %1608 = vst [vmem:[#allocation4 + $0x58] sm:$0xff] -inf
        %1609 = vst [vmem:[#allocation4 + $0x60] sm:$0xff] -inf
        %1610 = vst [vmem:[#allocation4 + $0x68] sm:$0xff] -inf
        %1611 = vst [vmem:[#allocation4 + $0x70] sm:$0xff] -inf
        %1612 = vst [vmem:[#allocation4 + $0x78] sm:$0xff] -inf
        %1613 = vst [vmem:[#allocation4 + $0x80] sm:$0xff] -inf
        %1614 = vst [vmem:[#allocation4 + $0x88] sm:$0xff] -inf
        %1615 = vst [vmem:[#allocation4 + $0x90] sm:$0xff] -inf
        %1616 = vst [vmem:[#allocation4 + $0x98] sm:$0xff] -inf
        %1617 = vst [vmem:[#allocation4 + $0xa0] sm:$0xff] -inf
        %1618 = vst [vmem:[#allocation4 + $0xa8] sm:$0xff] -inf
        %1619 = vst [vmem:[#allocation4 + $0xb0] sm:$0xff] -inf
        %1620 = vst [vmem:[#allocation4 + $0xb8] sm:$0xff] -inf
        %1621 = vst [vmem:[#allocation4 + $0xc0] sm:$0xff] -inf
        %1622 = vst [vmem:[#allocation4 + $0xc8] sm:$0xff] -inf
        %1623 = vst [vmem:[#allocation4 + $0xd0] sm:$0xff] -inf
        %1624 = vst [vmem:[#allocation4 + $0xd8] sm:$0xff] -inf
        %1625 = vst [vmem:[#allocation4 + $0xe0] sm:$0xff] -inf
        %1626 = vst [vmem:[#allocation4 + $0xe8] sm:$0xff] -inf
        %1627 = vst [vmem:[#allocation4 + $0xf0] sm:$0xff] -inf
        %1628 = vst [vmem:[#allocation4 + $0xf8] sm:$0xff] -inf
        %1629 = vst [vmem:[#allocation5] sm:$0xff] inf
        %1630 = vst [vmem:[#allocation5 + $0x8] sm:$0xff] inf
        %1631 = vst [vmem:[#allocation5 + $0x10] sm:$0xff] inf
        %1632 = vst [vmem:[#allocation5 + $0x18] sm:$0xff] inf
        %1633 = vst [vmem:[#allocation5 + $0x20] sm:$0xff] inf
        %1634 = vst [vmem:[#allocation5 + $0x28] sm:$0xff] inf
        %1635 = vst [vmem:[#allocation5 + $0x30] sm:$0xff] inf
        %1636 = vst [vmem:[#allocation5 + $0x38] sm:$0xff] inf
        %1637 = vst [vmem:[#allocation5 + $0x40] sm:$0xff] inf
        %1638 = vst [vmem:[#allocation5 + $0x48] sm:$0xff] inf
        %1639 = vst [vmem:[#allocation5 + $0x50] sm:$0xff] inf
        %1640 = vst [vmem:[#allocation5 + $0x58] sm:$0xff] inf
        %1641 = vst [vmem:[#allocation5 + $0x60] sm:$0xff] inf
        %1642 = vst [vmem:[#allocation5 + $0x68] sm:$0xff] inf
        %1643 = vst [vmem:[#allocation5 + $0x70] sm:$0xff] inf
        %1644 = vst [vmem:[#allocation5 + $0x78] sm:$0xff] inf
        %1645 = vst [vmem:[#allocation5 + $0x80] sm:$0xff] inf
        %1646 = vst [vmem:[#allocation5 + $0x88] sm:$0xff] inf
        %1647 = vst [vmem:[#allocation5 + $0x90] sm:$0xff] inf
        %1648 = vst [vmem:[#allocation5 + $0x98] sm:$0xff] inf
        %1649 = vst [vmem:[#allocation5 + $0xa0] sm:$0xff] inf
        %1650 = vst [vmem:[#allocation5 + $0xa8] sm:$0xff] inf
        %1651 = vst [vmem:[#allocation5 + $0xb0] sm:$0xff] inf
        %1652 = vst [vmem:[#allocation5 + $0xb8] sm:$0xff] inf
        %1653 = vst [vmem:[#allocation5 + $0xc0] sm:$0xff] inf
        %1654 = vst [vmem:[#allocation5 + $0xc8] sm:$0xff] inf
        %1655 = vst [vmem:[#allocation5 + $0xd0] sm:$0xff] inf
        %1656 = vst [vmem:[#allocation5 + $0xd8] sm:$0xff] inf
        %1657 = vst [vmem:[#allocation5 + $0xe0] sm:$0xff] inf
        %1658 = vst [vmem:[#allocation5 + $0xe8] sm:$0xff] inf
        %1659 = vst [vmem:[#allocation5 + $0xf0] sm:$0xff] inf
        %1660 = vst [vmem:[#allocation5 + $0xf8] sm:$0xff] inf
      $region44: #{pointnet_encoder.6} parent=39 // pred_fallthru
        _
      %v1661 = vld [vmem:[#allocation2] sm:$0xff]
      %v1662 = vld [vmem:[#allocation2 + $0x8] sm:$0xff]
      %v1663 = vld [vmem:[#allocation2 + $0x10] sm:$0xff]
      %v1664 = vld [vmem:[#allocation2 + $0x18] sm:$0xff]
      %v1665 = vld [vmem:[#allocation2 + $0x20] sm:$0xff]
      %v1666 = vld [vmem:[#allocation2 + $0x28] sm:$0xff]
      %v1667 = vld [vmem:[#allocation2 + $0x30] sm:$0xff]
      %v1668 = vld [vmem:[#allocation2 + $0x38] sm:$0xff]
      %v1669 = vld [vmem:[#allocation2 + $0x40] sm:$0xff]
      %v1670 = vld [vmem:[#allocation2 + $0x48] sm:$0xff]
      %v1671 = vld [vmem:[#allocation2 + $0x50] sm:$0xff]
      %v1672 = vld [vmem:[#allocation2 + $0x58] sm:$0xff]
      %v1673 = vld [vmem:[#allocation2 + $0x60] sm:$0xff]
      %v1674 = vld [vmem:[#allocation2 + $0x68] sm:$0xff]
      %v1675 = vld [vmem:[#allocation2 + $0x70] sm:$0xff]
      %v1676 = vld [vmem:[#allocation2 + $0x78] sm:$0xff]
      %v1677 = vld [vmem:[#allocation2 + $0x80] sm:$0xff]
      %v1678 = vld [vmem:[#allocation2 + $0x88] sm:$0xff]
      %v1679 = vld [vmem:[#allocation2 + $0x90] sm:$0xff]
      %v1680 = vld [vmem:[#allocation2 + $0x98] sm:$0xff]
      %v1681 = vld [vmem:[#allocation2 + $0xa0] sm:$0xff]
      %v1682 = vld [vmem:[#allocation2 + $0xa8] sm:$0xff]
      %v1683 = vld [vmem:[#allocation2 + $0xb0] sm:$0xff]
      %v1684 = vld [vmem:[#allocation2 + $0xb8] sm:$0xff]
      %v1685 = vld [vmem:[#allocation2 + $0xc0] sm:$0xff]
      %v1686 = vld [vmem:[#allocation2 + $0xc8] sm:$0xff]
      %v1687 = vld [vmem:[#allocation2 + $0xd0] sm:$0xff]
      %v1688 = vld [vmem:[#allocation2 + $0xd8] sm:$0xff]
      %v1689 = vld [vmem:[#allocation2 + $0xe0] sm:$0xff]
      %v1690 = vld [vmem:[#allocation2 + $0xe8] sm:$0xff]
      %v1691 = vld [vmem:[#allocation2 + $0xf0] sm:$0xff]
      %v1692 = vld [vmem:[#allocation2 + $0xf8] sm:$0xff]
      %v1693 = vadd.f32 %v1661, %v1369
      %v1694 = vadd.f32 %v1662, %v1370
      %v1695 = vadd.f32 %v1663, %v1371
      %v1696 = vadd.f32 %v1664, %v1372
      %v1697 = vadd.f32 %v1665, %v1373
      %v1698 = vadd.f32 %v1666, %v1374
      %v1699 = vadd.f32 %v1667, %v1375
      %v1700 = vadd.f32 %v1668, %v1376
      %v1701 = vadd.f32 %v1669, %v1377
      %v1702 = vadd.f32 %v1670, %v1378
      %v1703 = vadd.f32 %v1671, %v1379
      %v1704 = vadd.f32 %v1672, %v1380
      %v1705 = vadd.f32 %v1673, %v1381
      %v1706 = vadd.f32 %v1674, %v1382
      %v1707 = vadd.f32 %v1675, %v1383
      %v1708 = vadd.f32 %v1676, %v1384
      %v1709 = vadd.f32 %v1677, %v1385
      %v1710 = vadd.f32 %v1678, %v1386
      %v1711 = vadd.f32 %v1679, %v1387
      %v1712 = vadd.f32 %v1680, %v1388
      %v1713 = vadd.f32 %v1681, %v1389
      %v1714 = vadd.f32 %v1682, %v1390
      %v1715 = vadd.f32 %v1683, %v1391
      %v1716 = vadd.f32 %v1684, %v1392
      %v1717 = vadd.f32 %v1685, %v1393
      %v1718 = vadd.f32 %v1686, %v1394
      %v1719 = vadd.f32 %v1687, %v1395
      %v1720 = vadd.f32 %v1688, %v1396
      %v1721 = vadd.f32 %v1689, %v1397
      %v1722 = vadd.f32 %v1690, %v1398
      %v1723 = vadd.f32 %v1691, %v1399
      %v1724 = vadd.f32 %v1692, %v1400
      %1725 = vst [vmem:[#allocation2] sm:$0xff] %v1693
      %1726 = vst [vmem:[#allocation2 + $0x8] sm:$0xff] %v1694
      %1727 = vst [vmem:[#allocation2 + $0x10] sm:$0xff] %v1695
      %1728 = vst [vmem:[#allocation2 + $0x18] sm:$0xff] %v1696
      %1729 = vst [vmem:[#allocation2 + $0x20] sm:$0xff] %v1697
      %1730 = vst [vmem:[#allocation2 + $0x28] sm:$0xff] %v1698
      %1731 = vst [vmem:[#allocation2 + $0x30] sm:$0xff] %v1699
      %1732 = vst [vmem:[#allocation2 + $0x38] sm:$0xff] %v1700
      %1733 = vst [vmem:[#allocation2 + $0x40] sm:$0xff] %v1701
      %1734 = vst [vmem:[#allocation2 + $0x48] sm:$0xff] %v1702
      %1735 = vst [vmem:[#allocation2 + $0x50] sm:$0xff] %v1703
      %1736 = vst [vmem:[#allocation2 + $0x58] sm:$0xff] %v1704
      %1737 = vst [vmem:[#allocation2 + $0x60] sm:$0xff] %v1705
      %1738 = vst [vmem:[#allocation2 + $0x68] sm:$0xff] %v1706
      %1739 = vst [vmem:[#allocation2 + $0x70] sm:$0xff] %v1707
      %1740 = vst [vmem:[#allocation2 + $0x78] sm:$0xff] %v1708
      %1741 = vst [vmem:[#allocation2 + $0x80] sm:$0xff] %v1709
      %1742 = vst [vmem:[#allocation2 + $0x88] sm:$0xff] %v1710
      %1743 = vst [vmem:[#allocation2 + $0x90] sm:$0xff] %v1711
      %1744 = vst [vmem:[#allocation2 + $0x98] sm:$0xff] %v1712
      %1745 = vst [vmem:[#allocation2 + $0xa0] sm:$0xff] %v1713
      %1746 = vst [vmem:[#allocation2 + $0xa8] sm:$0xff] %v1714
      %1747 = vst [vmem:[#allocation2 + $0xb0] sm:$0xff] %v1715
      %1748 = vst [vmem:[#allocation2 + $0xb8] sm:$0xff] %v1716
      %1749 = vst [vmem:[#allocation2 + $0xc0] sm:$0xff] %v1717
      %1750 = vst [vmem:[#allocation2 + $0xc8] sm:$0xff] %v1718
      %1751 = vst [vmem:[#allocation2 + $0xd0] sm:$0xff] %v1719
      %1752 = vst [vmem:[#allocation2 + $0xd8] sm:$0xff] %v1720
      %1753 = vst [vmem:[#allocation2 + $0xe0] sm:$0xff] %v1721
      %1754 = vst [vmem:[#allocation2 + $0xe8] sm:$0xff] %v1722
      %1755 = vst [vmem:[#allocation2 + $0xf0] sm:$0xff] %v1723
      %1756 = vst [vmem:[#allocation2 + $0xf8] sm:$0xff] %v1724
      %v1757 = vld [vmem:[#allocation3] sm:$0xff]
      %v1758 = vld [vmem:[#allocation3 + $0x8] sm:$0xff]
      %v1759 = vld [vmem:[#allocation3 + $0x10] sm:$0xff]
      %v1760 = vld [vmem:[#allocation3 + $0x18] sm:$0xff]
      %v1761 = vld [vmem:[#allocation3 + $0x20] sm:$0xff]
      %v1762 = vld [vmem:[#allocation3 + $0x28] sm:$0xff]
      %v1763 = vld [vmem:[#allocation3 + $0x30] sm:$0xff]
      %v1764 = vld [vmem:[#allocation3 + $0x38] sm:$0xff]
      %v1765 = vld [vmem:[#allocation3 + $0x40] sm:$0xff]
      %v1766 = vld [vmem:[#allocation3 + $0x48] sm:$0xff]
      %v1767 = vld [vmem:[#allocation3 + $0x50] sm:$0xff]
      %v1768 = vld [vmem:[#allocation3 + $0x58] sm:$0xff]
      %v1769 = vld [vmem:[#allocation3 + $0x60] sm:$0xff]
      %v1770 = vld [vmem:[#allocation3 + $0x68] sm:$0xff]
      %v1771 = vld [vmem:[#allocation3 + $0x70] sm:$0xff]
      %v1772 = vld [vmem:[#allocation3 + $0x78] sm:$0xff]
      %v1773 = vld [vmem:[#allocation3 + $0x80] sm:$0xff]
      %v1774 = vld [vmem:[#allocation3 + $0x88] sm:$0xff]
      %v1775 = vld [vmem:[#allocation3 + $0x90] sm:$0xff]
      %v1776 = vld [vmem:[#allocation3 + $0x98] sm:$0xff]
      %v1777 = vld [vmem:[#allocation3 + $0xa0] sm:$0xff]
      %v1778 = vld [vmem:[#allocation3 + $0xa8] sm:$0xff]
      %v1779 = vld [vmem:[#allocation3 + $0xb0] sm:$0xff]
      %v1780 = vld [vmem:[#allocation3 + $0xb8] sm:$0xff]
      %v1781 = vld [vmem:[#allocation3 + $0xc0] sm:$0xff]
      %v1782 = vld [vmem:[#allocation3 + $0xc8] sm:$0xff]
      %v1783 = vld [vmem:[#allocation3 + $0xd0] sm:$0xff]
      %v1784 = vld [vmem:[#allocation3 + $0xd8] sm:$0xff]
      %v1785 = vld [vmem:[#allocation3 + $0xe0] sm:$0xff]
      %v1786 = vld [vmem:[#allocation3 + $0xe8] sm:$0xff]
      %v1787 = vld [vmem:[#allocation3 + $0xf0] sm:$0xff]
      %v1788 = vld [vmem:[#allocation3 + $0xf8] sm:$0xff]
      %v1789 = vadd.f32 %v1757, %v1433
      %v1790 = vadd.f32 %v1758, %v1434
      %v1791 = vadd.f32 %v1759, %v1435
      %v1792 = vadd.f32 %v1760, %v1436
      %v1793 = vadd.f32 %v1761, %v1437
      %v1794 = vadd.f32 %v1762, %v1438
      %v1795 = vadd.f32 %v1763, %v1439
      %v1796 = vadd.f32 %v1764, %v1440
      %v1797 = vadd.f32 %v1765, %v1441
      %v1798 = vadd.f32 %v1766, %v1442
      %v1799 = vadd.f32 %v1767, %v1443
      %v1800 = vadd.f32 %v1768, %v1444
      %v1801 = vadd.f32 %v1769, %v1445
      %v1802 = vadd.f32 %v1770, %v1446
      %v1803 = vadd.f32 %v1771, %v1447
      %v1804 = vadd.f32 %v1772, %v1448
      %v1805 = vadd.f32 %v1773, %v1449
      %v1806 = vadd.f32 %v1774, %v1450
      %v1807 = vadd.f32 %v1775, %v1451
      %v1808 = vadd.f32 %v1776, %v1452
      %v1809 = vadd.f32 %v1777, %v1453
      %v1810 = vadd.f32 %v1778, %v1454
      %v1811 = vadd.f32 %v1779, %v1455
      %v1812 = vadd.f32 %v1780, %v1456
      %v1813 = vadd.f32 %v1781, %v1457
      %v1814 = vadd.f32 %v1782, %v1458
      %v1815 = vadd.f32 %v1783, %v1459
      %v1816 = vadd.f32 %v1784, %v1460
      %v1817 = vadd.f32 %v1785, %v1461
      %v1818 = vadd.f32 %v1786, %v1462
      %v1819 = vadd.f32 %v1787, %v1463
      %v1820 = vadd.f32 %v1788, %v1464
      %1821 = vst [vmem:[#allocation3] sm:$0xff] %v1789
      %1822 = vst [vmem:[#allocation3 + $0x8] sm:$0xff] %v1790
      %1823 = vst [vmem:[#allocation3 + $0x10] sm:$0xff] %v1791
      %1824 = vst [vmem:[#allocation3 + $0x18] sm:$0xff] %v1792
      %1825 = vst [vmem:[#allocation3 + $0x20] sm:$0xff] %v1793
      %1826 = vst [vmem:[#allocation3 + $0x28] sm:$0xff] %v1794
      %1827 = vst [vmem:[#allocation3 + $0x30] sm:$0xff] %v1795
      %1828 = vst [vmem:[#allocation3 + $0x38] sm:$0xff] %v1796
      %1829 = vst [vmem:[#allocation3 + $0x40] sm:$0xff] %v1797
      %1830 = vst [vmem:[#allocation3 + $0x48] sm:$0xff] %v1798
      %1831 = vst [vmem:[#allocation3 + $0x50] sm:$0xff] %v1799
      %1832 = vst [vmem:[#allocation3 + $0x58] sm:$0xff] %v1800
      %1833 = vst [vmem:[#allocation3 + $0x60] sm:$0xff] %v1801
      %1834 = vst [vmem:[#allocation3 + $0x68] sm:$0xff] %v1802
      %1835 = vst [vmem:[#allocation3 + $0x70] sm:$0xff] %v1803
      %1836 = vst [vmem:[#allocation3 + $0x78] sm:$0xff] %v1804
      %1837 = vst [vmem:[#allocation3 + $0x80] sm:$0xff] %v1805
      %1838 = vst [vmem:[#allocation3 + $0x88] sm:$0xff] %v1806
      %1839 = vst [vmem:[#allocation3 + $0x90] sm:$0xff] %v1807
      %1840 = vst [vmem:[#allocation3 + $0x98] sm:$0xff] %v1808
      %1841 = vst [vmem:[#allocation3 + $0xa0] sm:$0xff] %v1809
      %1842 = vst [vmem:[#allocation3 + $0xa8] sm:$0xff] %v1810
      %1843 = vst [vmem:[#allocation3 + $0xb0] sm:$0xff] %v1811
      %1844 = vst [vmem:[#allocation3 + $0xb8] sm:$0xff] %v1812
      %1845 = vst [vmem:[#allocation3 + $0xc0] sm:$0xff] %v1813
      %1846 = vst [vmem:[#allocation3 + $0xc8] sm:$0xff] %v1814
      %1847 = vst [vmem:[#allocation3 + $0xd0] sm:$0xff] %v1815
      %1848 = vst [vmem:[#allocation3 + $0xd8] sm:$0xff] %v1816
      %1849 = vst [vmem:[#allocation3 + $0xe0] sm:$0xff] %v1817
      %1850 = vst [vmem:[#allocation3 + $0xe8] sm:$0xff] %v1818
      %1851 = vst [vmem:[#allocation3 + $0xf0] sm:$0xff] %v1819
      %1852 = vst [vmem:[#allocation3 + $0xf8] sm:$0xff] %v1820
      %v1853 = vld [vmem:[#allocation4] sm:$0xff]
      %v1854 = vld [vmem:[#allocation4 + $0x8] sm:$0xff]
      %v1855 = vld [vmem:[#allocation4 + $0x10] sm:$0xff]
      %v1856 = vld [vmem:[#allocation4 + $0x18] sm:$0xff]
      %v1857 = vld [vmem:[#allocation4 + $0x20] sm:$0xff]
      %v1858 = vld [vmem:[#allocation4 + $0x28] sm:$0xff]
      %v1859 = vld [vmem:[#allocation4 + $0x30] sm:$0xff]
      %v1860 = vld [vmem:[#allocation4 + $0x38] sm:$0xff]
      %v1861 = vld [vmem:[#allocation4 + $0x40] sm:$0xff]
      %v1862 = vld [vmem:[#allocation4 + $0x48] sm:$0xff]
      %v1863 = vld [vmem:[#allocation4 + $0x50] sm:$0xff]
      %v1864 = vld [vmem:[#allocation4 + $0x58] sm:$0xff]
      %v1865 = vld [vmem:[#allocation4 + $0x60] sm:$0xff]
      %v1866 = vld [vmem:[#allocation4 + $0x68] sm:$0xff]
      %v1867 = vld [vmem:[#allocation4 + $0x70] sm:$0xff]
      %v1868 = vld [vmem:[#allocation4 + $0x78] sm:$0xff]
      %v1869 = vld [vmem:[#allocation4 + $0x80] sm:$0xff]
      %v1870 = vld [vmem:[#allocation4 + $0x88] sm:$0xff]
      %v1871 = vld [vmem:[#allocation4 + $0x90] sm:$0xff]
      %v1872 = vld [vmem:[#allocation4 + $0x98] sm:$0xff]
      %v1873 = vld [vmem:[#allocation4 + $0xa0] sm:$0xff]
      %v1874 = vld [vmem:[#allocation4 + $0xa8] sm:$0xff]
      %v1875 = vld [vmem:[#allocation4 + $0xb0] sm:$0xff]
      %v1876 = vld [vmem:[#allocation4 + $0xb8] sm:$0xff]
      %v1877 = vld [vmem:[#allocation4 + $0xc0] sm:$0xff]
      %v1878 = vld [vmem:[#allocation4 + $0xc8] sm:$0xff]
      %v1879 = vld [vmem:[#allocation4 + $0xd0] sm:$0xff]
      %v1880 = vld [vmem:[#allocation4 + $0xd8] sm:$0xff]
      %v1881 = vld [vmem:[#allocation4 + $0xe0] sm:$0xff]
      %v1882 = vld [vmem:[#allocation4 + $0xe8] sm:$0xff]
      %v1883 = vld [vmem:[#allocation4 + $0xf0] sm:$0xff]
      %v1884 = vld [vmem:[#allocation4 + $0xf8] sm:$0xff]
      %v1885 = vmax.f32 %v1853, %v1465
      %v1886 = vmax.f32 %v1854, %v1466
      %v1887 = vmax.f32 %v1855, %v1467
      %v1888 = vmax.f32 %v1856, %v1468
      %v1889 = vmax.f32 %v1857, %v1469
      %v1890 = vmax.f32 %v1858, %v1470
      %v1891 = vmax.f32 %v1859, %v1471
      %v1892 = vmax.f32 %v1860, %v1472
      %v1893 = vmax.f32 %v1861, %v1473
      %v1894 = vmax.f32 %v1862, %v1474
      %v1895 = vmax.f32 %v1863, %v1475
      %v1896 = vmax.f32 %v1864, %v1476
      %v1897 = vmax.f32 %v1865, %v1477
      %v1898 = vmax.f32 %v1866, %v1478
      %v1899 = vmax.f32 %v1867, %v1479
      %v1900 = vmax.f32 %v1868, %v1480
      %v1901 = vmax.f32 %v1869, %v1481
      %v1902 = vmax.f32 %v1870, %v1482
      %v1903 = vmax.f32 %v1871, %v1483
      %v1904 = vmax.f32 %v1872, %v1484
      %v1905 = vmax.f32 %v1873, %v1485
      %v1906 = vmax.f32 %v1874, %v1486
      %v1907 = vmax.f32 %v1875, %v1487
      %v1908 = vmax.f32 %v1876, %v1488
      %v1909 = vmax.f32 %v1877, %v1489
      %v1910 = vmax.f32 %v1878, %v1490
      %v1911 = vmax.f32 %v1879, %v1491
      %v1912 = vmax.f32 %v1880, %v1492
      %v1913 = vmax.f32 %v1881, %v1493
      %v1914 = vmax.f32 %v1882, %v1494
      %v1915 = vmax.f32 %v1883, %v1495
      %v1916 = vmax.f32 %v1884, %v1496
      %1917 = vst [vmem:[#allocation4] sm:$0xff] %v1885
      %1918 = vst [vmem:[#allocation4 + $0x8] sm:$0xff] %v1886
      %1919 = vst [vmem:[#allocation4 + $0x10] sm:$0xff] %v1887
      %1920 = vst [vmem:[#allocation4 + $0x18] sm:$0xff] %v1888
      %1921 = vst [vmem:[#allocation4 + $0x20] sm:$0xff] %v1889
      %1922 = vst [vmem:[#allocation4 + $0x28] sm:$0xff] %v1890
      %1923 = vst [vmem:[#allocation4 + $0x30] sm:$0xff] %v1891
      %1924 = vst [vmem:[#allocation4 + $0x38] sm:$0xff] %v1892
      %1925 = vst [vmem:[#allocation4 + $0x40] sm:$0xff] %v1893
      %1926 = vst [vmem:[#allocation4 + $0x48] sm:$0xff] %v1894
      %1927 = vst [vmem:[#allocation4 + $0x50] sm:$0xff] %v1895
      %1928 = vst [vmem:[#allocation4 + $0x58] sm:$0xff] %v1896
      %1929 = vst [vmem:[#allocation4 + $0x60] sm:$0xff] %v1897
      %1930 = vst [vmem:[#allocation4 + $0x68] sm:$0xff] %v1898
      %1931 = vst [vmem:[#allocation4 + $0x70] sm:$0xff] %v1899
      %1932 = vst [vmem:[#allocation4 + $0x78] sm:$0xff] %v1900
      %1933 = vst [vmem:[#allocation4 + $0x80] sm:$0xff] %v1901
      %1934 = vst [vmem:[#allocation4 + $0x88] sm:$0xff] %v1902
      %1935 = vst [vmem:[#allocation4 + $0x90] sm:$0xff] %v1903
      %1936 = vst [vmem:[#allocation4 + $0x98] sm:$0xff] %v1904
      %1937 = vst [vmem:[#allocation4 + $0xa0] sm:$0xff] %v1905
      %1938 = vst [vmem:[#allocation4 + $0xa8] sm:$0xff] %v1906
      %1939 = vst [vmem:[#allocation4 + $0xb0] sm:$0xff] %v1907
      %1940 = vst [vmem:[#allocation4 + $0xb8] sm:$0xff] %v1908
      %1941 = vst [vmem:[#allocation4 + $0xc0] sm:$0xff] %v1909
      %1942 = vst [vmem:[#allocation4 + $0xc8] sm:$0xff] %v1910
      %1943 = vst [vmem:[#allocation4 + $0xd0] sm:$0xff] %v1911
      %1944 = vst [vmem:[#allocation4 + $0xd8] sm:$0xff] %v1912
      %1945 = vst [vmem:[#allocation4 + $0xe0] sm:$0xff] %v1913
      %1946 = vst [vmem:[#allocation4 + $0xe8] sm:$0xff] %v1914
      %1947 = vst [vmem:[#allocation4 + $0xf0] sm:$0xff] %v1915
      %1948 = vst [vmem:[#allocation4 + $0xf8] sm:$0xff] %v1916
      %v1949 = vld [vmem:[#allocation5] sm:$0xff]
      %v1950 = vld [vmem:[#allocation5 + $0x8] sm:$0xff]
      %v1951 = vld [vmem:[#allocation5 + $0x10] sm:$0xff]
      %v1952 = vld [vmem:[#allocation5 + $0x18] sm:$0xff]
      %v1953 = vld [vmem:[#allocation5 + $0x20] sm:$0xff]
      %v1954 = vld [vmem:[#allocation5 + $0x28] sm:$0xff]
      %v1955 = vld [vmem:[#allocation5 + $0x30] sm:$0xff]
      %v1956 = vld [vmem:[#allocation5 + $0x38] sm:$0xff]
      %v1957 = vld [vmem:[#allocation5 + $0x40] sm:$0xff]
      %v1958 = vld [vmem:[#allocation5 + $0x48] sm:$0xff]
      %v1959 = vld [vmem:[#allocation5 + $0x50] sm:$0xff]
      %v1960 = vld [vmem:[#allocation5 + $0x58] sm:$0xff]
      %v1961 = vld [vmem:[#allocation5 + $0x60] sm:$0xff]
      %v1962 = vld [vmem:[#allocation5 + $0x68] sm:$0xff]
      %v1963 = vld [vmem:[#allocation5 + $0x70] sm:$0xff]
      %v1964 = vld [vmem:[#allocation5 + $0x78] sm:$0xff]
      %v1965 = vld [vmem:[#allocation5 + $0x80] sm:$0xff]
      %v1966 = vld [vmem:[#allocation5 + $0x88] sm:$0xff]
      %v1967 = vld [vmem:[#allocation5 + $0x90] sm:$0xff]
      %v1968 = vld [vmem:[#allocation5 + $0x98] sm:$0xff]
      %v1969 = vld [vmem:[#allocation5 + $0xa0] sm:$0xff]
      %v1970 = vld [vmem:[#allocation5 + $0xa8] sm:$0xff]
      %v1971 = vld [vmem:[#allocation5 + $0xb0] sm:$0xff]
      %v1972 = vld [vmem:[#allocation5 + $0xb8] sm:$0xff]
      %v1973 = vld [vmem:[#allocation5 + $0xc0] sm:$0xff]
      %v1974 = vld [vmem:[#allocation5 + $0xc8] sm:$0xff]
      %v1975 = vld [vmem:[#allocation5 + $0xd0] sm:$0xff]
      %v1976 = vld [vmem:[#allocation5 + $0xd8] sm:$0xff]
      %v1977 = vld [vmem:[#allocation5 + $0xe0] sm:$0xff]
      %v1978 = vld [vmem:[#allocation5 + $0xe8] sm:$0xff]
      %v1979 = vld [vmem:[#allocation5 + $0xf0] sm:$0xff]
      %v1980 = vld [vmem:[#allocation5 + $0xf8] sm:$0xff]
      %v1981 = vmin.f32 %v1949, %v1497
      %v1982 = vmin.f32 %v1950, %v1498
      %v1983 = vmin.f32 %v1951, %v1499
      %v1984 = vmin.f32 %v1952, %v1500
      %v1985 = vmin.f32 %v1953, %v1501
      %v1986 = vmin.f32 %v1954, %v1502
      %v1987 = vmin.f32 %v1955, %v1503
      %v1988 = vmin.f32 %v1956, %v1504
      %v1989 = vmin.f32 %v1957, %v1505
      %v1990 = vmin.f32 %v1958, %v1506
      %v1991 = vmin.f32 %v1959, %v1507
      %v1992 = vmin.f32 %v1960, %v1508
      %v1993 = vmin.f32 %v1961, %v1509
      %v1994 = vmin.f32 %v1962, %v1510
      %v1995 = vmin.f32 %v1963, %v1511
      %v1996 = vmin.f32 %v1964, %v1512
      %v1997 = vmin.f32 %v1965, %v1513
      %v1998 = vmin.f32 %v1966, %v1514
      %v1999 = vmin.f32 %v1967, %v1515
      %v2000 = vmin.f32 %v1968, %v1516
      %v2001 = vmin.f32 %v1969, %v1517
      %v2002 = vmin.f32 %v1970, %v1518
      %v2003 = vmin.f32 %v1971, %v1519
      %v2004 = vmin.f32 %v1972, %v1520
      %v2005 = vmin.f32 %v1973, %v1521
      %v2006 = vmin.f32 %v1974, %v1522
      %v2007 = vmin.f32 %v1975, %v1523
      %v2008 = vmin.f32 %v1976, %v1524
      %v2009 = vmin.f32 %v1977, %v1525
      %v2010 = vmin.f32 %v1978, %v1526
      %v2011 = vmin.f32 %v1979, %v1527
      %v2012 = vmin.f32 %v1980, %v1528
      %2013 = vst [vmem:[#allocation5] sm:$0xff] %v1981
      %2014 = vst [vmem:[#allocation5 + $0x8] sm:$0xff] %v1982
      %2015 = vst [vmem:[#allocation5 + $0x10] sm:$0xff] %v1983
      %2016 = vst [vmem:[#allocation5 + $0x18] sm:$0xff] %v1984
      %2017 = vst [vmem:[#allocation5 + $0x20] sm:$0xff] %v1985
      %2018 = vst [vmem:[#allocation5 + $0x28] sm:$0xff] %v1986
      %2019 = vst [vmem:[#allocation5 + $0x30] sm:$0xff] %v1987
      %2020 = vst [vmem:[#allocation5 + $0x38] sm:$0xff] %v1988
      %2021 = vst [vmem:[#allocation5 + $0x40] sm:$0xff] %v1989
      %2022 = vst [vmem:[#allocation5 + $0x48] sm:$0xff] %v1990
      %2023 = vst [vmem:[#allocation5 + $0x50] sm:$0xff] %v1991
      %2024 = vst [vmem:[#allocation5 + $0x58] sm:$0xff] %v1992
      %2025 = vst [vmem:[#allocation5 + $0x60] sm:$0xff] %v1993
      %2026 = vst [vmem:[#allocation5 + $0x68] sm:$0xff] %v1994
      %2027 = vst [vmem:[#allocation5 + $0x70] sm:$0xff] %v1995
      %2028 = vst [vmem:[#allocation5 + $0x78] sm:$0xff] %v1996
      %2029 = vst [vmem:[#allocation5 + $0x80] sm:$0xff] %v1997
      %2030 = vst [vmem:[#allocation5 + $0x88] sm:$0xff] %v1998
      %2031 = vst [vmem:[#allocation5 + $0x90] sm:$0xff] %v1999
      %2032 = vst [vmem:[#allocation5 + $0x98] sm:$0xff] %v2000
      %2033 = vst [vmem:[#allocation5 + $0xa0] sm:$0xff] %v2001
      %2034 = vst [vmem:[#allocation5 + $0xa8] sm:$0xff] %v2002
      %2035 = vst [vmem:[#allocation5 + $0xb0] sm:$0xff] %v2003
      %2036 = vst [vmem:[#allocation5 + $0xb8] sm:$0xff] %v2004
      %2037 = vst [vmem:[#allocation5 + $0xc0] sm:$0xff] %v2005
      %2038 = vst [vmem:[#allocation5 + $0xc8] sm:$0xff] %v2006
      %2039 = vst [vmem:[#allocation5 + $0xd0] sm:$0xff] %v2007
      %2040 = vst [vmem:[#allocation5 + $0xd8] sm:$0xff] %v2008
      %2041 = vst [vmem:[#allocation5 + $0xe0] sm:$0xff] %v2009
      %2042 = vst [vmem:[#allocation5 + $0xe8] sm:$0xff] %v2010
      %2043 = vst [vmem:[#allocation5 + $0xf0] sm:$0xff] %v2011
      %2044 = vst [vmem:[#allocation5 + $0xf8] sm:$0xff] %v2012
      // Predicated region
      $region45: #{pointnet_encoder.6} parent=39 // pred_check
        %p2045 = pneg %p1529
      $region46: #{pointnet_encoder.6} parent=39 // pred_check_branch
        %2047 = sbr.rel (%p2045) target = $region48
      $region47: #{pointnet_encoder.6} parent=39 // pred_region
        %v2048 = vld [vmem:[#allocation2] sm:$0xff]
        %v2049 = vld [vmem:[#allocation2 + $0x8] sm:$0xff]
        %v2050 = vld [vmem:[#allocation2 + $0x10] sm:$0xff]
        %v2051 = vld [vmem:[#allocation2 + $0x18] sm:$0xff]
        %v2052 = vld [vmem:[#allocation2 + $0x20] sm:$0xff]
        %v2053 = vld [vmem:[#allocation2 + $0x28] sm:$0xff]
        %v2054 = vld [vmem:[#allocation2 + $0x30] sm:$0xff]
        %v2055 = vld [vmem:[#allocation2 + $0x38] sm:$0xff]
        %v2056 = vld [vmem:[#allocation2 + $0x40] sm:$0xff]
        %v2057 = vld [vmem:[#allocation2 + $0x48] sm:$0xff]
        %v2058 = vld [vmem:[#allocation2 + $0x50] sm:$0xff]
        %v2059 = vld [vmem:[#allocation2 + $0x58] sm:$0xff]
        %v2060 = vld [vmem:[#allocation2 + $0x60] sm:$0xff]
        %v2061 = vld [vmem:[#allocation2 + $0x68] sm:$0xff]
        %v2062 = vld [vmem:[#allocation2 + $0x70] sm:$0xff]
        %v2063 = vld [vmem:[#allocation2 + $0x78] sm:$0xff]
        %v2064 = vld [vmem:[#allocation2 + $0x80] sm:$0xff]
        %v2065 = vld [vmem:[#allocation2 + $0x88] sm:$0xff]
        %v2066 = vld [vmem:[#allocation2 + $0x90] sm:$0xff]
        %v2067 = vld [vmem:[#allocation2 + $0x98] sm:$0xff]
        %v2068 = vld [vmem:[#allocation2 + $0xa0] sm:$0xff]
        %v2069 = vld [vmem:[#allocation2 + $0xa8] sm:$0xff]
        %v2070 = vld [vmem:[#allocation2 + $0xb0] sm:$0xff]
        %v2071 = vld [vmem:[#allocation2 + $0xb8] sm:$0xff]
        %v2072 = vld [vmem:[#allocation2 + $0xc0] sm:$0xff]
        %v2073 = vld [vmem:[#allocation2 + $0xc8] sm:$0xff]
        %v2074 = vld [vmem:[#allocation2 + $0xd0] sm:$0xff]
        %v2075 = vld [vmem:[#allocation2 + $0xd8] sm:$0xff]
        %v2076 = vld [vmem:[#allocation2 + $0xe0] sm:$0xff]
        %v2077 = vld [vmem:[#allocation2 + $0xe8] sm:$0xff]
        %v2078 = vld [vmem:[#allocation2 + $0xf0] sm:$0xff]
        %v2079 = vld [vmem:[#allocation2 + $0xf8] sm:$0xff]
        %2080 = vst [vmem:[%s358] sm:$0xff] %v2048
        %2081 = vst [vmem:[%s358 + $0x8] sm:$0xff] %v2049
        %2082 = vst [vmem:[%s358 + $0x10] sm:$0xff] %v2050
        %2083 = vst [vmem:[%s358 + $0x18] sm:$0xff] %v2051
        %2084 = vst [vmem:[%s358 + $0x20] sm:$0xff] %v2052
        %2085 = vst [vmem:[%s358 + $0x28] sm:$0xff] %v2053
        %2086 = vst [vmem:[%s358 + $0x30] sm:$0xff] %v2054
        %2087 = vst [vmem:[%s358 + $0x38] sm:$0xff] %v2055
        %2088 = vst [vmem:[%s358 + $0x40] sm:$0xff] %v2056
        %2089 = vst [vmem:[%s358 + $0x48] sm:$0xff] %v2057
        %2090 = vst [vmem:[%s358 + $0x50] sm:$0xff] %v2058
        %2091 = vst [vmem:[%s358 + $0x58] sm:$0xff] %v2059
        %2092 = vst [vmem:[%s358 + $0x60] sm:$0xff] %v2060
        %2093 = vst [vmem:[%s358 + $0x68] sm:$0xff] %v2061
        %2094 = vst [vmem:[%s358 + $0x70] sm:$0xff] %v2062
        %2095 = vst [vmem:[%s358 + $0x78] sm:$0xff] %v2063
        %2096 = vst [vmem:[%s358 + $0x80] sm:$0xff] %v2064
        %2097 = vst [vmem:[%s358 + $0x88] sm:$0xff] %v2065
        %2098 = vst [vmem:[%s358 + $0x90] sm:$0xff] %v2066
        %2099 = vst [vmem:[%s358 + $0x98] sm:$0xff] %v2067
        %2100 = vst [vmem:[%s358 + $0xa0] sm:$0xff] %v2068
        %2101 = vst [vmem:[%s358 + $0xa8] sm:$0xff] %v2069
        %2102 = vst [vmem:[%s358 + $0xb0] sm:$0xff] %v2070
        %2103 = vst [vmem:[%s358 + $0xb8] sm:$0xff] %v2071
        %2104 = vst [vmem:[%s358 + $0xc0] sm:$0xff] %v2072
        %2105 = vst [vmem:[%s358 + $0xc8] sm:$0xff] %v2073
        %2106 = vst [vmem:[%s358 + $0xd0] sm:$0xff] %v2074
        %2107 = vst [vmem:[%s358 + $0xd8] sm:$0xff] %v2075
        %2108 = vst [vmem:[%s358 + $0xe0] sm:$0xff] %v2076
        %2109 = vst [vmem:[%s358 + $0xe8] sm:$0xff] %v2077
        %2110 = vst [vmem:[%s358 + $0xf0] sm:$0xff] %v2078
        %2111 = vst [vmem:[%s358 + $0xf8] sm:$0xff] %v2079
        %v2112 = vld [vmem:[#allocation3] sm:$0xff]
        %v2113 = vld [vmem:[#allocation3 + $0x8] sm:$0xff]
        %v2114 = vld [vmem:[#allocation3 + $0x10] sm:$0xff]
        %v2115 = vld [vmem:[#allocation3 + $0x18] sm:$0xff]
        %v2116 = vld [vmem:[#allocation3 + $0x20] sm:$0xff]
        %v2117 = vld [vmem:[#allocation3 + $0x28] sm:$0xff]
        %v2118 = vld [vmem:[#allocation3 + $0x30] sm:$0xff]
        %v2119 = vld [vmem:[#allocation3 + $0x38] sm:$0xff]
        %v2120 = vld [vmem:[#allocation3 + $0x40] sm:$0xff]
        %v2121 = vld [vmem:[#allocation3 + $0x48] sm:$0xff]
        %v2122 = vld [vmem:[#allocation3 + $0x50] sm:$0xff]
        %v2123 = vld [vmem:[#allocation3 + $0x58] sm:$0xff]
        %v2124 = vld [vmem:[#allocation3 + $0x60] sm:$0xff]
        %v2125 = vld [vmem:[#allocation3 + $0x68] sm:$0xff]
        %v2126 = vld [vmem:[#allocation3 + $0x70] sm:$0xff]
        %v2127 = vld [vmem:[#allocation3 + $0x78] sm:$0xff]
        %v2128 = vld [vmem:[#allocation3 + $0x80] sm:$0xff]
        %v2129 = vld [vmem:[#allocation3 + $0x88] sm:$0xff]
        %v2130 = vld [vmem:[#allocation3 + $0x90] sm:$0xff]
        %v2131 = vld [vmem:[#allocation3 + $0x98] sm:$0xff]
        %v2132 = vld [vmem:[#allocation3 + $0xa0] sm:$0xff]
        %v2133 = vld [vmem:[#allocation3 + $0xa8] sm:$0xff]
        %v2134 = vld [vmem:[#allocation3 + $0xb0] sm:$0xff]
        %v2135 = vld [vmem:[#allocation3 + $0xb8] sm:$0xff]
        %v2136 = vld [vmem:[#allocation3 + $0xc0] sm:$0xff]
        %v2137 = vld [vmem:[#allocation3 + $0xc8] sm:$0xff]
        %v2138 = vld [vmem:[#allocation3 + $0xd0] sm:$0xff]
        %v2139 = vld [vmem:[#allocation3 + $0xd8] sm:$0xff]
        %v2140 = vld [vmem:[#allocation3 + $0xe0] sm:$0xff]
        %v2141 = vld [vmem:[#allocation3 + $0xe8] sm:$0xff]
        %v2142 = vld [vmem:[#allocation3 + $0xf0] sm:$0xff]
        %v2143 = vld [vmem:[#allocation3 + $0xf8] sm:$0xff]
        %2144 = vst [vmem:[%s363] sm:$0xff] %v2112
        %2145 = vst [vmem:[%s363 + $0x8] sm:$0xff] %v2113
        %2146 = vst [vmem:[%s363 + $0x10] sm:$0xff] %v2114
        %2147 = vst [vmem:[%s363 + $0x18] sm:$0xff] %v2115
        %2148 = vst [vmem:[%s363 + $0x20] sm:$0xff] %v2116
        %2149 = vst [vmem:[%s363 + $0x28] sm:$0xff] %v2117
        %2150 = vst [vmem:[%s363 + $0x30] sm:$0xff] %v2118
        %2151 = vst [vmem:[%s363 + $0x38] sm:$0xff] %v2119
        %2152 = vst [vmem:[%s363 + $0x40] sm:$0xff] %v2120
        %2153 = vst [vmem:[%s363 + $0x48] sm:$0xff] %v2121
        %2154 = vst [vmem:[%s363 + $0x50] sm:$0xff] %v2122
        %2155 = vst [vmem:[%s363 + $0x58] sm:$0xff] %v2123
        %2156 = vst [vmem:[%s363 + $0x60] sm:$0xff] %v2124
        %2157 = vst [vmem:[%s363 + $0x68] sm:$0xff] %v2125
        %2158 = vst [vmem:[%s363 + $0x70] sm:$0xff] %v2126
        %2159 = vst [vmem:[%s363 + $0x78] sm:$0xff] %v2127
        %2160 = vst [vmem:[%s363 + $0x80] sm:$0xff] %v2128
        %2161 = vst [vmem:[%s363 + $0x88] sm:$0xff] %v2129
        %2162 = vst [vmem:[%s363 + $0x90] sm:$0xff] %v2130
        %2163 = vst [vmem:[%s363 + $0x98] sm:$0xff] %v2131
        %2164 = vst [vmem:[%s363 + $0xa0] sm:$0xff] %v2132
        %2165 = vst [vmem:[%s363 + $0xa8] sm:$0xff] %v2133
        %2166 = vst [vmem:[%s363 + $0xb0] sm:$0xff] %v2134
        %2167 = vst [vmem:[%s363 + $0xb8] sm:$0xff] %v2135
        %2168 = vst [vmem:[%s363 + $0xc0] sm:$0xff] %v2136
        %2169 = vst [vmem:[%s363 + $0xc8] sm:$0xff] %v2137
        %2170 = vst [vmem:[%s363 + $0xd0] sm:$0xff] %v2138
        %2171 = vst [vmem:[%s363 + $0xd8] sm:$0xff] %v2139
        %2172 = vst [vmem:[%s363 + $0xe0] sm:$0xff] %v2140
        %2173 = vst [vmem:[%s363 + $0xe8] sm:$0xff] %v2141
        %2174 = vst [vmem:[%s363 + $0xf0] sm:$0xff] %v2142
        %2175 = vst [vmem:[%s363 + $0xf8] sm:$0xff] %v2143
        %v2176 = vld [vmem:[#allocation4] sm:$0xff]
        %v2177 = vld [vmem:[#allocation4 + $0x8] sm:$0xff]
        %v2178 = vld [vmem:[#allocation4 + $0x10] sm:$0xff]
        %v2179 = vld [vmem:[#allocation4 + $0x18] sm:$0xff]
        %v2180 = vld [vmem:[#allocation4 + $0x20] sm:$0xff]
        %v2181 = vld [vmem:[#allocation4 + $0x28] sm:$0xff]
        %v2182 = vld [vmem:[#allocation4 + $0x30] sm:$0xff]
        %v2183 = vld [vmem:[#allocation4 + $0x38] sm:$0xff]
        %v2184 = vld [vmem:[#allocation4 + $0x40] sm:$0xff]
        %v2185 = vld [vmem:[#allocation4 + $0x48] sm:$0xff]
        %v2186 = vld [vmem:[#allocation4 + $0x50] sm:$0xff]
        %v2187 = vld [vmem:[#allocation4 + $0x58] sm:$0xff]
        %v2188 = vld [vmem:[#allocation4 + $0x60] sm:$0xff]
        %v2189 = vld [vmem:[#allocation4 + $0x68] sm:$0xff]
        %v2190 = vld [vmem:[#allocation4 + $0x70] sm:$0xff]
        %v2191 = vld [vmem:[#allocation4 + $0x78] sm:$0xff]
        %v2192 = vld [vmem:[#allocation4 + $0x80] sm:$0xff]
        %v2193 = vld [vmem:[#allocation4 + $0x88] sm:$0xff]
        %v2194 = vld [vmem:[#allocation4 + $0x90] sm:$0xff]
        %v2195 = vld [vmem:[#allocation4 + $0x98] sm:$0xff]
        %v2196 = vld [vmem:[#allocation4 + $0xa0] sm:$0xff]
        %v2197 = vld [vmem:[#allocation4 + $0xa8] sm:$0xff]
        %v2198 = vld [vmem:[#allocation4 + $0xb0] sm:$0xff]
        %v2199 = vld [vmem:[#allocation4 + $0xb8] sm:$0xff]
        %v2200 = vld [vmem:[#allocation4 + $0xc0] sm:$0xff]
        %v2201 = vld [vmem:[#allocation4 + $0xc8] sm:$0xff]
        %v2202 = vld [vmem:[#allocation4 + $0xd0] sm:$0xff]
        %v2203 = vld [vmem:[#allocation4 + $0xd8] sm:$0xff]
        %v2204 = vld [vmem:[#allocation4 + $0xe0] sm:$0xff]
        %v2205 = vld [vmem:[#allocation4 + $0xe8] sm:$0xff]
        %v2206 = vld [vmem:[#allocation4 + $0xf0] sm:$0xff]
        %v2207 = vld [vmem:[#allocation4 + $0xf8] sm:$0xff]
        %2208 = vst [vmem:[%s368] sm:$0xff] %v2176
        %2209 = vst [vmem:[%s368 + $0x8] sm:$0xff] %v2177
        %2210 = vst [vmem:[%s368 + $0x10] sm:$0xff] %v2178
        %2211 = vst [vmem:[%s368 + $0x18] sm:$0xff] %v2179
        %2212 = vst [vmem:[%s368 + $0x20] sm:$0xff] %v2180
        %2213 = vst [vmem:[%s368 + $0x28] sm:$0xff] %v2181
        %2214 = vst [vmem:[%s368 + $0x30] sm:$0xff] %v2182
        %2215 = vst [vmem:[%s368 + $0x38] sm:$0xff] %v2183
        %2216 = vst [vmem:[%s368 + $0x40] sm:$0xff] %v2184
        %2217 = vst [vmem:[%s368 + $0x48] sm:$0xff] %v2185
        %2218 = vst [vmem:[%s368 + $0x50] sm:$0xff] %v2186
        %2219 = vst [vmem:[%s368 + $0x58] sm:$0xff] %v2187
        %2220 = vst [vmem:[%s368 + $0x60] sm:$0xff] %v2188
        %2221 = vst [vmem:[%s368 + $0x68] sm:$0xff] %v2189
        %2222 = vst [vmem:[%s368 + $0x70] sm:$0xff] %v2190
        %2223 = vst [vmem:[%s368 + $0x78] sm:$0xff] %v2191
        %2224 = vst [vmem:[%s368 + $0x80] sm:$0xff] %v2192
        %2225 = vst [vmem:[%s368 + $0x88] sm:$0xff] %v2193
        %2226 = vst [vmem:[%s368 + $0x90] sm:$0xff] %v2194
        %2227 = vst [vmem:[%s368 + $0x98] sm:$0xff] %v2195
        %2228 = vst [vmem:[%s368 + $0xa0] sm:$0xff] %v2196
        %2229 = vst [vmem:[%s368 + $0xa8] sm:$0xff] %v2197
        %2230 = vst [vmem:[%s368 + $0xb0] sm:$0xff] %v2198
        %2231 = vst [vmem:[%s368 + $0xb8] sm:$0xff] %v2199
        %2232 = vst [vmem:[%s368 + $0xc0] sm:$0xff] %v2200
        %2233 = vst [vmem:[%s368 + $0xc8] sm:$0xff] %v2201
        %2234 = vst [vmem:[%s368 + $0xd0] sm:$0xff] %v2202
        %2235 = vst [vmem:[%s368 + $0xd8] sm:$0xff] %v2203
        %2236 = vst [vmem:[%s368 + $0xe0] sm:$0xff] %v2204
        %2237 = vst [vmem:[%s368 + $0xe8] sm:$0xff] %v2205
        %2238 = vst [vmem:[%s368 + $0xf0] sm:$0xff] %v2206
        %2239 = vst [vmem:[%s368 + $0xf8] sm:$0xff] %v2207
        %v2240 = vld [vmem:[#allocation5] sm:$0xff]
        %v2241 = vld [vmem:[#allocation5 + $0x8] sm:$0xff]
        %v2242 = vld [vmem:[#allocation5 + $0x10] sm:$0xff]
        %v2243 = vld [vmem:[#allocation5 + $0x18] sm:$0xff]
        %v2244 = vld [vmem:[#allocation5 + $0x20] sm:$0xff]
        %v2245 = vld [vmem:[#allocation5 + $0x28] sm:$0xff]
        %v2246 = vld [vmem:[#allocation5 + $0x30] sm:$0xff]
        %v2247 = vld [vmem:[#allocation5 + $0x38] sm:$0xff]
        %v2248 = vld [vmem:[#allocation5 + $0x40] sm:$0xff]
        %v2249 = vld [vmem:[#allocation5 + $0x48] sm:$0xff]
        %v2250 = vld [vmem:[#allocation5 + $0x50] sm:$0xff]
        %v2251 = vld [vmem:[#allocation5 + $0x58] sm:$0xff]
        %v2252 = vld [vmem:[#allocation5 + $0x60] sm:$0xff]
        %v2253 = vld [vmem:[#allocation5 + $0x68] sm:$0xff]
        %v2254 = vld [vmem:[#allocation5 + $0x70] sm:$0xff]
        %v2255 = vld [vmem:[#allocation5 + $0x78] sm:$0xff]
        %v2256 = vld [vmem:[#allocation5 + $0x80] sm:$0xff]
        %v2257 = vld [vmem:[#allocation5 + $0x88] sm:$0xff]
        %v2258 = vld [vmem:[#allocation5 + $0x90] sm:$0xff]
        %v2259 = vld [vmem:[#allocation5 + $0x98] sm:$0xff]
        %v2260 = vld [vmem:[#allocation5 + $0xa0] sm:$0xff]
        %v2261 = vld [vmem:[#allocation5 + $0xa8] sm:$0xff]
        %v2262 = vld [vmem:[#allocation5 + $0xb0] sm:$0xff]
        %v2263 = vld [vmem:[#allocation5 + $0xb8] sm:$0xff]
        %v2264 = vld [vmem:[#allocation5 + $0xc0] sm:$0xff]
        %v2265 = vld [vmem:[#allocation5 + $0xc8] sm:$0xff]
        %v2266 = vld [vmem:[#allocation5 + $0xd0] sm:$0xff]
        %v2267 = vld [vmem:[#allocation5 + $0xd8] sm:$0xff]
        %v2268 = vld [vmem:[#allocation5 + $0xe0] sm:$0xff]
        %v2269 = vld [vmem:[#allocation5 + $0xe8] sm:$0xff]
        %v2270 = vld [vmem:[#allocation5 + $0xf0] sm:$0xff]
        %v2271 = vld [vmem:[#allocation5 + $0xf8] sm:$0xff]
        %2272 = vst [vmem:[%s373] sm:$0xff] %v2240
        %2273 = vst [vmem:[%s373 + $0x8] sm:$0xff] %v2241
        %2274 = vst [vmem:[%s373 + $0x10] sm:$0xff] %v2242
        %2275 = vst [vmem:[%s373 + $0x18] sm:$0xff] %v2243
        %2276 = vst [vmem:[%s373 + $0x20] sm:$0xff] %v2244
        %2277 = vst [vmem:[%s373 + $0x28] sm:$0xff] %v2245
        %2278 = vst [vmem:[%s373 + $0x30] sm:$0xff] %v2246
        %2279 = vst [vmem:[%s373 + $0x38] sm:$0xff] %v2247
        %2280 = vst [vmem:[%s373 + $0x40] sm:$0xff] %v2248
        %2281 = vst [vmem:[%s373 + $0x48] sm:$0xff] %v2249
        %2282 = vst [vmem:[%s373 + $0x50] sm:$0xff] %v2250
        %2283 = vst [vmem:[%s373 + $0x58] sm:$0xff] %v2251
        %2284 = vst [vmem:[%s373 + $0x60] sm:$0xff] %v2252
        %2285 = vst [vmem:[%s373 + $0x68] sm:$0xff] %v2253
        %2286 = vst [vmem:[%s373 + $0x70] sm:$0xff] %v2254
        %2287 = vst [vmem:[%s373 + $0x78] sm:$0xff] %v2255
        %2288 = vst [vmem:[%s373 + $0x80] sm:$0xff] %v2256
        %2289 = vst [vmem:[%s373 + $0x88] sm:$0xff] %v2257
        %2290 = vst [vmem:[%s373 + $0x90] sm:$0xff] %v2258
        %2291 = vst [vmem:[%s373 + $0x98] sm:$0xff] %v2259
        %2292 = vst [vmem:[%s373 + $0xa0] sm:$0xff] %v2260
        %2293 = vst [vmem:[%s373 + $0xa8] sm:$0xff] %v2261
        %2294 = vst [vmem:[%s373 + $0xb0] sm:$0xff] %v2262
        %2295 = vst [vmem:[%s373 + $0xb8] sm:$0xff] %v2263
        %2296 = vst [vmem:[%s373 + $0xc0] sm:$0xff] %v2264
        %2297 = vst [vmem:[%s373 + $0xc8] sm:$0xff] %v2265
        %2298 = vst [vmem:[%s373 + $0xd0] sm:$0xff] %v2266
        %2299 = vst [vmem:[%s373 + $0xd8] sm:$0xff] %v2267
        %2300 = vst [vmem:[%s373 + $0xe0] sm:$0xff] %v2268
        %2301 = vst [vmem:[%s373 + $0xe8] sm:$0xff] %v2269
        %2302 = vst [vmem:[%s373 + $0xf0] sm:$0xff] %v2270
        %2303 = vst [vmem:[%s373 + $0xf8] sm:$0xff] %v2271
      $region48: #{pointnet_encoder.6} parent=39 // pred_fallthru
        _
      %p2304 = scmp.lt.s32.totalorder %s24, 1
      %s2305 = scalar_select %p2304, %s24, 1
      %s2306 = smul.addr %s2305, 32
      %s2307 = smul.addr %s2306, 8
      %s2308 = scalar_lea.vmem %s5, %s2307
      %p2309 = scmp.lt.s32.totalorder %s24, 1
      %s2310 = scalar_select %p2309, %s24, 1
      %s2311 = smul.addr %s2310, 32
      %s2312 = smul.addr %s2311, 8
      %s2313 = scalar_lea.vmem %s6, %s2312
      %p2314 = scmp.lt.s32.totalorder %s24, 1
      %s2315 = scalar_select %p2314, %s24, 1
      %s2316 = smul.addr %s2315, 32
      %s2317 = smul.addr %s2316, 8
      %s2318 = scalar_lea.vmem %s7, %s2317
      %p2319 = scmp.lt.s32.totalorder %s24, 1
      %s2320 = scalar_select %p2319, %s24, 1
      %s2321 = smul.addr %s2320, 32
      %s2322 = smul.addr %s2321, 8
      %s2323 = scalar_lea.vmem %s8, %s2322
      // Predicated region
      $region49: #{pointnet_encoder.6} parent=39 // pred_check
        %p2324 = pneg %p162
      $region50: #{pointnet_encoder.6} parent=39 // pred_check_branch
        %2326 = sbr.rel (%p2324) target = $region52
      $region51: #{pointnet_encoder.6} parent=39 // pred_region
        _
      $region52: #{pointnet_encoder.6} parent=39 // pred_fallthru
        _
      // Predicated region
      $region53: #{pointnet_encoder.6} parent=39 // pred_check
        %p2327 = pneg %p188
      $region54: #{pointnet_encoder.6} parent=39 // pred_check_branch
        %2329 = sbr.rel (%p2327) target = $region56
      $region55: #{pointnet_encoder.6} parent=39 // pred_region
        _
      $region56: #{pointnet_encoder.6} parent=39 // pred_fallthru
        _
      // Predicated region
      $region57: #{pointnet_encoder.6} parent=39 // pred_check
        %p2330 = pneg %p214
      $region58: #{pointnet_encoder.6} parent=39 // pred_check_branch
        %2332 = sbr.rel (%p2330) target = $region60
      $region59: #{pointnet_encoder.6} parent=39 // pred_region
        _
      $region60: #{pointnet_encoder.6} parent=39 // pred_fallthru
        _
      // Predicated region
      $region61: #{pointnet_encoder.6} parent=39 // pred_check
        %p2333 = pneg %p240
      $region62: #{pointnet_encoder.6} parent=39 // pred_check_branch
        %2335 = sbr.rel (%p2333) target = $region64
      $region63: #{pointnet_encoder.6} parent=39 // pred_region
        _
      $region64: #{pointnet_encoder.6} parent=39 // pred_fallthru
        _
    $region40: #{pointnet_encoder.6} parent=5 // pred_fallthru
      _
    %p2336 = scmp.le.s32.totalorder 2, %s15
    // Predicated region
    $region65: #{pointnet_encoder.6} parent=5 // pred_check
      %p2337 = pneg %p2336
    $region66: #{pointnet_encoder.6} parent=5 // pred_check_branch
      %2339 = sbr.rel (%p2337) target = $region68
    $region67: #{pointnet_encoder.6} parent=5 // pred_region
      %s2340 = ssub.s32 %s15, 2
      // Predicated region
      $region69: #{pointnet_encoder.6} parent=67 // pred_check
        %p2341 = pneg %p168
      $region70: #{pointnet_encoder.6} parent=67 // pred_check_branch
        %2343 = sbr.rel (%p2341) target = $region72
      $region71: #{pointnet_encoder.6} parent=67 // pred_region
        %p2344 = scmp.lt.s32.totalorder %s26, 1
        %s2345 = scalar_select %p2344, %s26, 1
        %s2346 = smul.addr %s2345, 32
        %s2347 = smul.addr %s2346, 8
        %s2348 = scalar_lea.vmem %s5, %s2347
      $region72: #{pointnet_encoder.6} parent=67 // pred_fallthru
        _
      // Predicated region
      $region73: #{pointnet_encoder.6} parent=67 // pred_check
        %p2349 = pneg %p194
      $region74: #{pointnet_encoder.6} parent=67 // pred_check_branch
        %2351 = sbr.rel (%p2349) target = $region76
      $region75: #{pointnet_encoder.6} parent=67 // pred_region
        %p2352 = scmp.lt.s32.totalorder %s26, 1
        %s2353 = scalar_select %p2352, %s26, 1
        %s2354 = smul.addr %s2353, 32
        %s2355 = smul.addr %s2354, 8
        %s2356 = scalar_lea.vmem %s6, %s2355
      $region76: #{pointnet_encoder.6} parent=67 // pred_fallthru
        _
      // Predicated region
      $region77: #{pointnet_encoder.6} parent=67 // pred_check
        %p2357 = pneg %p220
      $region78: #{pointnet_encoder.6} parent=67 // pred_check_branch
        %2359 = sbr.rel (%p2357) target = $region80
      $region79: #{pointnet_encoder.6} parent=67 // pred_region
        %p2360 = scmp.lt.s32.totalorder %s26, 1
        %s2361 = scalar_select %p2360, %s26, 1
        %s2362 = smul.addr %s2361, 32
        %s2363 = smul.addr %s2362, 8
        %s2364 = scalar_lea.vmem %s7, %s2363
      $region80: #{pointnet_encoder.6} parent=67 // pred_fallthru
        _
      // Predicated region
      $region81: #{pointnet_encoder.6} parent=67 // pred_check
        %p2365 = pneg %p246
      $region82: #{pointnet_encoder.6} parent=67 // pred_check_branch
        %2367 = sbr.rel (%p2365) target = $region84
      $region83: #{pointnet_encoder.6} parent=67 // pred_region
        %p2368 = scmp.lt.s32.totalorder %s26, 1
        %s2369 = scalar_select %p2368, %s26, 1
        %s2370 = smul.addr %s2369, 32
        %s2371 = smul.addr %s2370, 8
        %s2372 = scalar_lea.vmem %s8, %s2371
      $region84: #{pointnet_encoder.6} parent=67 // pred_fallthru
        _
    $region68: #{pointnet_encoder.6} parent=5 // pred_fallthru
      _
  $region6: #{pointnet_encoder.6} parent=0 // loop_footer
    %s19 = sadd.s32 1, %s15
  $region7: #{pointnet_encoder.6} parent=0 // loop_footer_branch
    %14 = sbr.rel target = $region3
  $region8: #{pointnet_encoder.6} parent=0 // loop_exit
    _

</llo_original>
